<compile_context>
chip_gen: v6e
topology: v6e:2x2x1
jax: 0.10.0
libtpu: 0.0.40
codegen_flags: <defaults>
</compile_context>

<pallas_src>
import random

import jax
import jax.numpy as jnp
from jax import lax
from jax.experimental import pallas as pl
from jax.experimental.pallas import tpu as pltpu

_F32 = jnp.float32
_BF16 = jnp.bfloat16

_VMEM = pl.BlockSpec(memory_space=pltpu.MemorySpace.VMEM)
_SMEM = pl.BlockSpec(memory_space=pltpu.MemorySpace.SMEM)


def _round_up(x, m):
    return ((x + m - 1) // m) * m


# ============================================================================
# Encoder kernel
# ============================================================================

def _make_encoder_kernel(T, Bp, Henc):
    H = Henc

    def encoder_kernel(x_ref,                           # (T*Bp, E) f32
                       wif_ref, whf_ref, bif_ref, bhf_ref,   # fwd GRU (fused gates)
                       wib_ref, whb_ref, bib_ref, bhb_ref,   # bwd GRU (fused gates)
                       wfc_ref, bfc_ref,                     # [h_fwd ; h_bwd] -> s0
                       wvf_ref, wvb_ref, bav_ref,            # folded alignment vectors
                       encf_ref, encb_ref, attn_ref, s0_ref):
        # ---- hoisted input projections: one wide matmul per direction ------
        xb = x_ref[...].astype(_BF16)                                    # (T*Bp, E)
        gi_f = jnp.dot(xb, wif_ref[...], preferred_element_type=_F32) + bif_ref[...]
        gi_b = jnp.dot(xb, wib_ref[...], preferred_element_type=_F32) + bib_ref[...]

        Whf = whf_ref[...]; Bhf = bhf_ref[...]
        Whb = whb_ref[...]; Bhb = bhb_ref[...]

        def cell(gx, h, Wh, Bh):
            gh = jnp.dot(h.astype(_BF16), Wh, preferred_element_type=_F32) + Bh
            r = jax.nn.sigmoid(gx[:, 0:H] + gh[:, 0:H])
            z = jax.nn.sigmoid(gx[:, H:2 * H] + gh[:, H:2 * H])
            n = jnp.tanh(gx[:, 2 * H:3 * H] + r * gh[:, 2 * H:3 * H])
            return (1.0 - z) * n + z * h

        h_f = jnp.zeros((Bp, H), _F32)
        h_b = jnp.zeros((Bp, H), _F32)
        for t in range(T):          # static unroll; per-step ref stores bound live ranges
            h_f = cell(gi_f[t * Bp:(t + 1) * Bp], h_f, Whf, Bhf)
            encf_ref[t] = h_f
            tb = T - 1 - t
            h_b = cell(gi_b[tb * Bp:(tb + 1) * Bp], h_b, Whb, Bhb)
            encb_ref[tb] = h_b

        # Decoder-state-independent part of the additive alignment, with v
        # folded into the projection (valid because there is no activation):
        #   attn_enc[t, b] = h_fwd(t,b).(Wah_f @ v) + h_bwd(t,b).(Wah_b @ v) + ba.v
        attn_ref[...] = (
            jnp.sum(encf_ref[...] * wvf_ref[...], axis=-1, keepdims=True)
            + jnp.sum(encb_ref[...] * wvb_ref[...], axis=-1, keepdims=True)
            + bav_ref[...])

        # initial decoder state: s0 = tanh([h_fwd_last ; h_bwd_last] @ Wfc + bfc)
        hcat = jnp.concatenate([h_f, h_b], axis=1).astype(_BF16)
        s0_ref[...] = jnp.tanh(
            jnp.dot(hcat, wfc_ref[...], preferred_element_type=_F32) + bfc_ref[...])

    return encoder_kernel


def run_encoder(x_flat, wp, Tsrc, Bp, Henc, Hd):
    return pl.pallas_call(
        _make_encoder_kernel(Tsrc, Bp, Henc),
        out_shape=(jax.ShapeDtypeStruct((Tsrc, Bp, Henc), _F32),   # fwd states
                   jax.ShapeDtypeStruct((Tsrc, Bp, Henc), _F32),   # bwd states
                   jax.ShapeDtypeStruct((Tsrc, Bp, 1), _F32),      # hoisted align term
                   jax.ShapeDtypeStruct((Bp, Hd), _F32)),          # s0
        in_specs=[_VMEM] * 14,
        out_specs=(_VMEM, _VMEM, _VMEM, _VMEM),
        compiler_params=pltpu.CompilerParams(vmem_limit_bytes=32 * 1024 * 1024),
    )(x_flat,
      wp["wif"], wp["whf"], wp["bif"], wp["bhf"],
      wp["wib"], wp["whb"], wp["bib"], wp["bhb"],
      wp["wfc"], wp["bfc"], wp["wv_f"], wp["wv_b"], wp["bav"])


# ============================================================================
# Decoder-loop kernel: grid collapsed, lax.fori_loop over decode steps
# ============================================================================

def _make_decoder_kernel(V_true, Hd):
    def decoder_kernel(flags_ref,            # SMEM (T_trg,) int32
                       trg_emb_ref,          # (T_trg, Bp, E) f32
                       s0_ref,               # (Bp, Hd) f32
                       encf_ref, encb_ref,   # (Tsrc, Bp, Henc) f32 each
                       attn_enc_ref,         # (Tsrc, Bp, 1) f32
                       dec_emb_ref,          # (Vp, E) bf16
                       wv_s_ref,             # (1, Hd) f32  (Was @ v, folded)
                       wi_ref, bi_ref,       # (E+2Henc, 3Hd) bf16 / (1, 3Hd) f32
                       wh_ref, bh_ref,       # (Hd, 3Hd) bf16 / (1, 3Hd) f32
                       wo_ref, bo_ref,       # (E+2Henc+Hd, Vp) bf16 / (1, Vp) f32
                       logits_ref,           # out (steps, Bp, Vp) f32 (VMEM resident)
                       s_scr, emb_scr):      # (Bp, Hd) / (Bp, E) f32 scratch
        steps, Bp, Vp = logits_ref.shape

        # ---- hoist every loop-invariant load out of the decode loop --------
        enc_f = encf_ref[...]
        enc_b = encb_ref[...]
        attn_enc = attn_enc_ref[...]
        wv_s = wv_s_ref[...]
        Wi = wi_ref[...]; Bi = bi_ref[...]
        Wh = wh_ref[...]; Bh = bh_ref[...]
        Wo = wo_ref[...]; Bo = bo_ref[...]
        Demb = dec_emb_ref[...]
        lane = lax.broadcasted_iota(jnp.int32, (Bp, Vp), 1)
        valid = lane < V_true

        s_scr[...] = s0_ref[...]
        emb_scr[...] = trg_emb_ref[0]              # embedding of trg[:, 0]

        def step(g, carry):
            s = s_scr[...]                         # (Bp, Hd)
            emb = emb_scr[...]                     # (Bp, E)

            # -- additive alignment (no activation), v folded into projections
            s_score = jnp.sum(s * wv_s, axis=1, keepdims=True)       # (Bp, 1)
            scores = attn_enc + s_score[None]                        # (Tsrc, Bp, 1)
            m = jnp.max(scores, axis=0, keepdims=True)
            w = jnp.exp(scores - m)
            inv = pl.reciprocal(jnp.sum(w, axis=0, keepdims=True), approx=True)
            attn = w * inv                                           # (Tsrc, Bp, 1)

            # -- context: vectorized weighted sum over source positions ------
            ctx_f = jnp.sum(enc_f * attn, axis=0)                    # (Bp, Henc)
            ctx_b = jnp.sum(enc_b * attn, axis=0)                    # (Bp, Henc)

            # -- GRU cell, input = [embedded ; context], fused gate matmuls --
            x_cat = jnp.concatenate([emb, ctx_f, ctx_b], axis=1).astype(_BF16)
            gi = jnp.dot(x_cat, Wi, preferred_element_type=_F32) + Bi
            gh = jnp.dot(s.astype(_BF16), Wh, preferred_element_type=_F32) + Bh
            r = jax.nn.sigmoid(gi[:, 0:Hd] + gh[:, 0:Hd])
            z = jax.nn.sigmoid(gi[:, Hd:2 * Hd] + gh[:, Hd:2 * Hd])
            n = jnp.tanh(gi[:, 2 * Hd:3 * Hd] + r * gh[:, 2 * Hd:3 * Hd])
            s_new = (1.0 - z) * n + z * s

            # -- output projection over [embedded ; context ; hidden] --------
            o_cat = jnp.concatenate([emb, ctx_f, ctx_b, s_new], axis=1).astype(_BF16)
            logits = jnp.dot(o_cat, Wo, preferred_element_type=_F32) + Bo   # (Bp, Vp)
            logits_ref[g] = logits            # lane-dense store into resident slab

            # -- feedback: teacher token by default, prediction otherwise ----
            s_scr[...] = s_new
            emb_scr[...] = trg_emb_ref[g + 1]

            @pl.when(flags_ref[g + 1] == 0)   # only when NOT teacher forcing
            def _use_prediction():
                masked = jnp.where(valid, logits, jnp.float32(-3.0e38))
                mx = jnp.max(masked, axis=1, keepdims=True)
                pred = jnp.min(jnp.where(masked == mx, lane, Vp),
                               axis=1, keepdims=True)                # (Bp, 1) first-max
                onehot = (lane == pred).astype(_BF16)                # (Bp, Vp)
                # TODO(synk): for realistic vocab sizes, replace this one-hot
                # matmul with a per-row gather / DMA from HBM and tile wo over
                # V with a grid axis (matters most on v7x's 64 MiB VMEM).
                emb_scr[...] = jnp.dot(onehot, Demb,
                                       preferred_element_type=_F32)  # (Bp, E)
            return carry

        lax.fori_loop(0, steps, step, 0, unroll=True)

    return decoder_kernel


def run_decoder_loop(flags, trg_emb, s0, enc_f, enc_b, attn_enc, dp, V_true):
    T_trg, Bp, E = trg_emb.shape
    Hd = s0.shape[1]
    Vp = dp["wo"].shape[1]
    steps = T_trg - 1
    return pl.pallas_call(
        _make_decoder_kernel(V_true, Hd),
        out_shape=jax.ShapeDtypeStruct((steps, Bp, Vp), _F32),
        in_specs=[_SMEM] + [_VMEM] * 13,
        out_specs=_VMEM,
        scratch_shapes=[pltpu.VMEM((Bp, Hd), _F32),    # decoder state s
                        pltpu.VMEM((Bp, E), _F32)],    # current input embedding
        compiler_params=pltpu.CompilerParams(vmem_limit_bytes=32 * 1024 * 1024),
    )(flags, trg_emb, s0, enc_f, enc_b, attn_enc,
      dp["dec_emb"], dp["wv_s"],
      dp["wi_dec"], dp["bi_dec"], dp["wh_dec"], dp["bh_dec"],
      dp["wo"], dp["bo"])


# ============================================================================
# Seq2Seq forward (mirrors the PyTorch module's forward)
# ============================================================================

def _forward_impl(src, trg, tf_flags, params):
    B, trg_len = trg.shape
    Tsrc = src.shape[1]
    E = params["enc_emb"].shape[1]
    Henc = params["whf"].shape[0]
    Hd = params["wfc"].shape[1]
    V = params["wo"].shape[1]

    Bp = _round_up(B, 8)          # f32 sublane alignment
    Vp = _round_up(V, 128)        # lane-dense logits slab

    # ---- batch padding (padded rows compute harmless garbage, sliced away) -
    src_p = jnp.pad(src, ((0, Bp - B), (0, 0)))
    trg_p = jnp.pad(trg, ((0, Bp - B), (0, 0)))

    # ---- encoder: embeddings gathered in XLA, flattened to (T*Bp, E) -------
    src_emb = jnp.take(params["enc_emb"], src_p, axis=0)       # (Bp, Tsrc, E)
    x_flat = jnp.transpose(src_emb, (1, 0, 2)).reshape(Tsrc * Bp, E)

    # fold v into the alignment projections (exact: alignment has no activation)
    wv = params["wah"] @ params["v"][0]                        # (2*Henc,)
    enc_w = {
        "wif": params["wif"].astype(_BF16), "whf": params["whf"].astype(_BF16),
        "bif": params["bif"], "bhf": params["bhf"],
        "wib": params["wib"].astype(_BF16), "whb": params["whb"].astype(_BF16),
        "bib": params["bib"], "bhb": params["bhb"],
        "wfc": params["wfc"].astype(_BF16), "bfc": params["bfc"],
        "wv_f": wv[:Henc].reshape(1, 1, Henc),
        "wv_b": wv[Henc:].reshape(1, 1, Henc),
        "bav": jnp.sum(params["ba"] * params["v"]).reshape(1, 1, 1),
    }
    enc_f, enc_b, attn_enc, s0 = run_encoder(x_flat, enc_w, Tsrc, Bp, Henc, Hd)

    # ---- decoder: teacher-token embeddings for all target positions --------
    trg_emb = jnp.transpose(jnp.take(params["dec_emb"], trg_p, axis=0),
                            (1, 0, 2))                         # (T_trg, Bp, E)

    dec_w = {
        "dec_emb": jnp.pad(params["dec_emb"], ((0, Vp - V), (0, 0))).astype(_BF16),
        "wv_s": (params["was"] @ params["v"][0]).reshape(1, Hd),
        "wi_dec": params["wi_dec"].astype(_BF16), "bi_dec": params["bi_dec"],
        "wh_dec": params["wh_dec"].astype(_BF16), "bh_dec": params["bh_dec"],
        "wo": jnp.pad(params["wo"], ((0, 0), (0, Vp - V))).astype(_BF16),
        "bo": jnp.pad(params["bo"], ((0, 0), (0, Vp - V))),
    }
    logits_slab = run_decoder_loop(tf_flags, trg_emb, s0, enc_f, enc_b,
                                   attn_enc, dec_w, V)         # (steps, Bp, Vp)

    logits = logits_slab[:, :B, :V]                            # (steps, B, V)
    # index 0 stays zero, like torch.zeros(trg_len, ...)
    decoder_outputs = jnp.concatenate(
        [jnp.zeros((1, B, V), _F32), logits], axis=0)
    preds = jnp.argmax(logits, axis=-1).astype(_F32)           # (steps, B)
    predictions = jnp.concatenate([jnp.zeros((1, B), _F32), preds], axis=0)
    return decoder_outputs, predictions


_forward_jit = jax.jit(_forward_impl)


def seq2seq_forward(src, trg, params, tf_rate=0.0):
    trg_len = trg.shape[1]
    # mirrors `random.random() < tf_rate` per decode step, sampled on the host
    # so the jitted kernel stays trace-safe (flags[0] is unused).
    flags = [0] + [1 if random.random() < tf_rate else 0
                   for _ in range(1, trg_len)]
    return _forward_jit(src, trg, jnp.asarray(flags, dtype=jnp.int32), params)


# ============================================================================
# Deterministic parameter init (fused-gate / fused-projection layout)
# ============================================================================

def init_params(key, src_vocab, trg_vocab, E, Henc, Hd, V):
    shapes = {
        "enc_emb": (src_vocab, E),
        "dec_emb": (trg_vocab, E),
        # encoder GRUs, gate weights fused along output axis (order r, z, n)
        "wif": (E, 3 * Henc), "whf": (Henc, 3 * Henc),
        "bif": (1, 3 * Henc), "bhf": (1, 3 * Henc),
        "wib": (E, 3 * Henc), "whb": (Henc, 3 * Henc),
        "bib": (1, 3 * Henc), "bhb": (1, 3 * Henc),
        # fc: [h_fwd ; h_bwd] -> initial decoder state
        "wfc": (2 * Henc, Hd), "bfc": (1, Hd),
        # alignment (feed-forward, no activation): v . (s@Was + enc@Wah + ba)
        "was": (Hd, Hd), "wah": (2 * Henc, Hd), "ba": (1, Hd), "v": (1, Hd),
        # decoder GRU, input = [emb ; ctx_fwd ; ctx_bwd], gates fused
        "wi_dec": (E + 2 * Henc, 3 * Hd), "bi_dec": (1, 3 * Hd),
        "wh_dec": (Hd, 3 * Hd), "bh_dec": (1, 3 * Hd),
        # output projection over [emb ; ctx ; s_new], fused into one matrix
        "wo": (E + 2 * Henc + Hd, V), "bo": (1, V),
    }
    keys = jax.random.split(key, len(shapes))
    return {name: 0.1 * jax.random.normal(k, shape, dtype=jnp.float32)
            for (name, shape), k in zip(shapes.items(), keys)}


# ============================================================================
# main
# ============================================================================

if __name__ == "__main__":
    B = 2          # batch (padded to 8 internally)
    T_SRC = 8      # source length
    T_TRG = 6      # target length
    E = 16         # embedding dim
    HENC = 16      # encoder hidden (per direction)
    HDEC = 32      # decoder hidden
    VOCAB = 32     # vocab size == decoder.d (padded to 128 internally)

    # TODO(synk): at realistic sizes, also pad 3*Hd / 3*Henc to multiples of
    # 128 and, on v7x, stream wo tiles / use the second TensorCore via a
    # 'parallel' batch grid axis instead of keeping everything VMEM-resident.

    root = jax.random.PRNGKey(0)
    k_par, k_src, k_trg = jax.random.split(root, 3)

    params = init_params(k_par, VOCAB, VOCAB, E, HENC, HDEC, VOCAB)
    src = jax.random.randint(k_src, (B, T_SRC), 0, VOCAB, dtype=jnp.int32)
    trg = jax.random.randint(k_trg, (B, T_TRG), 0, VOCAB, dtype=jnp.int32)

    decoder_outputs, predictions = seq2seq_forward(src, trg, params, tf_rate=0)
    jax.block_until_ready((decoder_outputs, predictions))

    assert decoder_outputs.shape == (T_TRG, B, VOCAB)
    assert predictions.shape == (T_TRG, B)
    print("KERNEL_OK")
</pallas_src>

<mosaic_0001>
module attributes {stable_mosaic.version = 11 : i64} {
  func.func @encoder_kernel(%arg0: memref<64x16xf32, #tpu.memory_space<vmem>>, %arg1: memref<16x48xbf16, #tpu.memory_space<vmem>>, %arg2: memref<16x48xbf16, #tpu.memory_space<vmem>>, %arg3: memref<1x48xf32, #tpu.memory_space<vmem>>, %arg4: memref<1x48xf32, #tpu.memory_space<vmem>>, %arg5: memref<16x48xbf16, #tpu.memory_space<vmem>>, %arg6: memref<16x48xbf16, #tpu.memory_space<vmem>>, %arg7: memref<1x48xf32, #tpu.memory_space<vmem>>, %arg8: memref<1x48xf32, #tpu.memory_space<vmem>>, %arg9: memref<32x32xbf16, #tpu.memory_space<vmem>>, %arg10: memref<1x32xf32, #tpu.memory_space<vmem>>, %arg11: memref<1x1x16xf32, #tpu.memory_space<vmem>>, %arg12: memref<1x1x16xf32, #tpu.memory_space<vmem>>, %arg13: memref<1x1x1xf32, #tpu.memory_space<vmem>>, %arg14: memref<8x8x16xf32, #tpu.memory_space<vmem>>, %arg15: memref<8x8x16xf32, #tpu.memory_space<vmem>>, %arg16: memref<8x8x1xf32, #tpu.memory_space<vmem>>, %arg17: memref<8x32xf32, #tpu.memory_space<vmem>>) attributes {dimension_semantics = [], scalar_prefetch = 0 : i64, scratch_operands = 0 : i64, tpu.core_type = #tpu.core_type<tc>} {
    %c0 = arith.constant 0 : index
    %c0_0 = arith.constant 0 : index
    %0 = vector.load %arg0[%c0, %c0_0] : memref<64x16xf32, #tpu.memory_space<vmem>>, vector<64x16xf32>
    %1 = arith.truncf %0 : vector<64x16xf32> to vector<64x16xbf16>
    %c0_1 = arith.constant 0 : index
    %c0_2 = arith.constant 0 : index
    %2 = vector.load %arg1[%c0_1, %c0_2] : memref<16x48xbf16, #tpu.memory_space<vmem>>, vector<16x48xbf16>
    %cst = arith.constant dense<0.000000e+00> : vector<64x48xf32>
    %3 = tpu.matmul %1, %2, %cst {dimension_numbers = #tpu.dot_dimension_numbers<[1], [0], [0], [1], [0, 0, 1, 1], [], []>} : vector<64x16xbf16>, vector<16x48xbf16>, vector<64x48xf32> -> vector<64x48xf32>
    %c0_3 = arith.constant 0 : index
    %c0_4 = arith.constant 0 : index
    %4 = vector.load %arg3[%c0_3, %c0_4] : memref<1x48xf32, #tpu.memory_space<vmem>>, vector<1x48xf32>
    %5 = vector.broadcast %4 : vector<1x48xf32> to vector<64x48xf32>
    %6 = arith.addf %3, %5 : vector<64x48xf32>
    %c0_5 = arith.constant 0 : index
    %c0_6 = arith.constant 0 : index
    %7 = vector.load %arg5[%c0_5, %c0_6] : memref<16x48xbf16, #tpu.memory_space<vmem>>, vector<16x48xbf16>
    %cst_7 = arith.constant dense<0.000000e+00> : vector<64x48xf32>
    %8 = tpu.matmul %1, %7, %cst_7 {dimension_numbers = #tpu.dot_dimension_numbers<[1], [0], [0], [1], [0, 0, 1, 1], [], []>} : vector<64x16xbf16>, vector<16x48xbf16>, vector<64x48xf32> -> vector<64x48xf32>
    %c0_8 = arith.constant 0 : index
    %c0_9 = arith.constant 0 : index
    %9 = vector.load %arg7[%c0_8, %c0_9] : memref<1x48xf32, #tpu.memory_space<vmem>>, vector<1x48xf32>
    %10 = vector.broadcast %9 : vector<1x48xf32> to vector<64x48xf32>
    %11 = arith.addf %8, %10 : vector<64x48xf32>
    %c0_10 = arith.constant 0 : index
    %c0_11 = arith.constant 0 : index
    %12 = vector.load %arg2[%c0_10, %c0_11] : memref<16x48xbf16, #tpu.memory_space<vmem>>, vector<16x48xbf16>
    %c0_12 = arith.constant 0 : index
    %c0_13 = arith.constant 0 : index
    %13 = vector.load %arg4[%c0_12, %c0_13] : memref<1x48xf32, #tpu.memory_space<vmem>>, vector<1x48xf32>
    %c0_14 = arith.constant 0 : index
    %c0_15 = arith.constant 0 : index
    %14 = vector.load %arg6[%c0_14, %c0_15] : memref<16x48xbf16, #tpu.memory_space<vmem>>, vector<16x48xbf16>
    %c0_16 = arith.constant 0 : index
    %c0_17 = arith.constant 0 : index
    %15 = vector.load %arg8[%c0_16, %c0_17] : memref<1x48xf32, #tpu.memory_space<vmem>>, vector<1x48xf32>
    %cst_18 = arith.constant 0.000000e+00 : f32
    %16 = vector.broadcast %cst_18 : f32 to vector<8x16xf32>
    %cst_19 = arith.constant 0.000000e+00 : f32
    %17 = vector.broadcast %cst_19 : f32 to vector<8x16xf32>
    %18 = vector.extract_strided_slice %6 {offsets = [0, 0], sizes = [8, 48], strides = [1, 1]} : vector<64x48xf32> to vector<8x48xf32>
    %19 = arith.truncf %16 : vector<8x16xf32> to vector<8x16xbf16>
    %cst_20 = arith.constant dense<0.000000e+00> : vector<8x48xf32>
    %20 = tpu.matmul %19, %12, %cst_20 {dimension_numbers = #tpu.dot_dimension_numbers<[1], [0], [0], [1], [0, 0, 1, 1], [], []>} : vector<8x16xbf16>, vector<16x48xbf16>, vector<8x48xf32> -> vector<8x48xf32>
    %21 = vector.broadcast %13 : vector<1x48xf32> to vector<8x48xf32>
    %22 = arith.addf %20, %21 : vector<8x48xf32>
    %23 = vector.extract_strided_slice %18 {offsets = [0, 0], sizes = [8, 16], strides = [1, 1]} : vector<8x48xf32> to vector<8x16xf32>
    %24 = vector.extract_strided_slice %22 {offsets = [0, 0], sizes = [8, 16], strides = [1, 1]} : vector<8x48xf32> to vector<8x16xf32>
    %25 = arith.addf %23, %24 : vector<8x16xf32>
    %26 = arith.negf %25 : vector<8x16xf32>
    %27 = math.exp %26 : vector<8x16xf32>
    %cst_21 = arith.constant 1.000000e+00 : f32
    %28 = vector.broadcast %cst_21 : f32 to vector<8x16xf32>
    %29 = arith.addf %28, %27 : vector<8x16xf32>
    %30 = arith.divf %28, %29 : vector<8x16xf32>
    %31 = vector.extract_strided_slice %18 {offsets = [0, 16], sizes = [8, 16], strides = [1, 1]} : vector<8x48xf32> to vector<8x16xf32>
    %32 = vector.extract_strided_slice %22 {offsets = [0, 16], sizes = [8, 16], strides = [1, 1]} : vector<8x48xf32> to vector<8x16xf32>
    %33 = arith.addf %31, %32 : vector<8x16xf32>
    %34 = arith.negf %33 : vector<8x16xf32>
    %35 = math.exp %34 : vector<8x16xf32>
    %cst_22 = arith.constant 1.000000e+00 : f32
    %36 = vector.broadcast %cst_22 : f32 to vector<8x16xf32>
    %37 = arith.addf %36, %35 : vector<8x16xf32>
    %38 = arith.divf %36, %37 : vector<8x16xf32>
    %39 = vector.extract_strided_slice %18 {offsets = [0, 32], sizes = [8, 16], strides = [1, 1]} : vector<8x48xf32> to vector<8x16xf32>
    %40 = vector.extract_strided_slice %22 {offsets = [0, 32], sizes = [8, 16], strides = [1, 1]} : vector<8x48xf32> to vector<8x16xf32>
    %41 = arith.mulf %30, %40 : vector<8x16xf32>
    %42 = arith.addf %39, %41 : vector<8x16xf32>
    %43 = math.tanh %42 : vector<8x16xf32>
    %cst_23 = arith.constant 1.000000e+00 : f32
    %44 = vector.broadcast %cst_23 : f32 to vector<8x16xf32>
    %45 = arith.subf %44, %38 : vector<8x16xf32>
    %46 = arith.mulf %45, %43 : vector<8x16xf32>
    %47 = arith.mulf %38, %16 : vector<8x16xf32>
    %48 = arith.addf %46, %47 : vector<8x16xf32>
    %c0_24 = arith.constant 0 : index
    %c0_25 = arith.constant 0 : index
    %c0_26 = arith.constant 0 : index
    %49 = vector.load %arg14[%c0_24, %c0_25, %c0_26] : memref<8x8x16xf32, #tpu.memory_space<vmem>>, vector<1x8x16xf32>
    %50 = vector.shape_cast %49 : vector<1x8x16xf32> to vector<8x16xf32>
    %51 = vector.shape_cast %48 : vector<8x16xf32> to vector<1x8x16xf32>
    tpu.vector_store %arg14[%c0_24, %c0_25, %c0_26], %51 {strides = array<i32>} : memref<8x8x16xf32, #tpu.memory_space<vmem>>, vector<1x8x16xf32>,
    %52 = vector.extract_strided_slice %11 {offsets = [56, 0], sizes = [8, 48], strides = [1, 1]} : vector<64x48xf32> to vector<8x48xf32>
    %53 = arith.truncf %17 : vector<8x16xf32> to vector<8x16xbf16>
    %cst_27 = arith.constant dense<0.000000e+00> : vector<8x48xf32>
    %54 = tpu.matmul %53, %14, %cst_27 {dimension_numbers = #tpu.dot_dimension_numbers<[1], [0], [0], [1], [0, 0, 1, 1], [], []>} : vector<8x16xbf16>, vector<16x48xbf16>, vector<8x48xf32> -> vector<8x48xf32>
    %55 = vector.broadcast %15 : vector<1x48xf32> to vector<8x48xf32>
    %56 = arith.addf %54, %55 : vector<8x48xf32>
    %57 = vector.extract_strided_slice %52 {offsets = [0, 0], sizes = [8, 16], strides = [1, 1]} : vector<8x48xf32> to vector<8x16xf32>
    %58 = vector.extract_strided_slice %56 {offsets = [0, 0], sizes = [8, 16], strides = [1, 1]} : vector<8x48xf32> to vector<8x16xf32>
    %59 = arith.addf %57, %58 : vector<8x16xf32>
    %60 = arith.negf %59 : vector<8x16xf32>
    %61 = math.exp %60 : vector<8x16xf32>
    %cst_28 = arith.constant 1.000000e+00 : f32
    %62 = vector.broadcast %cst_28 : f32 to vector<8x16xf32>
    %63 = arith.addf %62, %61 : vector<8x16xf32>
    %64 = arith.divf %62, %63 : vector<8x16xf32>
    %65 = vector.extract_strided_slice %52 {offsets = [0, 16], sizes = [8, 16], strides = [1, 1]} : vector<8x48xf32> to vector<8x16xf32>
    %66 = vector.extract_strided_slice %56 {offsets = [0, 16], sizes = [8, 16], strides = [1, 1]} : vector<8x48xf32> to vector<8x16xf32>
    %67 = arith.addf %65, %66 : vector<8x16xf32>
    %68 = arith.negf %67 : vector<8x16xf32>
    %69 = math.exp %68 : vector<8x16xf32>
    %cst_29 = arith.constant 1.000000e+00 : f32
    %70 = vector.broadcast %cst_29 : f32 to vector<8x16xf32>
    %71 = arith.addf %70, %69 : vector<8x16xf32>
    %72 = arith.divf %70, %71 : vector<8x16xf32>
    %73 = vector.extract_strided_slice %52 {offsets = [0, 32], sizes = [8, 16], strides = [1, 1]} : vector<8x48xf32> to vector<8x16xf32>
    %74 = vector.extract_strided_slice %56 {offsets = [0, 32], sizes = [8, 16], strides = [1, 1]} : vector<8x48xf32> to vector<8x16xf32>
    %75 = arith.mulf %64, %74 : vector<8x16xf32>
    %76 = arith.addf %73, %75 : vector<8x16xf32>
    %77 = math.tanh %76 : vector<8x16xf32>
    %cst_30 = arith.constant 1.000000e+00 : f32
    %78 = vector.broadcast %cst_30 : f32 to vector<8x16xf32>
    %79 = arith.subf %78, %72 : vector<8x16xf32>
    %80 = arith.mulf %79, %77 : vector<8x16xf32>
    %81 = arith.mulf %72, %17 : vector<8x16xf32>
    %82 = arith.addf %80, %81 : vector<8x16xf32>
    %c7 = arith.constant 7 : index
    %c0_31 = arith.constant 0 : index
    %c0_32 = arith.constant 0 : index
    %83 = vector.load %arg15[%c7, %c0_31, %c0_32] : memref<8x8x16xf32, #tpu.memory_space<vmem>>, vector<1x8x16xf32>
    %84 = vector.shape_cast %83 : vector<1x8x16xf32> to vector<8x16xf32>
    %85 = vector.shape_cast %82 : vector<8x16xf32> to vector<1x8x16xf32>
    tpu.vector_store %arg15[%c7, %c0_31, %c0_32], %85 {strides = array<i32>} : memref<8x8x16xf32, #tpu.memory_space<vmem>>, vector<1x8x16xf32>,
    %86 = vector.extract_strided_slice %6 {offsets = [8, 0], sizes = [8, 48], strides = [1, 1]} : vector<64x48xf32> to vector<8x48xf32>
    %87 = arith.truncf %48 : vector<8x16xf32> to vector<8x16xbf16>
    %cst_33 = arith.constant dense<0.000000e+00> : vector<8x48xf32>
    %88 = tpu.matmul %87, %12, %cst_33 {dimension_numbers = #tpu.dot_dimension_numbers<[1], [0], [0], [1], [0, 0, 1, 1], [], []>} : vector<8x16xbf16>, vector<16x48xbf16>, vector<8x48xf32> -> vector<8x48xf32>
    %89 = vector.broadcast %13 : vector<1x48xf32> to vector<8x48xf32>
    %90 = arith.addf %88, %89 : vector<8x48xf32>
    %91 = vector.extract_strided_slice %86 {offsets = [0, 0], sizes = [8, 16], strides = [1, 1]} : vector<8x48xf32> to vector<8x16xf32>
    %92 = vector.extract_strided_slice %90 {offsets = [0, 0], sizes = [8, 16], strides = [1, 1]} : vector<8x48xf32> to vector<8x16xf32>
    %93 = arith.addf %91, %92 : vector<8x16xf32>
    %94 = arith.negf %93 : vector<8x16xf32>
    %95 = math.exp %94 : vector<8x16xf32>
    %cst_34 = arith.constant 1.000000e+00 : f32
    %96 = vector.broadcast %cst_34 : f32 to vector<8x16xf32>
    %97 = arith.addf %96, %95 : vector<8x16xf32>
    %98 = arith.divf %96, %97 : vector<8x16xf32>
    %99 = vector.extract_strided_slice %86 {offsets = [0, 16], sizes = [8, 16], strides = [1, 1]} : vector<8x48xf32> to vector<8x16xf32>
    %100 = vector.extract_strided_slice %90 {offsets = [0, 16], sizes = [8, 16], strides = [1, 1]} : vector<8x48xf32> to vector<8x16xf32>
    %101 = arith.addf %99, %100 : vector<8x16xf32>
    %102 = arith.negf %101 : vector<8x16xf32>
    %103 = math.exp %102 : vector<8x16xf32>
    %cst_35 = arith.constant 1.000000e+00 : f32
    %104 = vector.broadcast %cst_35 : f32 to vector<8x16xf32>
    %105 = arith.addf %104, %103 : vector<8x16xf32>
    %106 = arith.divf %104, %105 : vector<8x16xf32>
    %107 = vector.extract_strided_slice %86 {offsets = [0, 32], sizes = [8, 16], strides = [1, 1]} : vector<8x48xf32> to vector<8x16xf32>
    %108 = vector.extract_strided_slice %90 {offsets = [0, 32], sizes = [8, 16], strides = [1, 1]} : vector<8x48xf32> to vector<8x16xf32>
    %109 = arith.mulf %98, %108 : vector<8x16xf32>
    %110 = arith.addf %107, %109 : vector<8x16xf32>
    %111 = math.tanh %110 : vector<8x16xf32>
    %cst_36 = arith.constant 1.000000e+00 : f32
    %112 = vector.broadcast %cst_36 : f32 to vector<8x16xf32>
    %113 = arith.subf %112, %106 : vector<8x16xf32>
    %114 = arith.mulf %113, %111 : vector<8x16xf32>
    %115 = arith.mulf %106, %48 : vector<8x16xf32>
    %116 = arith.addf %114, %115 : vector<8x16xf32>
    %c1 = arith.constant 1 : index
    %c0_37 = arith.constant 0 : index
    %c0_38 = arith.constant 0 : index
    %117 = vector.load %arg14[%c1, %c0_37, %c0_38] : memref<8x8x16xf32, #tpu.memory_space<vmem>>, vector<1x8x16xf32>
    %118 = vector.shape_cast %117 : vector<1x8x16xf32> to vector<8x16xf32>
    %119 = vector.shape_cast %116 : vector<8x16xf32> to vector<1x8x16xf32>
    tpu.vector_store %arg14[%c1, %c0_37, %c0_38], %119 {strides = array<i32>} : memref<8x8x16xf32, #tpu.memory_space<vmem>>, vector<1x8x16xf32>,
    %120 = vector.extract_strided_slice %11 {offsets = [48, 0], sizes = [8, 48], strides = [1, 1]} : vector<64x48xf32> to vector<8x48xf32>
    %121 = arith.truncf %82 : vector<8x16xf32> to vector<8x16xbf16>
    %cst_39 = arith.constant dense<0.000000e+00> : vector<8x48xf32>
    %122 = tpu.matmul %121, %14, %cst_39 {dimension_numbers = #tpu.dot_dimension_numbers<[1], [0], [0], [1], [0, 0, 1, 1], [], []>} : vector<8x16xbf16>, vector<16x48xbf16>, vector<8x48xf32> -> vector<8x48xf32>
    %123 = vector.broadcast %15 : vector<1x48xf32> to vector<8x48xf32>
    %124 = arith.addf %122, %123 : vector<8x48xf32>
    %125 = vector.extract_strided_slice %120 {offsets = [0, 0], sizes = [8, 16], strides = [1, 1]} : vector<8x48xf32> to vector<8x16xf32>
    %126 = vector.extract_strided_slice %124 {offsets = [0, 0], sizes = [8, 16], strides = [1, 1]} : vector<8x48xf32> to vector<8x16xf32>
    %127 = arith.addf %125, %126 : vector<8x16xf32>
    %128 = arith.negf %127 : vector<8x16xf32>
    %129 = math.exp %128 : vector<8x16xf32>
    %cst_40 = arith.constant 1.000000e+00 : f32
    %130 = vector.broadcast %cst_40 : f32 to vector<8x16xf32>
    %131 = arith.addf %130, %129 : vector<8x16xf32>
    %132 = arith.divf %130, %131 : vector<8x16xf32>
    %133 = vector.extract_strided_slice %120 {offsets = [0, 16], sizes = [8, 16], strides = [1, 1]} : vector<8x48xf32> to vector<8x16xf32>
    %134 = vector.extract_strided_slice %124 {offsets = [0, 16], sizes = [8, 16], strides = [1, 1]} : vector<8x48xf32> to vector<8x16xf32>
    %135 = arith.addf %133, %134 : vector<8x16xf32>
    %136 = arith.negf %135 : vector<8x16xf32>
    %137 = math.exp %136 : vector<8x16xf32>
    %cst_41 = arith.constant 1.000000e+00 : f32
    %138 = vector.broadcast %cst_41 : f32 to vector<8x16xf32>
    %139 = arith.addf %138, %137 : vector<8x16xf32>
    %140 = arith.divf %138, %139 : vector<8x16xf32>
    %141 = vector.extract_strided_slice %120 {offsets = [0, 32], sizes = [8, 16], strides = [1, 1]} : vector<8x48xf32> to vector<8x16xf32>
    %142 = vector.extract_strided_slice %124 {offsets = [0, 32], sizes = [8, 16], strides = [1, 1]} : vector<8x48xf32> to vector<8x16xf32>
    %143 = arith.mulf %132, %142 : vector<8x16xf32>
    %144 = arith.addf %141, %143 : vector<8x16xf32>
    %145 = math.tanh %144 : vector<8x16xf32>
    %cst_42 = arith.constant 1.000000e+00 : f32
    %146 = vector.broadcast %cst_42 : f32 to vector<8x16xf32>
    %147 = arith.subf %146, %140 : vector<8x16xf32>
    %148 = arith.mulf %147, %145 : vector<8x16xf32>
    %149 = arith.mulf %140, %82 : vector<8x16xf32>
    %150 = arith.addf %148, %149 : vector<8x16xf32>
    %c6 = arith.constant 6 : index
    %c0_43 = arith.constant 0 : index
    %c0_44 = arith.constant 0 : index
    %151 = vector.load %arg15[%c6, %c0_43, %c0_44] : memref<8x8x16xf32, #tpu.memory_space<vmem>>, vector<1x8x16xf32>
    %152 = vector.shape_cast %151 : vector<1x8x16xf32> to vector<8x16xf32>
    %153 = vector.shape_cast %150 : vector<8x16xf32> to vector<1x8x16xf32>
    tpu.vector_store %arg15[%c6, %c0_43, %c0_44], %153 {strides = array<i32>} : memref<8x8x16xf32, #tpu.memory_space<vmem>>, vector<1x8x16xf32>,
    %154 = vector.extract_strided_slice %6 {offsets = [16, 0], sizes = [8, 48], strides = [1, 1]} : vector<64x48xf32> to vector<8x48xf32>
    %155 = arith.truncf %116 : vector<8x16xf32> to vector<8x16xbf16>
    %cst_45 = arith.constant dense<0.000000e+00> : vector<8x48xf32>
    %156 = tpu.matmul %155, %12, %cst_45 {dimension_numbers = #tpu.dot_dimension_numbers<[1], [0], [0], [1], [0, 0, 1, 1], [], []>} : vector<8x16xbf16>, vector<16x48xbf16>, vector<8x48xf32> -> vector<8x48xf32>
    %157 = vector.broadcast %13 : vector<1x48xf32> to vector<8x48xf32>
    %158 = arith.addf %156, %157 : vector<8x48xf32>
    %159 = vector.extract_strided_slice %154 {offsets = [0, 0], sizes = [8, 16], strides = [1, 1]} : vector<8x48xf32> to vector<8x16xf32>
    %160 = vector.extract_strided_slice %158 {offsets = [0, 0], sizes = [8, 16], strides = [1, 1]} : vector<8x48xf32> to vector<8x16xf32>
    %161 = arith.addf %159, %160 : vector<8x16xf32>
    %162 = arith.negf %161 : vector<8x16xf32>
    %163 = math.exp %162 : vector<8x16xf32>
    %cst_46 = arith.constant 1.000000e+00 : f32
    %164 = vector.broadcast %cst_46 : f32 to vector<8x16xf32>
    %165 = arith.addf %164, %163 : vector<8x16xf32>
    %166 = arith.divf %164, %165 : vector<8x16xf32>
    %167 = vector.extract_strided_slice %154 {offsets = [0, 16], sizes = [8, 16], strides = [1, 1]} : vector<8x48xf32> to vector<8x16xf32>
    %168 = vector.extract_strided_slice %158 {offsets = [0, 16], sizes = [8, 16], strides = [1, 1]} : vector<8x48xf32> to vector<8x16xf32>
    %169 = arith.addf %167, %168 : vector<8x16xf32>
    %170 = arith.negf %169 : vector<8x16xf32>
    %171 = math.exp %170 : vector<8x16xf32>
    %cst_47 = arith.constant 1.000000e+00 : f32
    %172 = vector.broadcast %cst_47 : f32 to vector<8x16xf32>
    %173 = arith.addf %172, %171 : vector<8x16xf32>
    %174 = arith.divf %172, %173 : vector<8x16xf32>
    %175 = vector.extract_strided_slice %154 {offsets = [0, 32], sizes = [8, 16], strides = [1, 1]} : vector<8x48xf32> to vector<8x16xf32>
    %176 = vector.extract_strided_slice %158 {offsets = [0, 32], sizes = [8, 16], strides = [1, 1]} : vector<8x48xf32> to vector<8x16xf32>
    %177 = arith.mulf %166, %176 : vector<8x16xf32>
    %178 = arith.addf %175, %177 : vector<8x16xf32>
    %179 = math.tanh %178 : vector<8x16xf32>
    %cst_48 = arith.constant 1.000000e+00 : f32
    %180 = vector.broadcast %cst_48 : f32 to vector<8x16xf32>
    %181 = arith.subf %180, %174 : vector<8x16xf32>
    %182 = arith.mulf %181, %179 : vector<8x16xf32>
    %183 = arith.mulf %174, %116 : vector<8x16xf32>
    %184 = arith.addf %182, %183 : vector<8x16xf32>
    %c2 = arith.constant 2 : index
    %c0_49 = arith.constant 0 : index
    %c0_50 = arith.constant 0 : index
    %185 = vector.load %arg14[%c2, %c0_49, %c0_50] : memref<8x8x16xf32, #tpu.memory_space<vmem>>, vector<1x8x16xf32>
    %186 = vector.shape_cast %185 : vector<1x8x16xf32> to vector<8x16xf32>
    %187 = vector.shape_cast %184 : vector<8x16xf32> to vector<1x8x16xf32>
    tpu.vector_store %arg14[%c2, %c0_49, %c0_50], %187 {strides = array<i32>} : memref<8x8x16xf32, #tpu.memory_space<vmem>>, vector<1x8x16xf32>,
    %188 = vector.extract_strided_slice %11 {offsets = [40, 0], sizes = [8, 48], strides = [1, 1]} : vector<64x48xf32> to vector<8x48xf32>
    %189 = arith.truncf %150 : vector<8x16xf32> to vector<8x16xbf16>
    %cst_51 = arith.constant dense<0.000000e+00> : vector<8x48xf32>
    %190 = tpu.matmul %189, %14, %cst_51 {dimension_numbers = #tpu.dot_dimension_numbers<[1], [0], [0], [1], [0, 0, 1, 1], [], []>} : vector<8x16xbf16>, vector<16x48xbf16>, vector<8x48xf32> -> vector<8x48xf32>
    %191 = vector.broadcast %15 : vector<1x48xf32> to vector<8x48xf32>
    %192 = arith.addf %190, %191 : vector<8x48xf32>
    %193 = vector.extract_strided_slice %188 {offsets = [0, 0], sizes = [8, 16], strides = [1, 1]} : vector<8x48xf32> to vector<8x16xf32>
    %194 = vector.extract_strided_slice %192 {offsets = [0, 0], sizes = [8, 16], strides = [1, 1]} : vector<8x48xf32> to vector<8x16xf32>
    %195 = arith.addf %193, %194 : vector<8x16xf32>
    %196 = arith.negf %195 : vector<8x16xf32>
    %197 = math.exp %196 : vector<8x16xf32>
    %cst_52 = arith.constant 1.000000e+00 : f32
    %198 = vector.broadcast %cst_52 : f32 to vector<8x16xf32>
    %199 = arith.addf %198, %197 : vector<8x16xf32>
    %200 = arith.divf %198, %199 : vector<8x16xf32>
    %201 = vector.extract_strided_slice %188 {offsets = [0, 16], sizes = [8, 16], strides = [1, 1]} : vector<8x48xf32> to vector<8x16xf32>
    %202 = vector.extract_strided_slice %192 {offsets = [0, 16], sizes = [8, 16], strides = [1, 1]} : vector<8x48xf32> to vector<8x16xf32>
    %203 = arith.addf %201, %202 : vector<8x16xf32>
    %204 = arith.negf %203 : vector<8x16xf32>
    %205 = math.exp %204 : vector<8x16xf32>
    %cst_53 = arith.constant 1.000000e+00 : f32
    %206 = vector.broadcast %cst_53 : f32 to vector<8x16xf32>
    %207 = arith.addf %206, %205 : vector<8x16xf32>
    %208 = arith.divf %206, %207 : vector<8x16xf32>
    %209 = vector.extract_strided_slice %188 {offsets = [0, 32], sizes = [8, 16], strides = [1, 1]} : vector<8x48xf32> to vector<8x16xf32>
    %210 = vector.extract_strided_slice %192 {offsets = [0, 32], sizes = [8, 16], strides = [1, 1]} : vector<8x48xf32> to vector<8x16xf32>
    %211 = arith.mulf %200, %210 : vector<8x16xf32>
    %212 = arith.addf %209, %211 : vector<8x16xf32>
    %213 = math.tanh %212 : vector<8x16xf32>
    %cst_54 = arith.constant 1.000000e+00 : f32
    %214 = vector.broadcast %cst_54 : f32 to vector<8x16xf32>
    %215 = arith.subf %214, %208 : vector<8x16xf32>
    %216 = arith.mulf %215, %213 : vector<8x16xf32>
    %217 = arith.mulf %208, %150 : vector<8x16xf32>
    %218 = arith.addf %216, %217 : vector<8x16xf32>
    %c5 = arith.constant 5 : index
    %c0_55 = arith.constant 0 : index
    %c0_56 = arith.constant 0 : index
    %219 = vector.load %arg15[%c5, %c0_55, %c0_56] : memref<8x8x16xf32, #tpu.memory_space<vmem>>, vector<1x8x16xf32>
    %220 = vector.shape_cast %219 : vector<1x8x16xf32> to vector<8x16xf32>
    %221 = vector.shape_cast %218 : vector<8x16xf32> to vector<1x8x16xf32>
    tpu.vector_store %arg15[%c5, %c0_55, %c0_56], %221 {strides = array<i32>} : memref<8x8x16xf32, #tpu.memory_space<vmem>>, vector<1x8x16xf32>,
    %222 = vector.extract_strided_slice %6 {offsets = [24, 0], sizes = [8, 48], strides = [1, 1]} : vector<64x48xf32> to vector<8x48xf32>
    %223 = arith.truncf %184 : vector<8x16xf32> to vector<8x16xbf16>
    %cst_57 = arith.constant dense<0.000000e+00> : vector<8x48xf32>
    %224 = tpu.matmul %223, %12, %cst_57 {dimension_numbers = #tpu.dot_dimension_numbers<[1], [0], [0], [1], [0, 0, 1, 1], [], []>} : vector<8x16xbf16>, vector<16x48xbf16>, vector<8x48xf32> -> vector<8x48xf32>
    %225 = vector.broadcast %13 : vector<1x48xf32> to vector<8x48xf32>
    %226 = arith.addf %224, %225 : vector<8x48xf32>
    %227 = vector.extract_strided_slice %222 {offsets = [0, 0], sizes = [8, 16], strides = [1, 1]} : vector<8x48xf32> to vector<8x16xf32>
    %228 = vector.extract_strided_slice %226 {offsets = [0, 0], sizes = [8, 16], strides = [1, 1]} : vector<8x48xf32> to vector<8x16xf32>
    %229 = arith.addf %227, %228 : vector<8x16xf32>
    %230 = arith.negf %229 : vector<8x16xf32>
    %231 = math.exp %230 : vector<8x16xf32>
    %cst_58 = arith.constant 1.000000e+00 : f32
    %232 = vector.broadcast %cst_58 : f32 to vector<8x16xf32>
    %233 = arith.addf %232, %231 : vector<8x16xf32>
    %234 = arith.divf %232, %233 : vector<8x16xf32>
    %235 = vector.extract_strided_slice %222 {offsets = [0, 16], sizes = [8, 16], strides = [1, 1]} : vector<8x48xf32> to vector<8x16xf32>
    %236 = vector.extract_strided_slice %226 {offsets = [0, 16], sizes = [8, 16], strides = [1, 1]} : vector<8x48xf32> to vector<8x16xf32>
    %237 = arith.addf %235, %236 : vector<8x16xf32>
    %238 = arith.negf %237 : vector<8x16xf32>
    %239 = math.exp %238 : vector<8x16xf32>
    %cst_59 = arith.constant 1.000000e+00 : f32
    %240 = vector.broadcast %cst_59 : f32 to vector<8x16xf32>
    %241 = arith.addf %240, %239 : vector<8x16xf32>
    %242 = arith.divf %240, %241 : vector<8x16xf32>
    %243 = vector.extract_strided_slice %222 {offsets = [0, 32], sizes = [8, 16], strides = [1, 1]} : vector<8x48xf32> to vector<8x16xf32>
    %244 = vector.extract_strided_slice %226 {offsets = [0, 32], sizes = [8, 16], strides = [1, 1]} : vector<8x48xf32> to vector<8x16xf32>
    %245 = arith.mulf %234, %244 : vector<8x16xf32>
    %246 = arith.addf %243, %245 : vector<8x16xf32>
    %247 = math.tanh %246 : vector<8x16xf32>
    %cst_60 = arith.constant 1.000000e+00 : f32
    %248 = vector.broadcast %cst_60 : f32 to vector<8x16xf32>
    %249 = arith.subf %248, %242 : vector<8x16xf32>
    %250 = arith.mulf %249, %247 : vector<8x16xf32>
    %251 = arith.mulf %242, %184 : vector<8x16xf32>
    %252 = arith.addf %250, %251 : vector<8x16xf32>
    %c3 = arith.constant 3 : index
    %c0_61 = arith.constant 0 : index
    %c0_62 = arith.constant 0 : index
    %253 = vector.load %arg14[%c3, %c0_61, %c0_62] : memref<8x8x16xf32, #tpu.memory_space<vmem>>, vector<1x8x16xf32>
    %254 = vector.shape_cast %253 : vector<1x8x16xf32> to vector<8x16xf32>
    %255 = vector.shape_cast %252 : vector<8x16xf32> to vector<1x8x16xf32>
    tpu.vector_store %arg14[%c3, %c0_61, %c0_62], %255 {strides = array<i32>} : memref<8x8x16xf32, #tpu.memory_space<vmem>>, vector<1x8x16xf32>,
    %256 = vector.extract_strided_slice %11 {offsets = [32, 0], sizes = [8, 48], strides = [1, 1]} : vector<64x48xf32> to vector<8x48xf32>
    %257 = arith.truncf %218 : vector<8x16xf32> to vector<8x16xbf16>
    %cst_63 = arith.constant dense<0.000000e+00> : vector<8x48xf32>
    %258 = tpu.matmul %257, %14, %cst_63 {dimension_numbers = #tpu.dot_dimension_numbers<[1], [0], [0], [1], [0, 0, 1, 1], [], []>} : vector<8x16xbf16>, vector<16x48xbf16>, vector<8x48xf32> -> vector<8x48xf32>
    %259 = vector.broadcast %15 : vector<1x48xf32> to vector<8x48xf32>
    %260 = arith.addf %258, %259 : vector<8x48xf32>
    %261 = vector.extract_strided_slice %256 {offsets = [0, 0], sizes = [8, 16], strides = [1, 1]} : vector<8x48xf32> to vector<8x16xf32>
    %262 = vector.extract_strided_slice %260 {offsets = [0, 0], sizes = [8, 16], strides = [1, 1]} : vector<8x48xf32> to vector<8x16xf32>
    %263 = arith.addf %261, %262 : vector<8x16xf32>
    %264 = arith.negf %263 : vector<8x16xf32>
    %265 = math.exp %264 : vector<8x16xf32>
    %cst_64 = arith.constant 1.000000e+00 : f32
    %266 = vector.broadcast %cst_64 : f32 to vector<8x16xf32>
    %267 = arith.addf %266, %265 : vector<8x16xf32>
    %268 = arith.divf %266, %267 : vector<8x16xf32>
    %269 = vector.extract_strided_slice %256 {offsets = [0, 16], sizes = [8, 16], strides = [1, 1]} : vector<8x48xf32> to vector<8x16xf32>
    %270 = vector.extract_strided_slice %260 {offsets = [0, 16], sizes = [8, 16], strides = [1, 1]} : vector<8x48xf32> to vector<8x16xf32>
    %271 = arith.addf %269, %270 : vector<8x16xf32>
    %272 = arith.negf %271 : vector<8x16xf32>
    %273 = math.exp %272 : vector<8x16xf32>
    %cst_65 = arith.constant 1.000000e+00 : f32
    %274 = vector.broadcast %cst_65 : f32 to vector<8x16xf32>
    %275 = arith.addf %274, %273 : vector<8x16xf32>
    %276 = arith.divf %274, %275 : vector<8x16xf32>
    %277 = vector.extract_strided_slice %256 {offsets = [0, 32], sizes = [8, 16], strides = [1, 1]} : vector<8x48xf32> to vector<8x16xf32>
    %278 = vector.extract_strided_slice %260 {offsets = [0, 32], sizes = [8, 16], strides = [1, 1]} : vector<8x48xf32> to vector<8x16xf32>
    %279 = arith.mulf %268, %278 : vector<8x16xf32>
    %280 = arith.addf %277, %279 : vector<8x16xf32>
    %281 = math.tanh %280 : vector<8x16xf32>
    %cst_66 = arith.constant 1.000000e+00 : f32
    %282 = vector.broadcast %cst_66 : f32 to vector<8x16xf32>
    %283 = arith.subf %282, %276 : vector<8x16xf32>
    %284 = arith.mulf %283, %281 : vector<8x16xf32>
    %285 = arith.mulf %276, %218 : vector<8x16xf32>
    %286 = arith.addf %284, %285 : vector<8x16xf32>
    %c4 = arith.constant 4 : index
    %c0_67 = arith.constant 0 : index
    %c0_68 = arith.constant 0 : index
    %287 = vector.load %arg15[%c4, %c0_67, %c0_68] : memref<8x8x16xf32, #tpu.memory_space<vmem>>, vector<1x8x16xf32>
    %288 = vector.shape_cast %287 : vector<1x8x16xf32> to vector<8x16xf32>
    %289 = vector.shape_cast %286 : vector<8x16xf32> to vector<1x8x16xf32>
    tpu.vector_store %arg15[%c4, %c0_67, %c0_68], %289 {strides = array<i32>} : memref<8x8x16xf32, #tpu.memory_space<vmem>>, vector<1x8x16xf32>,
    %290 = vector.extract_strided_slice %6 {offsets = [32, 0], sizes = [8, 48], strides = [1, 1]} : vector<64x48xf32> to vector<8x48xf32>
    %291 = arith.truncf %252 : vector<8x16xf32> to vector<8x16xbf16>
    %cst_69 = arith.constant dense<0.000000e+00> : vector<8x48xf32>
    %292 = tpu.matmul %291, %12, %cst_69 {dimension_numbers = #tpu.dot_dimension_numbers<[1], [0], [0], [1], [0, 0, 1, 1], [], []>} : vector<8x16xbf16>, vector<16x48xbf16>, vector<8x48xf32> -> vector<8x48xf32>
    %293 = vector.broadcast %13 : vector<1x48xf32> to vector<8x48xf32>
    %294 = arith.addf %292, %293 : vector<8x48xf32>
    %295 = vector.extract_strided_slice %290 {offsets = [0, 0], sizes = [8, 16], strides = [1, 1]} : vector<8x48xf32> to vector<8x16xf32>
    %296 = vector.extract_strided_slice %294 {offsets = [0, 0], sizes = [8, 16], strides = [1, 1]} : vector<8x48xf32> to vector<8x16xf32>
    %297 = arith.addf %295, %296 : vector<8x16xf32>
    %298 = arith.negf %297 : vector<8x16xf32>
    %299 = math.exp %298 : vector<8x16xf32>
    %cst_70 = arith.constant 1.000000e+00 : f32
    %300 = vector.broadcast %cst_70 : f32 to vector<8x16xf32>
    %301 = arith.addf %300, %299 : vector<8x16xf32>
    %302 = arith.divf %300, %301 : vector<8x16xf32>
    %303 = vector.extract_strided_slice %290 {offsets = [0, 16], sizes = [8, 16], strides = [1, 1]} : vector<8x48xf32> to vector<8x16xf32>
    %304 = vector.extract_strided_slice %294 {offsets = [0, 16], sizes = [8, 16], strides = [1, 1]} : vector<8x48xf32> to vector<8x16xf32>
    %305 = arith.addf %303, %304 : vector<8x16xf32>
    %306 = arith.negf %305 : vector<8x16xf32>
    %307 = math.exp %306 : vector<8x16xf32>
    %cst_71 = arith.constant 1.000000e+00 : f32
    %308 = vector.broadcast %cst_71 : f32 to vector<8x16xf32>
    %309 = arith.addf %308, %307 : vector<8x16xf32>
    %310 = arith.divf %308, %309 : vector<8x16xf32>
    %311 = vector.extract_strided_slice %290 {offsets = [0, 32], sizes = [8, 16], strides = [1, 1]} : vector<8x48xf32> to vector<8x16xf32>
    %312 = vector.extract_strided_slice %294 {offsets = [0, 32], sizes = [8, 16], strides = [1, 1]} : vector<8x48xf32> to vector<8x16xf32>
    %313 = arith.mulf %302, %312 : vector<8x16xf32>
    %314 = arith.addf %311, %313 : vector<8x16xf32>
    %315 = math.tanh %314 : vector<8x16xf32>
    %cst_72 = arith.constant 1.000000e+00 : f32
    %316 = vector.broadcast %cst_72 : f32 to vector<8x16xf32>
    %317 = arith.subf %316, %310 : vector<8x16xf32>
    %318 = arith.mulf %317, %315 : vector<8x16xf32>
    %319 = arith.mulf %310, %252 : vector<8x16xf32>
    %320 = arith.addf %318, %319 : vector<8x16xf32>
    %c4_73 = arith.constant 4 : index
    %c0_74 = arith.constant 0 : index
    %c0_75 = arith.constant 0 : index
    %321 = vector.load %arg14[%c4_73, %c0_74, %c0_75] : memref<8x8x16xf32, #tpu.memory_space<vmem>>, vector<1x8x16xf32>
    %322 = vector.shape_cast %321 : vector<1x8x16xf32> to vector<8x16xf32>
    %323 = vector.shape_cast %320 : vector<8x16xf32> to vector<1x8x16xf32>
    tpu.vector_store %arg14[%c4_73, %c0_74, %c0_75], %323 {strides = array<i32>} : memref<8x8x16xf32, #tpu.memory_space<vmem>>, vector<1x8x16xf32>,
    %324 = vector.extract_strided_slice %11 {offsets = [24, 0], sizes = [8, 48], strides = [1, 1]} : vector<64x48xf32> to vector<8x48xf32>
    %325 = arith.truncf %286 : vector<8x16xf32> to vector<8x16xbf16>
    %cst_76 = arith.constant dense<0.000000e+00> : vector<8x48xf32>
    %326 = tpu.matmul %325, %14, %cst_76 {dimension_numbers = #tpu.dot_dimension_numbers<[1], [0], [0], [1], [0, 0, 1, 1], [], []>} : vector<8x16xbf16>, vector<16x48xbf16>, vector<8x48xf32> -> vector<8x48xf32>
    %327 = vector.broadcast %15 : vector<1x48xf32> to vector<8x48xf32>
    %328 = arith.addf %326, %327 : vector<8x48xf32>
    %329 = vector.extract_strided_slice %324 {offsets = [0, 0], sizes = [8, 16], strides = [1, 1]} : vector<8x48xf32> to vector<8x16xf32>
    %330 = vector.extract_strided_slice %328 {offsets = [0, 0], sizes = [8, 16], strides = [1, 1]} : vector<8x48xf32> to vector<8x16xf32>
    %331 = arith.addf %329, %330 : vector<8x16xf32>
    %332 = arith.negf %331 : vector<8x16xf32>
    %333 = math.exp %332 : vector<8x16xf32>
    %cst_77 = arith.constant 1.000000e+00 : f32
    %334 = vector.broadcast %cst_77 : f32 to vector<8x16xf32>
    %335 = arith.addf %334, %333 : vector<8x16xf32>
    %336 = arith.divf %334, %335 : vector<8x16xf32>
    %337 = vector.extract_strided_slice %324 {offsets = [0, 16], sizes = [8, 16], strides = [1, 1]} : vector<8x48xf32> to vector<8x16xf32>
    %338 = vector.extract_strided_slice %328 {offsets = [0, 16], sizes = [8, 16], strides = [1, 1]} : vector<8x48xf32> to vector<8x16xf32>
    %339 = arith.addf %337, %338 : vector<8x16xf32>
    %340 = arith.negf %339 : vector<8x16xf32>
    %341 = math.exp %340 : vector<8x16xf32>
    %cst_78 = arith.constant 1.000000e+00 : f32
    %342 = vector.broadcast %cst_78 : f32 to vector<8x16xf32>
    %343 = arith.addf %342, %341 : vector<8x16xf32>
    %344 = arith.divf %342, %343 : vector<8x16xf32>
    %345 = vector.extract_strided_slice %324 {offsets = [0, 32], sizes = [8, 16], strides = [1, 1]} : vector<8x48xf32> to vector<8x16xf32>
    %346 = vector.extract_strided_slice %328 {offsets = [0, 32], sizes = [8, 16], strides = [1, 1]} : vector<8x48xf32> to vector<8x16xf32>
    %347 = arith.mulf %336, %346 : vector<8x16xf32>
    %348 = arith.addf %345, %347 : vector<8x16xf32>
    %349 = math.tanh %348 : vector<8x16xf32>
    %cst_79 = arith.constant 1.000000e+00 : f32
    %350 = vector.broadcast %cst_79 : f32 to vector<8x16xf32>
    %351 = arith.subf %350, %344 : vector<8x16xf32>
    %352 = arith.mulf %351, %349 : vector<8x16xf32>
    %353 = arith.mulf %344, %286 : vector<8x16xf32>
    %354 = arith.addf %352, %353 : vector<8x16xf32>
    %c3_80 = arith.constant 3 : index
    %c0_81 = arith.constant 0 : index
    %c0_82 = arith.constant 0 : index
    %355 = vector.load %arg15[%c3_80, %c0_81, %c0_82] : memref<8x8x16xf32, #tpu.memory_space<vmem>>, vector<1x8x16xf32>
    %356 = vector.shape_cast %355 : vector<1x8x16xf32> to vector<8x16xf32>
    %357 = vector.shape_cast %354 : vector<8x16xf32> to vector<1x8x16xf32>
    tpu.vector_store %arg15[%c3_80, %c0_81, %c0_82], %357 {strides = array<i32>} : memref<8x8x16xf32, #tpu.memory_space<vmem>>, vector<1x8x16xf32>,
    %358 = vector.extract_strided_slice %6 {offsets = [40, 0], sizes = [8, 48], strides = [1, 1]} : vector<64x48xf32> to vector<8x48xf32>
    %359 = arith.truncf %320 : vector<8x16xf32> to vector<8x16xbf16>
    %cst_83 = arith.constant dense<0.000000e+00> : vector<8x48xf32>
    %360 = tpu.matmul %359, %12, %cst_83 {dimension_numbers = #tpu.dot_dimension_numbers<[1], [0], [0], [1], [0, 0, 1, 1], [], []>} : vector<8x16xbf16>, vector<16x48xbf16>, vector<8x48xf32> -> vector<8x48xf32>
    %361 = vector.broadcast %13 : vector<1x48xf32> to vector<8x48xf32>
    %362 = arith.addf %360, %361 : vector<8x48xf32>
    %363 = vector.extract_strided_slice %358 {offsets = [0, 0], sizes = [8, 16], strides = [1, 1]} : vector<8x48xf32> to vector<8x16xf32>
    %364 = vector.extract_strided_slice %362 {offsets = [0, 0], sizes = [8, 16], strides = [1, 1]} : vector<8x48xf32> to vector<8x16xf32>
    %365 = arith.addf %363, %364 : vector<8x16xf32>
    %366 = arith.negf %365 : vector<8x16xf32>
    %367 = math.exp %366 : vector<8x16xf32>
    %cst_84 = arith.constant 1.000000e+00 : f32
    %368 = vector.broadcast %cst_84 : f32 to vector<8x16xf32>
    %369 = arith.addf %368, %367 : vector<8x16xf32>
    %370 = arith.divf %368, %369 : vector<8x16xf32>
    %371 = vector.extract_strided_slice %358 {offsets = [0, 16], sizes = [8, 16], strides = [1, 1]} : vector<8x48xf32> to vector<8x16xf32>
    %372 = vector.extract_strided_slice %362 {offsets = [0, 16], sizes = [8, 16], strides = [1, 1]} : vector<8x48xf32> to vector<8x16xf32>
    %373 = arith.addf %371, %372 : vector<8x16xf32>
    %374 = arith.negf %373 : vector<8x16xf32>
    %375 = math.exp %374 : vector<8x16xf32>
    %cst_85 = arith.constant 1.000000e+00 : f32
    %376 = vector.broadcast %cst_85 : f32 to vector<8x16xf32>
    %377 = arith.addf %376, %375 : vector<8x16xf32>
    %378 = arith.divf %376, %377 : vector<8x16xf32>
    %379 = vector.extract_strided_slice %358 {offsets = [0, 32], sizes = [8, 16], strides = [1, 1]} : vector<8x48xf32> to vector<8x16xf32>
    %380 = vector.extract_strided_slice %362 {offsets = [0, 32], sizes = [8, 16], strides = [1, 1]} : vector<8x48xf32> to vector<8x16xf32>
    %381 = arith.mulf %370, %380 : vector<8x16xf32>
    %382 = arith.addf %379, %381 : vector<8x16xf32>
    %383 = math.tanh %382 : vector<8x16xf32>
    %cst_86 = arith.constant 1.000000e+00 : f32
    %384 = vector.broadcast %cst_86 : f32 to vector<8x16xf32>
    %385 = arith.subf %384, %378 : vector<8x16xf32>
    %386 = arith.mulf %385, %383 : vector<8x16xf32>
    %387 = arith.mulf %378, %320 : vector<8x16xf32>
    %388 = arith.addf %386, %387 : vector<8x16xf32>
    %c5_87 = arith.constant 5 : index
    %c0_88 = arith.constant 0 : index
    %c0_89 = arith.constant 0 : index
    %389 = vector.load %arg14[%c5_87, %c0_88, %c0_89] : memref<8x8x16xf32, #tpu.memory_space<vmem>>, vector<1x8x16xf32>
    %390 = vector.shape_cast %389 : vector<1x8x16xf32> to vector<8x16xf32>
    %391 = vector.shape_cast %388 : vector<8x16xf32> to vector<1x8x16xf32>
    tpu.vector_store %arg14[%c5_87, %c0_88, %c0_89], %391 {strides = array<i32>} : memref<8x8x16xf32, #tpu.memory_space<vmem>>, vector<1x8x16xf32>,
    %392 = vector.extract_strided_slice %11 {offsets = [16, 0], sizes = [8, 48], strides = [1, 1]} : vector<64x48xf32> to vector<8x48xf32>
    %393 = arith.truncf %354 : vector<8x16xf32> to vector<8x16xbf16>
    %cst_90 = arith.constant dense<0.000000e+00> : vector<8x48xf32>
    %394 = tpu.matmul %393, %14, %cst_90 {dimension_numbers = #tpu.dot_dimension_numbers<[1], [0], [0], [1], [0, 0, 1, 1], [], []>} : vector<8x16xbf16>, vector<16x48xbf16>, vector<8x48xf32> -> vector<8x48xf32>
    %395 = vector.broadcast %15 : vector<1x48xf32> to vector<8x48xf32>
    %396 = arith.addf %394, %395 : vector<8x48xf32>
    %397 = vector.extract_strided_slice %392 {offsets = [0, 0], sizes = [8, 16], strides = [1, 1]} : vector<8x48xf32> to vector<8x16xf32>
    %398 = vector.extract_strided_slice %396 {offsets = [0, 0], sizes = [8, 16], strides = [1, 1]} : vector<8x48xf32> to vector<8x16xf32>
    %399 = arith.addf %397, %398 : vector<8x16xf32>
    %400 = arith.negf %399 : vector<8x16xf32>
    %401 = math.exp %400 : vector<8x16xf32>
    %cst_91 = arith.constant 1.000000e+00 : f32
    %402 = vector.broadcast %cst_91 : f32 to vector<8x16xf32>
    %403 = arith.addf %402, %401 : vector<8x16xf32>
    %404 = arith.divf %402, %403 : vector<8x16xf32>
    %405 = vector.extract_strided_slice %392 {offsets = [0, 16], sizes = [8, 16], strides = [1, 1]} : vector<8x48xf32> to vector<8x16xf32>
    %406 = vector.extract_strided_slice %396 {offsets = [0, 16], sizes = [8, 16], strides = [1, 1]} : vector<8x48xf32> to vector<8x16xf32>
    %407 = arith.addf %405, %406 : vector<8x16xf32>
    %408 = arith.negf %407 : vector<8x16xf32>
    %409 = math.exp %408 : vector<8x16xf32>
    %cst_92 = arith.constant 1.000000e+00 : f32
    %410 = vector.broadcast %cst_92 : f32 to vector<8x16xf32>
    %411 = arith.addf %410, %409 : vector<8x16xf32>
    %412 = arith.divf %410, %411 : vector<8x16xf32>
    %413 = vector.extract_strided_slice %392 {offsets = [0, 32], sizes = [8, 16], strides = [1, 1]} : vector<8x48xf32> to vector<8x16xf32>
    %414 = vector.extract_strided_slice %396 {offsets = [0, 32], sizes = [8, 16], strides = [1, 1]} : vector<8x48xf32> to vector<8x16xf32>
    %415 = arith.mulf %404, %414 : vector<8x16xf32>
    %416 = arith.addf %413, %415 : vector<8x16xf32>
    %417 = math.tanh %416 : vector<8x16xf32>
    %cst_93 = arith.constant 1.000000e+00 : f32
    %418 = vector.broadcast %cst_93 : f32 to vector<8x16xf32>
    %419 = arith.subf %418, %412 : vector<8x16xf32>
    %420 = arith.mulf %419, %417 : vector<8x16xf32>
    %421 = arith.mulf %412, %354 : vector<8x16xf32>
    %422 = arith.addf %420, %421 : vector<8x16xf32>
    %c2_94 = arith.constant 2 : index
    %c0_95 = arith.constant 0 : index
    %c0_96 = arith.constant 0 : index
    %423 = vector.load %arg15[%c2_94, %c0_95, %c0_96] : memref<8x8x16xf32, #tpu.memory_space<vmem>>, vector<1x8x16xf32>
    %424 = vector.shape_cast %423 : vector<1x8x16xf32> to vector<8x16xf32>
    %425 = vector.shape_cast %422 : vector<8x16xf32> to vector<1x8x16xf32>
    tpu.vector_store %arg15[%c2_94, %c0_95, %c0_96], %425 {strides = array<i32>} : memref<8x8x16xf32, #tpu.memory_space<vmem>>, vector<1x8x16xf32>,
    %426 = vector.extract_strided_slice %6 {offsets = [48, 0], sizes = [8, 48], strides = [1, 1]} : vector<64x48xf32> to vector<8x48xf32>
    %427 = arith.truncf %388 : vector<8x16xf32> to vector<8x16xbf16>
    %cst_97 = arith.constant dense<0.000000e+00> : vector<8x48xf32>
    %428 = tpu.matmul %427, %12, %cst_97 {dimension_numbers = #tpu.dot_dimension_numbers<[1], [0], [0], [1], [0, 0, 1, 1], [], []>} : vector<8x16xbf16>, vector<16x48xbf16>, vector<8x48xf32> -> vector<8x48xf32>
    %429 = vector.broadcast %13 : vector<1x48xf32> to vector<8x48xf32>
    %430 = arith.addf %428, %429 : vector<8x48xf32>
    %431 = vector.extract_strided_slice %426 {offsets = [0, 0], sizes = [8, 16], strides = [1, 1]} : vector<8x48xf32> to vector<8x16xf32>
    %432 = vector.extract_strided_slice %430 {offsets = [0, 0], sizes = [8, 16], strides = [1, 1]} : vector<8x48xf32> to vector<8x16xf32>
    %433 = arith.addf %431, %432 : vector<8x16xf32>
    %434 = arith.negf %433 : vector<8x16xf32>
    %435 = math.exp %434 : vector<8x16xf32>
    %cst_98 = arith.constant 1.000000e+00 : f32
    %436 = vector.broadcast %cst_98 : f32 to vector<8x16xf32>
    %437 = arith.addf %436, %435 : vector<8x16xf32>
    %438 = arith.divf %436, %437 : vector<8x16xf32>
    %439 = vector.extract_strided_slice %426 {offsets = [0, 16], sizes = [8, 16], strides = [1, 1]} : vector<8x48xf32> to vector<8x16xf32>
    %440 = vector.extract_strided_slice %430 {offsets = [0, 16], sizes = [8, 16], strides = [1, 1]} : vector<8x48xf32> to vector<8x16xf32>
    %441 = arith.addf %439, %440 : vector<8x16xf32>
    %442 = arith.negf %441 : vector<8x16xf32>
    %443 = math.exp %442 : vector<8x16xf32>
    %cst_99 = arith.constant 1.000000e+00 : f32
    %444 = vector.broadcast %cst_99 : f32 to vector<8x16xf32>
    %445 = arith.addf %444, %443 : vector<8x16xf32>
    %446 = arith.divf %444, %445 : vector<8x16xf32>
    %447 = vector.extract_strided_slice %426 {offsets = [0, 32], sizes = [8, 16], strides = [1, 1]} : vector<8x48xf32> to vector<8x16xf32>
    %448 = vector.extract_strided_slice %430 {offsets = [0, 32], sizes = [8, 16], strides = [1, 1]} : vector<8x48xf32> to vector<8x16xf32>
    %449 = arith.mulf %438, %448 : vector<8x16xf32>
    %450 = arith.addf %447, %449 : vector<8x16xf32>
    %451 = math.tanh %450 : vector<8x16xf32>
    %cst_100 = arith.constant 1.000000e+00 : f32
    %452 = vector.broadcast %cst_100 : f32 to vector<8x16xf32>
    %453 = arith.subf %452, %446 : vector<8x16xf32>
    %454 = arith.mulf %453, %451 : vector<8x16xf32>
    %455 = arith.mulf %446, %388 : vector<8x16xf32>
    %456 = arith.addf %454, %455 : vector<8x16xf32>
    %c6_101 = arith.constant 6 : index
    %c0_102 = arith.constant 0 : index
    %c0_103 = arith.constant 0 : index
    %457 = vector.load %arg14[%c6_101, %c0_102, %c0_103] : memref<8x8x16xf32, #tpu.memory_space<vmem>>, vector<1x8x16xf32>
    %458 = vector.shape_cast %457 : vector<1x8x16xf32> to vector<8x16xf32>
    %459 = vector.shape_cast %456 : vector<8x16xf32> to vector<1x8x16xf32>
    tpu.vector_store %arg14[%c6_101, %c0_102, %c0_103], %459 {strides = array<i32>} : memref<8x8x16xf32, #tpu.memory_space<vmem>>, vector<1x8x16xf32>,
    %460 = vector.extract_strided_slice %11 {offsets = [8, 0], sizes = [8, 48], strides = [1, 1]} : vector<64x48xf32> to vector<8x48xf32>
    %461 = arith.truncf %422 : vector<8x16xf32> to vector<8x16xbf16>
    %cst_104 = arith.constant dense<0.000000e+00> : vector<8x48xf32>
    %462 = tpu.matmul %461, %14, %cst_104 {dimension_numbers = #tpu.dot_dimension_numbers<[1], [0], [0], [1], [0, 0, 1, 1], [], []>} : vector<8x16xbf16>, vector<16x48xbf16>, vector<8x48xf32> -> vector<8x48xf32>
    %463 = vector.broadcast %15 : vector<1x48xf32> to vector<8x48xf32>
    %464 = arith.addf %462, %463 : vector<8x48xf32>
    %465 = vector.extract_strided_slice %460 {offsets = [0, 0], sizes = [8, 16], strides = [1, 1]} : vector<8x48xf32> to vector<8x16xf32>
    %466 = vector.extract_strided_slice %464 {offsets = [0, 0], sizes = [8, 16], strides = [1, 1]} : vector<8x48xf32> to vector<8x16xf32>
    %467 = arith.addf %465, %466 : vector<8x16xf32>
    %468 = arith.negf %467 : vector<8x16xf32>
    %469 = math.exp %468 : vector<8x16xf32>
    %cst_105 = arith.constant 1.000000e+00 : f32
    %470 = vector.broadcast %cst_105 : f32 to vector<8x16xf32>
    %471 = arith.addf %470, %469 : vector<8x16xf32>
    %472 = arith.divf %470, %471 : vector<8x16xf32>
    %473 = vector.extract_strided_slice %460 {offsets = [0, 16], sizes = [8, 16], strides = [1, 1]} : vector<8x48xf32> to vector<8x16xf32>
    %474 = vector.extract_strided_slice %464 {offsets = [0, 16], sizes = [8, 16], strides = [1, 1]} : vector<8x48xf32> to vector<8x16xf32>
    %475 = arith.addf %473, %474 : vector<8x16xf32>
    %476 = arith.negf %475 : vector<8x16xf32>
    %477 = math.exp %476 : vector<8x16xf32>
    %cst_106 = arith.constant 1.000000e+00 : f32
    %478 = vector.broadcast %cst_106 : f32 to vector<8x16xf32>
    %479 = arith.addf %478, %477 : vector<8x16xf32>
    %480 = arith.divf %478, %479 : vector<8x16xf32>
    %481 = vector.extract_strided_slice %460 {offsets = [0, 32], sizes = [8, 16], strides = [1, 1]} : vector<8x48xf32> to vector<8x16xf32>
    %482 = vector.extract_strided_slice %464 {offsets = [0, 32], sizes = [8, 16], strides = [1, 1]} : vector<8x48xf32> to vector<8x16xf32>
    %483 = arith.mulf %472, %482 : vector<8x16xf32>
    %484 = arith.addf %481, %483 : vector<8x16xf32>
    %485 = math.tanh %484 : vector<8x16xf32>
    %cst_107 = arith.constant 1.000000e+00 : f32
    %486 = vector.broadcast %cst_107 : f32 to vector<8x16xf32>
    %487 = arith.subf %486, %480 : vector<8x16xf32>
    %488 = arith.mulf %487, %485 : vector<8x16xf32>
    %489 = arith.mulf %480, %422 : vector<8x16xf32>
    %490 = arith.addf %488, %489 : vector<8x16xf32>
    %c1_108 = arith.constant 1 : index
    %c0_109 = arith.constant 0 : index
    %c0_110 = arith.constant 0 : index
    %491 = vector.load %arg15[%c1_108, %c0_109, %c0_110] : memref<8x8x16xf32, #tpu.memory_space<vmem>>, vector<1x8x16xf32>
    %492 = vector.shape_cast %491 : vector<1x8x16xf32> to vector<8x16xf32>
    %493 = vector.shape_cast %490 : vector<8x16xf32> to vector<1x8x16xf32>
    tpu.vector_store %arg15[%c1_108, %c0_109, %c0_110], %493 {strides = array<i32>} : memref<8x8x16xf32, #tpu.memory_space<vmem>>, vector<1x8x16xf32>,
    %494 = vector.extract_strided_slice %6 {offsets = [56, 0], sizes = [8, 48], strides = [1, 1]} : vector<64x48xf32> to vector<8x48xf32>
    %495 = arith.truncf %456 : vector<8x16xf32> to vector<8x16xbf16>
    %cst_111 = arith.constant dense<0.000000e+00> : vector<8x48xf32>
    %496 = tpu.matmul %495, %12, %cst_111 {dimension_numbers = #tpu.dot_dimension_numbers<[1], [0], [0], [1], [0, 0, 1, 1], [], []>} : vector<8x16xbf16>, vector<16x48xbf16>, vector<8x48xf32> -> vector<8x48xf32>
    %497 = vector.broadcast %13 : vector<1x48xf32> to vector<8x48xf32>
    %498 = arith.addf %496, %497 : vector<8x48xf32>
    %499 = vector.extract_strided_slice %494 {offsets = [0, 0], sizes = [8, 16], strides = [1, 1]} : vector<8x48xf32> to vector<8x16xf32>
    %500 = vector.extract_strided_slice %498 {offsets = [0, 0], sizes = [8, 16], strides = [1, 1]} : vector<8x48xf32> to vector<8x16xf32>
    %501 = arith.addf %499, %500 : vector<8x16xf32>
    %502 = arith.negf %501 : vector<8x16xf32>
    %503 = math.exp %502 : vector<8x16xf32>
    %cst_112 = arith.constant 1.000000e+00 : f32
    %504 = vector.broadcast %cst_112 : f32 to vector<8x16xf32>
    %505 = arith.addf %504, %503 : vector<8x16xf32>
    %506 = arith.divf %504, %505 : vector<8x16xf32>
    %507 = vector.extract_strided_slice %494 {offsets = [0, 16], sizes = [8, 16], strides = [1, 1]} : vector<8x48xf32> to vector<8x16xf32>
    %508 = vector.extract_strided_slice %498 {offsets = [0, 16], sizes = [8, 16], strides = [1, 1]} : vector<8x48xf32> to vector<8x16xf32>
    %509 = arith.addf %507, %508 : vector<8x16xf32>
    %510 = arith.negf %509 : vector<8x16xf32>
    %511 = math.exp %510 : vector<8x16xf32>
    %cst_113 = arith.constant 1.000000e+00 : f32
    %512 = vector.broadcast %cst_113 : f32 to vector<8x16xf32>
    %513 = arith.addf %512, %511 : vector<8x16xf32>
    %514 = arith.divf %512, %513 : vector<8x16xf32>
    %515 = vector.extract_strided_slice %494 {offsets = [0, 32], sizes = [8, 16], strides = [1, 1]} : vector<8x48xf32> to vector<8x16xf32>
    %516 = vector.extract_strided_slice %498 {offsets = [0, 32], sizes = [8, 16], strides = [1, 1]} : vector<8x48xf32> to vector<8x16xf32>
    %517 = arith.mulf %506, %516 : vector<8x16xf32>
    %518 = arith.addf %515, %517 : vector<8x16xf32>
    %519 = math.tanh %518 : vector<8x16xf32>
    %cst_114 = arith.constant 1.000000e+00 : f32
    %520 = vector.broadcast %cst_114 : f32 to vector<8x16xf32>
    %521 = arith.subf %520, %514 : vector<8x16xf32>
    %522 = arith.mulf %521, %519 : vector<8x16xf32>
    %523 = arith.mulf %514, %456 : vector<8x16xf32>
    %524 = arith.addf %522, %523 : vector<8x16xf32>
    %c7_115 = arith.constant 7 : index
    %c0_116 = arith.constant 0 : index
    %c0_117 = arith.constant 0 : index
    %525 = vector.load %arg14[%c7_115, %c0_116, %c0_117] : memref<8x8x16xf32, #tpu.memory_space<vmem>>, vector<1x8x16xf32>
    %526 = vector.shape_cast %525 : vector<1x8x16xf32> to vector<8x16xf32>
    %527 = vector.shape_cast %524 : vector<8x16xf32> to vector<1x8x16xf32>
    tpu.vector_store %arg14[%c7_115, %c0_116, %c0_117], %527 {strides = array<i32>} : memref<8x8x16xf32, #tpu.memory_space<vmem>>, vector<1x8x16xf32>,
    %528 = vector.extract_strided_slice %11 {offsets = [0, 0], sizes = [8, 48], strides = [1, 1]} : vector<64x48xf32> to vector<8x48xf32>
    %529 = arith.truncf %490 : vector<8x16xf32> to vector<8x16xbf16>
    %cst_118 = arith.constant dense<0.000000e+00> : vector<8x48xf32>
    %530 = tpu.matmul %529, %14, %cst_118 {dimension_numbers = #tpu.dot_dimension_numbers<[1], [0], [0], [1], [0, 0, 1, 1], [], []>} : vector<8x16xbf16>, vector<16x48xbf16>, vector<8x48xf32> -> vector<8x48xf32>
    %531 = vector.broadcast %15 : vector<1x48xf32> to vector<8x48xf32>
    %532 = arith.addf %530, %531 : vector<8x48xf32>
    %533 = vector.extract_strided_slice %528 {offsets = [0, 0], sizes = [8, 16], strides = [1, 1]} : vector<8x48xf32> to vector<8x16xf32>
    %534 = vector.extract_strided_slice %532 {offsets = [0, 0], sizes = [8, 16], strides = [1, 1]} : vector<8x48xf32> to vector<8x16xf32>
    %535 = arith.addf %533, %534 : vector<8x16xf32>
    %536 = arith.negf %535 : vector<8x16xf32>
    %537 = math.exp %536 : vector<8x16xf32>
    %cst_119 = arith.constant 1.000000e+00 : f32
    %538 = vector.broadcast %cst_119 : f32 to vector<8x16xf32>
    %539 = arith.addf %538, %537 : vector<8x16xf32>
    %540 = arith.divf %538, %539 : vector<8x16xf32>
    %541 = vector.extract_strided_slice %528 {offsets = [0, 16], sizes = [8, 16], strides = [1, 1]} : vector<8x48xf32> to vector<8x16xf32>
    %542 = vector.extract_strided_slice %532 {offsets = [0, 16], sizes = [8, 16], strides = [1, 1]} : vector<8x48xf32> to vector<8x16xf32>
    %543 = arith.addf %541, %542 : vector<8x16xf32>
    %544 = arith.negf %543 : vector<8x16xf32>
    %545 = math.exp %544 : vector<8x16xf32>
    %cst_120 = arith.constant 1.000000e+00 : f32
    %546 = vector.broadcast %cst_120 : f32 to vector<8x16xf32>
    %547 = arith.addf %546, %545 : vector<8x16xf32>
    %548 = arith.divf %546, %547 : vector<8x16xf32>
    %549 = vector.extract_strided_slice %528 {offsets = [0, 32], sizes = [8, 16], strides = [1, 1]} : vector<8x48xf32> to vector<8x16xf32>
    %550 = vector.extract_strided_slice %532 {offsets = [0, 32], sizes = [8, 16], strides = [1, 1]} : vector<8x48xf32> to vector<8x16xf32>
    %551 = arith.mulf %540, %550 : vector<8x16xf32>
    %552 = arith.addf %549, %551 : vector<8x16xf32>
    %553 = math.tanh %552 : vector<8x16xf32>
    %cst_121 = arith.constant 1.000000e+00 : f32
    %554 = vector.broadcast %cst_121 : f32 to vector<8x16xf32>
    %555 = arith.subf %554, %548 : vector<8x16xf32>
    %556 = arith.mulf %555, %553 : vector<8x16xf32>
    %557 = arith.mulf %548, %490 : vector<8x16xf32>
    %558 = arith.addf %556, %557 : vector<8x16xf32>
    %c0_122 = arith.constant 0 : index
    %c0_123 = arith.constant 0 : index
    %c0_124 = arith.constant 0 : index
    %559 = vector.load %arg15[%c0_122, %c0_123, %c0_124] : memref<8x8x16xf32, #tpu.memory_space<vmem>>, vector<1x8x16xf32>
    %560 = vector.shape_cast %559 : vector<1x8x16xf32> to vector<8x16xf32>
    %561 = vector.shape_cast %558 : vector<8x16xf32> to vector<1x8x16xf32>
    tpu.vector_store %arg15[%c0_122, %c0_123, %c0_124], %561 {strides = array<i32>} : memref<8x8x16xf32, #tpu.memory_space<vmem>>, vector<1x8x16xf32>,
    %c0_125 = arith.constant 0 : index
    %c0_126 = arith.constant 0 : index
    %c0_127 = arith.constant 0 : index
    %562 = vector.load %arg14[%c0_125, %c0_126, %c0_127] : memref<8x8x16xf32, #tpu.memory_space<vmem>>, vector<8x8x16xf32>
    %c0_128 = arith.constant 0 : index
    %c0_129 = arith.constant 0 : index
    %c0_130 = arith.constant 0 : index
    %563 = vector.load %arg11[%c0_128, %c0_129, %c0_130] : memref<1x1x16xf32, #tpu.memory_space<vmem>>, vector<1x1x16xf32>
    %564 = vector.broadcast %563 : vector<1x1x16xf32> to vector<8x8x16xf32>
    %565 = arith.mulf %562, %564 : vector<8x8x16xf32>
    %cst_131 = arith.constant dense<0.000000e+00> : vector<8x8xf32>
    %566 = vector.multi_reduction <add>, %565, %cst_131 [2] : vector<8x8x16xf32> to vector<8x8xf32>
    %567 = vector.shape_cast %566 : vector<8x8xf32> to vector<8x8x1xf32>
    %c0_132 = arith.constant 0 : index
    %c0_133 = arith.constant 0 : index
    %c0_134 = arith.constant 0 : index
    %568 = vector.load %arg15[%c0_132, %c0_133, %c0_134] : memref<8x8x16xf32, #tpu.memory_space<vmem>>, vector<8x8x16xf32>
    %c0_135 = arith.constant 0 : index
    %c0_136 = arith.constant 0 : index
    %c0_137 = arith.constant 0 : index
    %569 = vector.load %arg12[%c0_135, %c0_136, %c0_137] : memref<1x1x16xf32, #tpu.memory_space<vmem>>, vector<1x1x16xf32>
    %570 = vector.broadcast %569 : vector<1x1x16xf32> to vector<8x8x16xf32>
    %571 = arith.mulf %568, %570 : vector<8x8x16xf32>
    %cst_138 = arith.constant dense<0.000000e+00> : vector<8x8xf32>
    %572 = vector.multi_reduction <add>, %571, %cst_138 [2] : vector<8x8x16xf32> to vector<8x8xf32>
    %573 = vector.shape_cast %572 : vector<8x8xf32> to vector<8x8x1xf32>
    %574 = arith.addf %567, %573 : vector<8x8x1xf32>
    %c0_139 = arith.constant 0 : index
    %c0_140 = arith.constant 0 : index
    %c0_141 = arith.constant 0 : index
    %575 = vector.load %arg13[%c0_139, %c0_140, %c0_141] : memref<1x1x1xf32, #tpu.memory_space<vmem>>, vector<1x1x1xf32>
    %576 = vector.broadcast %575 : vector<1x1x1xf32> to vector<8x8x1xf32>
    %577 = arith.addf %574, %576 : vector<8x8x1xf32>
    %c0_142 = arith.constant 0 : index
    %c0_143 = arith.constant 0 : index
    %c0_144 = arith.constant 0 : index
    %578 = vector.load %arg16[%c0_142, %c0_143, %c0_144] : memref<8x8x1xf32, #tpu.memory_space<vmem>>, vector<8x8x1xf32>
    tpu.vector_store %arg16[%c0_142, %c0_143, %c0_144], %577 {strides = array<i32>} : memref<8x8x1xf32, #tpu.memory_space<vmem>>, vector<8x8x1xf32>,
    %579 = tpu.concatenate %524, %558 in 1 : vector<8x16xf32>, vector<8x16xf32> -> vector<8x32xf32>
    %580 = arith.truncf %579 : vector<8x32xf32> to vector<8x32xbf16>
    %c0_145 = arith.constant 0 : index
    %c0_146 = arith.constant 0 : index
    %581 = vector.load %arg9[%c0_145, %c0_146] : memref<32x32xbf16, #tpu.memory_space<vmem>>, vector<32x32xbf16>
    %cst_147 = arith.constant dense<0.000000e+00> : vector<8x32xf32>
    %582 = tpu.matmul %580, %581, %cst_147 {dimension_numbers = #tpu.dot_dimension_numbers<[1], [0], [0], [1], [0, 0, 1, 1], [], []>} : vector<8x32xbf16>, vector<32x32xbf16>, vector<8x32xf32> -> vector<8x32xf32>
    %c0_148 = arith.constant 0 : index
    %c0_149 = arith.constant 0 : index
    %583 = vector.load %arg10[%c0_148, %c0_149] : memref<1x32xf32, #tpu.memory_space<vmem>>, vector<1x32xf32>
    %584 = vector.broadcast %583 : vector<1x32xf32> to vector<8x32xf32>
    %585 = arith.addf %582, %584 : vector<8x32xf32>
    %586 = math.tanh %585 : vector<8x32xf32>
    %c0_150 = arith.constant 0 : index
    %c0_151 = arith.constant 0 : index
    %587 = vector.load %arg17[%c0_150, %c0_151] : memref<8x32xf32, #tpu.memory_space<vmem>>, vector<8x32xf32>
    tpu.vector_store %arg17[%c0_150, %c0_151], %586 {strides = array<i32>} : memref<8x32xf32, #tpu.memory_space<vmem>>, vector<8x32xf32>,
    return
  }
}

module attributes {stable_mosaic.version = 11 : i64} {
  func.func @decoder_kernel(%arg0: memref<6xi32, #tpu.memory_space<smem>>, %arg1: memref<6x8x16xf32, #tpu.memory_space<vmem>>, %arg2: memref<8x32xf32, #tpu.memory_space<vmem>>, %arg3: memref<8x8x16xf32, #tpu.memory_space<vmem>>, %arg4: memref<8x8x16xf32, #tpu.memory_space<vmem>>, %arg5: memref<8x8x1xf32, #tpu.memory_space<vmem>>, %arg6: memref<128x16xbf16, #tpu.memory_space<vmem>>, %arg7: memref<1x32xf32, #tpu.memory_space<vmem>>, %arg8: memref<48x96xbf16, #tpu.memory_space<vmem>>, %arg9: memref<1x96xf32, #tpu.memory_space<vmem>>, %arg10: memref<32x96xbf16, #tpu.memory_space<vmem>>, %arg11: memref<1x96xf32, #tpu.memory_space<vmem>>, %arg12: memref<80x128xbf16, #tpu.memory_space<vmem>>, %arg13: memref<1x128xf32, #tpu.memory_space<vmem>>, %arg14: memref<5x8x128xf32, #tpu.memory_space<vmem>>, %arg15: memref<8x32xf32, #tpu.memory_space<vmem>>, %arg16: memref<8x16xf32, #tpu.memory_space<vmem>>) attributes {dimension_semantics = [], scalar_prefetch = 0 : i64, scratch_operands = 2 : i64, tpu.core_type = #tpu.core_type<tc>} {
    %c0 = arith.constant 0 : index
    %c0_0 = arith.constant 0 : index
    %c0_1 = arith.constant 0 : index
    %0 = vector.load %arg3[%c0, %c0_0, %c0_1] : memref<8x8x16xf32, #tpu.memory_space<vmem>>, vector<8x8x16xf32>
    %c0_2 = arith.constant 0 : index
    %c0_3 = arith.constant 0 : index
    %c0_4 = arith.constant 0 : index
    %1 = vector.load %arg4[%c0_2, %c0_3, %c0_4] : memref<8x8x16xf32, #tpu.memory_space<vmem>>, vector<8x8x16xf32>
    %c0_5 = arith.constant 0 : index
    %c0_6 = arith.constant 0 : index
    %c0_7 = arith.constant 0 : index
    %2 = vector.load %arg5[%c0_5, %c0_6, %c0_7] : memref<8x8x1xf32, #tpu.memory_space<vmem>>, vector<8x8x1xf32>
    %c0_8 = arith.constant 0 : index
    %c0_9 = arith.constant 0 : index
    %3 = vector.load %arg7[%c0_8, %c0_9] : memref<1x32xf32, #tpu.memory_space<vmem>>, vector<1x32xf32>
    %c0_10 = arith.constant 0 : index
    %c0_11 = arith.constant 0 : index
    %4 = vector.load %arg8[%c0_10, %c0_11] : memref<48x96xbf16, #tpu.memory_space<vmem>>, vector<48x96xbf16>
    %c0_12 = arith.constant 0 : index
    %c0_13 = arith.constant 0 : index
    %5 = vector.load %arg9[%c0_12, %c0_13] : memref<1x96xf32, #tpu.memory_space<vmem>>, vector<1x96xf32>
    %c0_14 = arith.constant 0 : index
    %c0_15 = arith.constant 0 : index
    %6 = vector.load %arg10[%c0_14, %c0_15] : memref<32x96xbf16, #tpu.memory_space<vmem>>, vector<32x96xbf16>
    %c0_16 = arith.constant 0 : index
    %c0_17 = arith.constant 0 : index
    %7 = vector.load %arg11[%c0_16, %c0_17] : memref<1x96xf32, #tpu.memory_space<vmem>>, vector<1x96xf32>
    %c0_18 = arith.constant 0 : index
    %c0_19 = arith.constant 0 : index
    %8 = vector.load %arg12[%c0_18, %c0_19] : memref<80x128xbf16, #tpu.memory_space<vmem>>, vector<80x128xbf16>
    %c0_20 = arith.constant 0 : index
    %c0_21 = arith.constant 0 : index
    %9 = vector.load %arg13[%c0_20, %c0_21] : memref<1x128xf32, #tpu.memory_space<vmem>>, vector<1x128xf32>
    %c0_22 = arith.constant 0 : index
    %c0_23 = arith.constant 0 : index
    %10 = vector.load %arg6[%c0_22, %c0_23] : memref<128x16xbf16, #tpu.memory_space<vmem>>, vector<128x16xbf16>
    %11 = tpu.iota {dimensions = array<i32: 1>} : vector<8x128xi32>
    %c32_i32 = arith.constant 32 : i32
    %12 = vector.broadcast %c32_i32 : i32 to vector<8x128xi32>
    %13 = arith.cmpi slt, %11, %12 : vector<8x128xi32>
    %c0_24 = arith.constant 0 : index
    %c0_25 = arith.constant 0 : index
    %14 = vector.load %arg2[%c0_24, %c0_25] : memref<8x32xf32, #tpu.memory_space<vmem>>, vector<8x32xf32>
    %c0_26 = arith.constant 0 : index
    %c0_27 = arith.constant 0 : index
    %15 = vector.load %arg15[%c0_26, %c0_27] : memref<8x32xf32, #tpu.memory_space<vmem>>, vector<8x32xf32>
    tpu.vector_store %arg15[%c0_26, %c0_27], %14 {strides = array<i32>} : memref<8x32xf32, #tpu.memory_space<vmem>>, vector<8x32xf32>,
    %c0_28 = arith.constant 0 : index
    %c0_29 = arith.constant 0 : index
    %c0_30 = arith.constant 0 : index
    %16 = vector.load %arg1[%c0_28, %c0_29, %c0_30] : memref<6x8x16xf32, #tpu.memory_space<vmem>>, vector<1x8x16xf32>
    %17 = vector.shape_cast %16 : vector<1x8x16xf32> to vector<8x16xf32>
    %c0_31 = arith.constant 0 : index
    %c0_32 = arith.constant 0 : index
    %18 = vector.load %arg16[%c0_31, %c0_32] : memref<8x16xf32, #tpu.memory_space<vmem>>, vector<8x16xf32>
    tpu.vector_store %arg16[%c0_31, %c0_32], %17 {strides = array<i32>} : memref<8x16xf32, #tpu.memory_space<vmem>>, vector<8x16xf32>,
    %c0_i32 = arith.constant 0 : i32
    %c0_33 = arith.constant 0 : index
    %c0_34 = arith.constant 0 : index
    %19 = vector.load %arg15[%c0_33, %c0_34] : memref<8x32xf32, #tpu.memory_space<vmem>>, vector<8x32xf32>
    %c0_35 = arith.constant 0 : index
    %c0_36 = arith.constant 0 : index
    %20 = vector.load %arg16[%c0_35, %c0_36] : memref<8x16xf32, #tpu.memory_space<vmem>>, vector<8x16xf32>
    %21 = vector.broadcast %3 : vector<1x32xf32> to vector<8x32xf32>
    %22 = arith.mulf %19, %21 : vector<8x32xf32>
    %cst = arith.constant dense<0.000000e+00> : vector<8xf32>
    %23 = vector.multi_reduction <add>, %22, %cst [1] : vector<8x32xf32> to vector<8xf32>
    %24 = vector.shape_cast %23 : vector<8xf32> to vector<8x1xf32>
    %25 = vector.shape_cast %24 : vector<8x1xf32> to vector<1x8x1xf32>
    %26 = vector.broadcast %25 : vector<1x8x1xf32> to vector<8x8x1xf32>
    %27 = arith.addf %2, %26 : vector<8x8x1xf32>
    %cst_37 = arith.constant dense<0xFF800000> : vector<8x1xf32>
    %28 = vector.multi_reduction <maximumf>, %27, %cst_37 [0] : vector<8x8x1xf32> to vector<8x1xf32>
    %29 = vector.shape_cast %28 : vector<8x1xf32> to vector<1x8x1xf32>
    %30 = vector.broadcast %29 : vector<1x8x1xf32> to vector<8x8x1xf32>
    %31 = arith.subf %27, %30 : vector<8x8x1xf32>
    %32 = math.exp %31 : vector<8x8x1xf32>
    %cst_38 = arith.constant dense<0.000000e+00> : vector<8x1xf32>
    %33 = vector.multi_reduction <add>, %32, %cst_38 [0] : vector<8x8x1xf32> to vector<8x1xf32>
    %34 = vector.shape_cast %33 : vector<8x1xf32> to vector<1x8x1xf32>
    %35 = tpu.reciprocal %34 {approx = true} : vector<1x8x1xf32> -> vector<1x8x1xf32>
    %36 = vector.broadcast %35 : vector<1x8x1xf32> to vector<8x8x1xf32>
    %37 = arith.mulf %32, %36 : vector<8x8x1xf32>
    %38 = vector.broadcast %37 : vector<8x8x1xf32> to vector<8x8x16xf32>
    %39 = arith.mulf %0, %38 : vector<8x8x16xf32>
    %cst_39 = arith.constant dense<0.000000e+00> : vector<8x16xf32>
    %40 = vector.multi_reduction <add>, %39, %cst_39 [0] : vector<8x8x16xf32> to vector<8x16xf32>
    %41 = vector.broadcast %37 : vector<8x8x1xf32> to vector<8x8x16xf32>
    %42 = arith.mulf %1, %41 : vector<8x8x16xf32>
    %cst_40 = arith.constant dense<0.000000e+00> : vector<8x16xf32>
    %43 = vector.multi_reduction <add>, %42, %cst_40 [0] : vector<8x8x16xf32> to vector<8x16xf32>
    %44 = tpu.concatenate %20, %40, %43 in 1 : vector<8x16xf32>, vector<8x16xf32>, vector<8x16xf32> -> vector<8x48xf32>
    %45 = arith.truncf %44 : vector<8x48xf32> to vector<8x48xbf16>
    %cst_41 = arith.constant dense<0.000000e+00> : vector<8x96xf32>
    %46 = tpu.matmul %45, %4, %cst_41 {dimension_numbers = #tpu.dot_dimension_numbers<[1], [0], [0], [1], [0, 0, 1, 1], [], []>} : vector<8x48xbf16>, vector<48x96xbf16>, vector<8x96xf32> -> vector<8x96xf32>
    %47 = vector.broadcast %5 : vector<1x96xf32> to vector<8x96xf32>
    %48 = arith.addf %46, %47 : vector<8x96xf32>
    %49 = arith.truncf %19 : vector<8x32xf32> to vector<8x32xbf16>
    %cst_42 = arith.constant dense<0.000000e+00> : vector<8x96xf32>
    %50 = tpu.matmul %49, %6, %cst_42 {dimension_numbers = #tpu.dot_dimension_numbers<[1], [0], [0], [1], [0, 0, 1, 1], [], []>} : vector<8x32xbf16>, vector<32x96xbf16>, vector<8x96xf32> -> vector<8x96xf32>
    %51 = vector.broadcast %7 : vector<1x96xf32> to vector<8x96xf32>
    %52 = arith.addf %50, %51 : vector<8x96xf32>
    %53 = vector.extract_strided_slice %48 {offsets = [0, 0], sizes = [8, 32], strides = [1, 1]} : vector<8x96xf32> to vector<8x32xf32>
    %54 = vector.extract_strided_slice %52 {offsets = [0, 0], sizes = [8, 32], strides = [1, 1]} : vector<8x96xf32> to vector<8x32xf32>
    %55 = arith.addf %53, %54 : vector<8x32xf32>
    %56 = arith.negf %55 : vector<8x32xf32>
    %57 = math.exp %56 : vector<8x32xf32>
    %cst_43 = arith.constant 1.000000e+00 : f32
    %58 = vector.broadcast %cst_43 : f32 to vector<8x32xf32>
    %59 = arith.addf %58, %57 : vector<8x32xf32>
    %60 = arith.divf %58, %59 : vector<8x32xf32>
    %61 = vector.extract_strided_slice %48 {offsets = [0, 32], sizes = [8, 32], strides = [1, 1]} : vector<8x96xf32> to vector<8x32xf32>
    %62 = vector.extract_strided_slice %52 {offsets = [0, 32], sizes = [8, 32], strides = [1, 1]} : vector<8x96xf32> to vector<8x32xf32>
    %63 = arith.addf %61, %62 : vector<8x32xf32>
    %64 = arith.negf %63 : vector<8x32xf32>
    %65 = math.exp %64 : vector<8x32xf32>
    %cst_44 = arith.constant 1.000000e+00 : f32
    %66 = vector.broadcast %cst_44 : f32 to vector<8x32xf32>
    %67 = arith.addf %66, %65 : vector<8x32xf32>
    %68 = arith.divf %66, %67 : vector<8x32xf32>
    %69 = vector.extract_strided_slice %48 {offsets = [0, 64], sizes = [8, 32], strides = [1, 1]} : vector<8x96xf32> to vector<8x32xf32>
    %70 = vector.extract_strided_slice %52 {offsets = [0, 64], sizes = [8, 32], strides = [1, 1]} : vector<8x96xf32> to vector<8x32xf32>
    %71 = arith.mulf %60, %70 : vector<8x32xf32>
    %72 = arith.addf %69, %71 : vector<8x32xf32>
    %73 = math.tanh %72 : vector<8x32xf32>
    %cst_45 = arith.constant 1.000000e+00 : f32
    %74 = vector.broadcast %cst_45 : f32 to vector<8x32xf32>
    %75 = arith.subf %74, %68 : vector<8x32xf32>
    %76 = arith.mulf %75, %73 : vector<8x32xf32>
    %77 = arith.mulf %68, %19 : vector<8x32xf32>
    %78 = arith.addf %76, %77 : vector<8x32xf32>
    %79 = tpu.concatenate %20, %40, %43, %78 in 1 : vector<8x16xf32>, vector<8x16xf32>, vector<8x16xf32>, vector<8x32xf32> -> vector<8x80xf32>
    %80 = arith.truncf %79 : vector<8x80xf32> to vector<8x80xbf16>
    %cst_46 = arith.constant dense<0.000000e+00> : vector<8x128xf32>
    %81 = tpu.matmul %80, %8, %cst_46 {dimension_numbers = #tpu.dot_dimension_numbers<[1], [0], [0], [1], [0, 0, 1, 1], [], []>} : vector<8x80xbf16>, vector<80x128xbf16>, vector<8x128xf32> -> vector<8x128xf32>
    %82 = vector.broadcast %9 : vector<1x128xf32> to vector<8x128xf32>
    %83 = arith.addf %81, %82 : vector<8x128xf32>
    %84 = arith.index_cast %c0_i32 : i32 to index
    %c0_47 = arith.constant 0 : index
    %c0_48 = arith.constant 0 : index
    %85 = vector.load %arg14[%84, %c0_47, %c0_48] : memref<5x8x128xf32, #tpu.memory_space<vmem>>, vector<1x8x128xf32>
    %86 = vector.shape_cast %85 : vector<1x8x128xf32> to vector<8x128xf32>
    %87 = vector.shape_cast %83 : vector<8x128xf32> to vector<1x8x128xf32>
    tpu.vector_store %arg14[%84, %c0_47, %c0_48], %87 {strides = array<i32>} : memref<5x8x128xf32, #tpu.memory_space<vmem>>, vector<1x8x128xf32>,
    %c0_49 = arith.constant 0 : index
    %c0_50 = arith.constant 0 : index
    %88 = vector.load %arg15[%c0_49, %c0_50] : memref<8x32xf32, #tpu.memory_space<vmem>>, vector<8x32xf32>
    tpu.vector_store %arg15[%c0_49, %c0_50], %78 {strides = array<i32>} : memref<8x32xf32, #tpu.memory_space<vmem>>, vector<8x32xf32>,
    %c1_i32 = arith.constant 1 : i32
    %89 = arith.addi %c0_i32, %c1_i32 : i32
    %90 = arith.index_cast %89 : i32 to index
    %c0_51 = arith.constant 0 : index
    %c0_52 = arith.constant 0 : index
    %91 = vector.load %arg1[%90, %c0_51, %c0_52] : memref<6x8x16xf32, #tpu.memory_space<vmem>>, vector<1x8x16xf32>
    %92 = vector.shape_cast %91 : vector<1x8x16xf32> to vector<8x16xf32>
    %c0_53 = arith.constant 0 : index
    %c0_54 = arith.constant 0 : index
    %93 = vector.load %arg16[%c0_53, %c0_54] : memref<8x16xf32, #tpu.memory_space<vmem>>, vector<8x16xf32>
    tpu.vector_store %arg16[%c0_53, %c0_54], %92 {strides = array<i32>} : memref<8x16xf32, #tpu.memory_space<vmem>>, vector<8x16xf32>,
    %c1_i32_55 = arith.constant 1 : i32
    %94 = arith.addi %c0_i32, %c1_i32_55 : i32
    %95 = arith.index_cast %94 : i32 to index
    %96 = memref.load %arg0[%95] : memref<6xi32, #tpu.memory_space<smem>>
    %c0_i32_56 = arith.constant 0 : i32
    %97 = arith.cmpi eq, %96, %c0_i32_56 : i32
    %98 = arith.extui %97 : i1 to i32
    %c0_i32_57 = arith.constant 0 : i32
    %99 = arith.cmpi ne, %98, %c0_i32_57 : i32
    scf.if %99 {
      %cst_167 = arith.constant -3.000000e+38 : f32
      %424 = vector.broadcast %cst_167 : f32 to vector<8x128xf32>
      %425 = arith.select %13, %83, %424 : vector<8x128xi1>, vector<8x128xf32>
      %cst_168 = arith.constant dense<0xFF800000> : vector<8xf32>
      %426 = vector.multi_reduction <maximumf>, %425, %cst_168 [1] : vector<8x128xf32> to vector<8xf32>
      %427 = vector.shape_cast %426 : vector<8xf32> to vector<8x1xf32>
      %428 = vector.broadcast %427 : vector<8x1xf32> to vector<8x128xf32>
      %429 = arith.cmpf oeq, %425, %428 : vector<8x128xf32>
      %c128_i32 = arith.constant 128 : i32
      %430 = vector.broadcast %c128_i32 : i32 to vector<8x128xi32>
      %431 = arith.select %429, %11, %430 : vector<8x128xi1>, vector<8x128xi32>
      %cst_169 = arith.constant dense<2147483647> : vector<8xi32>
      %432 = vector.multi_reduction <minsi>, %431, %cst_169 [1] : vector<8x128xi32> to vector<8xi32>
      %433 = vector.shape_cast %432 : vector<8xi32> to vector<8x1xi32>
      %434 = vector.broadcast %433 : vector<8x1xi32> to vector<8x128xi32>
      %435 = arith.cmpi eq, %11, %434 : vector<8x128xi32>
      %436 = arith.extui %435 : vector<8x128xi1> to vector<8x128xi32>
      %437 = arith.sitofp %436 : vector<8x128xi32> to vector<8x128xf32>
      %438 = arith.truncf %437 : vector<8x128xf32> to vector<8x128xbf16>
      %cst_170 = arith.constant dense<0.000000e+00> : vector<8x16xf32>
      %439 = tpu.matmul %438, %10, %cst_170 {dimension_numbers = #tpu.dot_dimension_numbers<[1], [0], [0], [1], [0, 0, 1, 1], [], []>} : vector<8x128xbf16>, vector<128x16xbf16>, vector<8x16xf32> -> vector<8x16xf32>
      %c0_171 = arith.constant 0 : index
      %c0_172 = arith.constant 0 : index
      %440 = vector.load %arg16[%c0_171, %c0_172] : memref<8x16xf32, #tpu.memory_space<vmem>>, vector<8x16xf32>
      tpu.vector_store %arg16[%c0_171, %c0_172], %439 {strides = array<i32>} : memref<8x16xf32, #tpu.memory_space<vmem>>, vector<8x16xf32>,
    } else {
    }
    %c1_i32_58 = arith.constant 1 : i32
    %c0_59 = arith.constant 0 : index
    %c0_60 = arith.constant 0 : index
    %100 = vector.load %arg15[%c0_59, %c0_60] : memref<8x32xf32, #tpu.memory_space<vmem>>, vector<8x32xf32>
    %c0_61 = arith.constant 0 : index
    %c0_62 = arith.constant 0 : index
    %101 = vector.load %arg16[%c0_61, %c0_62] : memref<8x16xf32, #tpu.memory_space<vmem>>, vector<8x16xf32>
    %102 = vector.broadcast %3 : vector<1x32xf32> to vector<8x32xf32>
    %103 = arith.mulf %100, %102 : vector<8x32xf32>
    %cst_63 = arith.constant dense<0.000000e+00> : vector<8xf32>
    %104 = vector.multi_reduction <add>, %103, %cst_63 [1] : vector<8x32xf32> to vector<8xf32>
    %105 = vector.shape_cast %104 : vector<8xf32> to vector<8x1xf32>
    %106 = vector.shape_cast %105 : vector<8x1xf32> to vector<1x8x1xf32>
    %107 = vector.broadcast %106 : vector<1x8x1xf32> to vector<8x8x1xf32>
    %108 = arith.addf %2, %107 : vector<8x8x1xf32>
    %cst_64 = arith.constant dense<0xFF800000> : vector<8x1xf32>
    %109 = vector.multi_reduction <maximumf>, %108, %cst_64 [0] : vector<8x8x1xf32> to vector<8x1xf32>
    %110 = vector.shape_cast %109 : vector<8x1xf32> to vector<1x8x1xf32>
    %111 = vector.broadcast %110 : vector<1x8x1xf32> to vector<8x8x1xf32>
    %112 = arith.subf %108, %111 : vector<8x8x1xf32>
    %113 = math.exp %112 : vector<8x8x1xf32>
    %cst_65 = arith.constant dense<0.000000e+00> : vector<8x1xf32>
    %114 = vector.multi_reduction <add>, %113, %cst_65 [0] : vector<8x8x1xf32> to vector<8x1xf32>
    %115 = vector.shape_cast %114 : vector<8x1xf32> to vector<1x8x1xf32>
    %116 = tpu.reciprocal %115 {approx = true} : vector<1x8x1xf32> -> vector<1x8x1xf32>
    %117 = vector.broadcast %116 : vector<1x8x1xf32> to vector<8x8x1xf32>
    %118 = arith.mulf %113, %117 : vector<8x8x1xf32>
    %119 = vector.broadcast %118 : vector<8x8x1xf32> to vector<8x8x16xf32>
    %120 = arith.mulf %0, %119 : vector<8x8x16xf32>
    %cst_66 = arith.constant dense<0.000000e+00> : vector<8x16xf32>
    %121 = vector.multi_reduction <add>, %120, %cst_66 [0] : vector<8x8x16xf32> to vector<8x16xf32>
    %122 = vector.broadcast %118 : vector<8x8x1xf32> to vector<8x8x16xf32>
    %123 = arith.mulf %1, %122 : vector<8x8x16xf32>
    %cst_67 = arith.constant dense<0.000000e+00> : vector<8x16xf32>
    %124 = vector.multi_reduction <add>, %123, %cst_67 [0] : vector<8x8x16xf32> to vector<8x16xf32>
    %125 = tpu.concatenate %101, %121, %124 in 1 : vector<8x16xf32>, vector<8x16xf32>, vector<8x16xf32> -> vector<8x48xf32>
    %126 = arith.truncf %125 : vector<8x48xf32> to vector<8x48xbf16>
    %cst_68 = arith.constant dense<0.000000e+00> : vector<8x96xf32>
    %127 = tpu.matmul %126, %4, %cst_68 {dimension_numbers = #tpu.dot_dimension_numbers<[1], [0], [0], [1], [0, 0, 1, 1], [], []>} : vector<8x48xbf16>, vector<48x96xbf16>, vector<8x96xf32> -> vector<8x96xf32>
    %128 = vector.broadcast %5 : vector<1x96xf32> to vector<8x96xf32>
    %129 = arith.addf %127, %128 : vector<8x96xf32>
    %130 = arith.truncf %100 : vector<8x32xf32> to vector<8x32xbf16>
    %cst_69 = arith.constant dense<0.000000e+00> : vector<8x96xf32>
    %131 = tpu.matmul %130, %6, %cst_69 {dimension_numbers = #tpu.dot_dimension_numbers<[1], [0], [0], [1], [0, 0, 1, 1], [], []>} : vector<8x32xbf16>, vector<32x96xbf16>, vector<8x96xf32> -> vector<8x96xf32>
    %132 = vector.broadcast %7 : vector<1x96xf32> to vector<8x96xf32>
    %133 = arith.addf %131, %132 : vector<8x96xf32>
    %134 = vector.extract_strided_slice %129 {offsets = [0, 0], sizes = [8, 32], strides = [1, 1]} : vector<8x96xf32> to vector<8x32xf32>
    %135 = vector.extract_strided_slice %133 {offsets = [0, 0], sizes = [8, 32], strides = [1, 1]} : vector<8x96xf32> to vector<8x32xf32>
    %136 = arith.addf %134, %135 : vector<8x32xf32>
    %137 = arith.negf %136 : vector<8x32xf32>
    %138 = math.exp %137 : vector<8x32xf32>
    %cst_70 = arith.constant 1.000000e+00 : f32
    %139 = vector.broadcast %cst_70 : f32 to vector<8x32xf32>
    %140 = arith.addf %139, %138 : vector<8x32xf32>
    %141 = arith.divf %139, %140 : vector<8x32xf32>
    %142 = vector.extract_strided_slice %129 {offsets = [0, 32], sizes = [8, 32], strides = [1, 1]} : vector<8x96xf32> to vector<8x32xf32>
    %143 = vector.extract_strided_slice %133 {offsets = [0, 32], sizes = [8, 32], strides = [1, 1]} : vector<8x96xf32> to vector<8x32xf32>
    %144 = arith.addf %142, %143 : vector<8x32xf32>
    %145 = arith.negf %144 : vector<8x32xf32>
    %146 = math.exp %145 : vector<8x32xf32>
    %cst_71 = arith.constant 1.000000e+00 : f32
    %147 = vector.broadcast %cst_71 : f32 to vector<8x32xf32>
    %148 = arith.addf %147, %146 : vector<8x32xf32>
    %149 = arith.divf %147, %148 : vector<8x32xf32>
    %150 = vector.extract_strided_slice %129 {offsets = [0, 64], sizes = [8, 32], strides = [1, 1]} : vector<8x96xf32> to vector<8x32xf32>
    %151 = vector.extract_strided_slice %133 {offsets = [0, 64], sizes = [8, 32], strides = [1, 1]} : vector<8x96xf32> to vector<8x32xf32>
    %152 = arith.mulf %141, %151 : vector<8x32xf32>
    %153 = arith.addf %150, %152 : vector<8x32xf32>
    %154 = math.tanh %153 : vector<8x32xf32>
    %cst_72 = arith.constant 1.000000e+00 : f32
    %155 = vector.broadcast %cst_72 : f32 to vector<8x32xf32>
    %156 = arith.subf %155, %149 : vector<8x32xf32>
    %157 = arith.mulf %156, %154 : vector<8x32xf32>
    %158 = arith.mulf %149, %100 : vector<8x32xf32>
    %159 = arith.addf %157, %158 : vector<8x32xf32>
    %160 = tpu.concatenate %101, %121, %124, %159 in 1 : vector<8x16xf32>, vector<8x16xf32>, vector<8x16xf32>, vector<8x32xf32> -> vector<8x80xf32>
    %161 = arith.truncf %160 : vector<8x80xf32> to vector<8x80xbf16>
    %cst_73 = arith.constant dense<0.000000e+00> : vector<8x128xf32>
    %162 = tpu.matmul %161, %8, %cst_73 {dimension_numbers = #tpu.dot_dimension_numbers<[1], [0], [0], [1], [0, 0, 1, 1], [], []>} : vector<8x80xbf16>, vector<80x128xbf16>, vector<8x128xf32> -> vector<8x128xf32>
    %163 = vector.broadcast %9 : vector<1x128xf32> to vector<8x128xf32>
    %164 = arith.addf %162, %163 : vector<8x128xf32>
    %165 = arith.index_cast %c1_i32_58 : i32 to index
    %c0_74 = arith.constant 0 : index
    %c0_75 = arith.constant 0 : index
    %166 = vector.load %arg14[%165, %c0_74, %c0_75] : memref<5x8x128xf32, #tpu.memory_space<vmem>>, vector<1x8x128xf32>
    %167 = vector.shape_cast %166 : vector<1x8x128xf32> to vector<8x128xf32>
    %168 = vector.shape_cast %164 : vector<8x128xf32> to vector<1x8x128xf32>
    tpu.vector_store %arg14[%165, %c0_74, %c0_75], %168 {strides = array<i32>} : memref<5x8x128xf32, #tpu.memory_space<vmem>>, vector<1x8x128xf32>,
    %c0_76 = arith.constant 0 : index
    %c0_77 = arith.constant 0 : index
    %169 = vector.load %arg15[%c0_76, %c0_77] : memref<8x32xf32, #tpu.memory_space<vmem>>, vector<8x32xf32>
    tpu.vector_store %arg15[%c0_76, %c0_77], %159 {strides = array<i32>} : memref<8x32xf32, #tpu.memory_space<vmem>>, vector<8x32xf32>,
    %c1_i32_78 = arith.constant 1 : i32
    %170 = arith.addi %c1_i32_58, %c1_i32_78 : i32
    %171 = arith.index_cast %170 : i32 to index
    %c0_79 = arith.constant 0 : index
    %c0_80 = arith.constant 0 : index
    %172 = vector.load %arg1[%171, %c0_79, %c0_80] : memref<6x8x16xf32, #tpu.memory_space<vmem>>, vector<1x8x16xf32>
    %173 = vector.shape_cast %172 : vector<1x8x16xf32> to vector<8x16xf32>
    %c0_81 = arith.constant 0 : index
    %c0_82 = arith.constant 0 : index
    %174 = vector.load %arg16[%c0_81, %c0_82] : memref<8x16xf32, #tpu.memory_space<vmem>>, vector<8x16xf32>
    tpu.vector_store %arg16[%c0_81, %c0_82], %173 {strides = array<i32>} : memref<8x16xf32, #tpu.memory_space<vmem>>, vector<8x16xf32>,
    %c1_i32_83 = arith.constant 1 : i32
    %175 = arith.addi %c1_i32_58, %c1_i32_83 : i32
    %176 = arith.index_cast %175 : i32 to index
    %177 = memref.load %arg0[%176] : memref<6xi32, #tpu.memory_space<smem>>
    %c0_i32_84 = arith.constant 0 : i32
    %178 = arith.cmpi eq, %177, %c0_i32_84 : i32
    %179 = arith.extui %178 : i1 to i32
    %c0_i32_85 = arith.constant 0 : i32
    %180 = arith.cmpi ne, %179, %c0_i32_85 : i32
    scf.if %180 {
      %cst_167 = arith.constant -3.000000e+38 : f32
      %424 = vector.broadcast %cst_167 : f32 to vector<8x128xf32>
      %425 = arith.select %13, %164, %424 : vector<8x128xi1>, vector<8x128xf32>
      %cst_168 = arith.constant dense<0xFF800000> : vector<8xf32>
      %426 = vector.multi_reduction <maximumf>, %425, %cst_168 [1] : vector<8x128xf32> to vector<8xf32>
      %427 = vector.shape_cast %426 : vector<8xf32> to vector<8x1xf32>
      %428 = vector.broadcast %427 : vector<8x1xf32> to vector<8x128xf32>
      %429 = arith.cmpf oeq, %425, %428 : vector<8x128xf32>
      %c128_i32 = arith.constant 128 : i32
      %430 = vector.broadcast %c128_i32 : i32 to vector<8x128xi32>
      %431 = arith.select %429, %11, %430 : vector<8x128xi1>, vector<8x128xi32>
      %cst_169 = arith.constant dense<2147483647> : vector<8xi32>
      %432 = vector.multi_reduction <minsi>, %431, %cst_169 [1] : vector<8x128xi32> to vector<8xi32>
      %433 = vector.shape_cast %432 : vector<8xi32> to vector<8x1xi32>
      %434 = vector.broadcast %433 : vector<8x1xi32> to vector<8x128xi32>
      %435 = arith.cmpi eq, %11, %434 : vector<8x128xi32>
      %436 = arith.extui %435 : vector<8x128xi1> to vector<8x128xi32>
      %437 = arith.sitofp %436 : vector<8x128xi32> to vector<8x128xf32>
      %438 = arith.truncf %437 : vector<8x128xf32> to vector<8x128xbf16>
      %cst_170 = arith.constant dense<0.000000e+00> : vector<8x16xf32>
      %439 = tpu.matmul %438, %10, %cst_170 {dimension_numbers = #tpu.dot_dimension_numbers<[1], [0], [0], [1], [0, 0, 1, 1], [], []>} : vector<8x128xbf16>, vector<128x16xbf16>, vector<8x16xf32> -> vector<8x16xf32>
      %c0_171 = arith.constant 0 : index
      %c0_172 = arith.constant 0 : index
      %440 = vector.load %arg16[%c0_171, %c0_172] : memref<8x16xf32, #tpu.memory_space<vmem>>, vector<8x16xf32>
      tpu.vector_store %arg16[%c0_171, %c0_172], %439 {strides = array<i32>} : memref<8x16xf32, #tpu.memory_space<vmem>>, vector<8x16xf32>,
    } else {
    }
    %c2_i32 = arith.constant 2 : i32
    %c0_86 = arith.constant 0 : index
    %c0_87 = arith.constant 0 : index
    %181 = vector.load %arg15[%c0_86, %c0_87] : memref<8x32xf32, #tpu.memory_space<vmem>>, vector<8x32xf32>
    %c0_88 = arith.constant 0 : index
    %c0_89 = arith.constant 0 : index
    %182 = vector.load %arg16[%c0_88, %c0_89] : memref<8x16xf32, #tpu.memory_space<vmem>>, vector<8x16xf32>
    %183 = vector.broadcast %3 : vector<1x32xf32> to vector<8x32xf32>
    %184 = arith.mulf %181, %183 : vector<8x32xf32>
    %cst_90 = arith.constant dense<0.000000e+00> : vector<8xf32>
    %185 = vector.multi_reduction <add>, %184, %cst_90 [1] : vector<8x32xf32> to vector<8xf32>
    %186 = vector.shape_cast %185 : vector<8xf32> to vector<8x1xf32>
    %187 = vector.shape_cast %186 : vector<8x1xf32> to vector<1x8x1xf32>
    %188 = vector.broadcast %187 : vector<1x8x1xf32> to vector<8x8x1xf32>
    %189 = arith.addf %2, %188 : vector<8x8x1xf32>
    %cst_91 = arith.constant dense<0xFF800000> : vector<8x1xf32>
    %190 = vector.multi_reduction <maximumf>, %189, %cst_91 [0] : vector<8x8x1xf32> to vector<8x1xf32>
    %191 = vector.shape_cast %190 : vector<8x1xf32> to vector<1x8x1xf32>
    %192 = vector.broadcast %191 : vector<1x8x1xf32> to vector<8x8x1xf32>
    %193 = arith.subf %189, %192 : vector<8x8x1xf32>
    %194 = math.exp %193 : vector<8x8x1xf32>
    %cst_92 = arith.constant dense<0.000000e+00> : vector<8x1xf32>
    %195 = vector.multi_reduction <add>, %194, %cst_92 [0] : vector<8x8x1xf32> to vector<8x1xf32>
    %196 = vector.shape_cast %195 : vector<8x1xf32> to vector<1x8x1xf32>
    %197 = tpu.reciprocal %196 {approx = true} : vector<1x8x1xf32> -> vector<1x8x1xf32>
    %198 = vector.broadcast %197 : vector<1x8x1xf32> to vector<8x8x1xf32>
    %199 = arith.mulf %194, %198 : vector<8x8x1xf32>
    %200 = vector.broadcast %199 : vector<8x8x1xf32> to vector<8x8x16xf32>
    %201 = arith.mulf %0, %200 : vector<8x8x16xf32>
    %cst_93 = arith.constant dense<0.000000e+00> : vector<8x16xf32>
    %202 = vector.multi_reduction <add>, %201, %cst_93 [0] : vector<8x8x16xf32> to vector<8x16xf32>
    %203 = vector.broadcast %199 : vector<8x8x1xf32> to vector<8x8x16xf32>
    %204 = arith.mulf %1, %203 : vector<8x8x16xf32>
    %cst_94 = arith.constant dense<0.000000e+00> : vector<8x16xf32>
    %205 = vector.multi_reduction <add>, %204, %cst_94 [0] : vector<8x8x16xf32> to vector<8x16xf32>
    %206 = tpu.concatenate %182, %202, %205 in 1 : vector<8x16xf32>, vector<8x16xf32>, vector<8x16xf32> -> vector<8x48xf32>
    %207 = arith.truncf %206 : vector<8x48xf32> to vector<8x48xbf16>
    %cst_95 = arith.constant dense<0.000000e+00> : vector<8x96xf32>
    %208 = tpu.matmul %207, %4, %cst_95 {dimension_numbers = #tpu.dot_dimension_numbers<[1], [0], [0], [1], [0, 0, 1, 1], [], []>} : vector<8x48xbf16>, vector<48x96xbf16>, vector<8x96xf32> -> vector<8x96xf32>
    %209 = vector.broadcast %5 : vector<1x96xf32> to vector<8x96xf32>
    %210 = arith.addf %208, %209 : vector<8x96xf32>
    %211 = arith.truncf %181 : vector<8x32xf32> to vector<8x32xbf16>
    %cst_96 = arith.constant dense<0.000000e+00> : vector<8x96xf32>
    %212 = tpu.matmul %211, %6, %cst_96 {dimension_numbers = #tpu.dot_dimension_numbers<[1], [0], [0], [1], [0, 0, 1, 1], [], []>} : vector<8x32xbf16>, vector<32x96xbf16>, vector<8x96xf32> -> vector<8x96xf32>
    %213 = vector.broadcast %7 : vector<1x96xf32> to vector<8x96xf32>
    %214 = arith.addf %212, %213 : vector<8x96xf32>
    %215 = vector.extract_strided_slice %210 {offsets = [0, 0], sizes = [8, 32], strides = [1, 1]} : vector<8x96xf32> to vector<8x32xf32>
    %216 = vector.extract_strided_slice %214 {offsets = [0, 0], sizes = [8, 32], strides = [1, 1]} : vector<8x96xf32> to vector<8x32xf32>
    %217 = arith.addf %215, %216 : vector<8x32xf32>
    %218 = arith.negf %217 : vector<8x32xf32>
    %219 = math.exp %218 : vector<8x32xf32>
    %cst_97 = arith.constant 1.000000e+00 : f32
    %220 = vector.broadcast %cst_97 : f32 to vector<8x32xf32>
    %221 = arith.addf %220, %219 : vector<8x32xf32>
    %222 = arith.divf %220, %221 : vector<8x32xf32>
    %223 = vector.extract_strided_slice %210 {offsets = [0, 32], sizes = [8, 32], strides = [1, 1]} : vector<8x96xf32> to vector<8x32xf32>
    %224 = vector.extract_strided_slice %214 {offsets = [0, 32], sizes = [8, 32], strides = [1, 1]} : vector<8x96xf32> to vector<8x32xf32>
    %225 = arith.addf %223, %224 : vector<8x32xf32>
    %226 = arith.negf %225 : vector<8x32xf32>
    %227 = math.exp %226 : vector<8x32xf32>
    %cst_98 = arith.constant 1.000000e+00 : f32
    %228 = vector.broadcast %cst_98 : f32 to vector<8x32xf32>
    %229 = arith.addf %228, %227 : vector<8x32xf32>
    %230 = arith.divf %228, %229 : vector<8x32xf32>
    %231 = vector.extract_strided_slice %210 {offsets = [0, 64], sizes = [8, 32], strides = [1, 1]} : vector<8x96xf32> to vector<8x32xf32>
    %232 = vector.extract_strided_slice %214 {offsets = [0, 64], sizes = [8, 32], strides = [1, 1]} : vector<8x96xf32> to vector<8x32xf32>
    %233 = arith.mulf %222, %232 : vector<8x32xf32>
    %234 = arith.addf %231, %233 : vector<8x32xf32>
    %235 = math.tanh %234 : vector<8x32xf32>
    %cst_99 = arith.constant 1.000000e+00 : f32
    %236 = vector.broadcast %cst_99 : f32 to vector<8x32xf32>
    %237 = arith.subf %236, %230 : vector<8x32xf32>
    %238 = arith.mulf %237, %235 : vector<8x32xf32>
    %239 = arith.mulf %230, %181 : vector<8x32xf32>
    %240 = arith.addf %238, %239 : vector<8x32xf32>
    %241 = tpu.concatenate %182, %202, %205, %240 in 1 : vector<8x16xf32>, vector<8x16xf32>, vector<8x16xf32>, vector<8x32xf32> -> vector<8x80xf32>
    %242 = arith.truncf %241 : vector<8x80xf32> to vector<8x80xbf16>
    %cst_100 = arith.constant dense<0.000000e+00> : vector<8x128xf32>
    %243 = tpu.matmul %242, %8, %cst_100 {dimension_numbers = #tpu.dot_dimension_numbers<[1], [0], [0], [1], [0, 0, 1, 1], [], []>} : vector<8x80xbf16>, vector<80x128xbf16>, vector<8x128xf32> -> vector<8x128xf32>
    %244 = vector.broadcast %9 : vector<1x128xf32> to vector<8x128xf32>
    %245 = arith.addf %243, %244 : vector<8x128xf32>
    %246 = arith.index_cast %c2_i32 : i32 to index
    %c0_101 = arith.constant 0 : index
    %c0_102 = arith.constant 0 : index
    %247 = vector.load %arg14[%246, %c0_101, %c0_102] : memref<5x8x128xf32, #tpu.memory_space<vmem>>, vector<1x8x128xf32>
    %248 = vector.shape_cast %247 : vector<1x8x128xf32> to vector<8x128xf32>
    %249 = vector.shape_cast %245 : vector<8x128xf32> to vector<1x8x128xf32>
    tpu.vector_store %arg14[%246, %c0_101, %c0_102], %249 {strides = array<i32>} : memref<5x8x128xf32, #tpu.memory_space<vmem>>, vector<1x8x128xf32>,
    %c0_103 = arith.constant 0 : index
    %c0_104 = arith.constant 0 : index
    %250 = vector.load %arg15[%c0_103, %c0_104] : memref<8x32xf32, #tpu.memory_space<vmem>>, vector<8x32xf32>
    tpu.vector_store %arg15[%c0_103, %c0_104], %240 {strides = array<i32>} : memref<8x32xf32, #tpu.memory_space<vmem>>, vector<8x32xf32>,
    %c1_i32_105 = arith.constant 1 : i32
    %251 = arith.addi %c2_i32, %c1_i32_105 : i32
    %252 = arith.index_cast %251 : i32 to index
    %c0_106 = arith.constant 0 : index
    %c0_107 = arith.constant 0 : index
    %253 = vector.load %arg1[%252, %c0_106, %c0_107] : memref<6x8x16xf32, #tpu.memory_space<vmem>>, vector<1x8x16xf32>
    %254 = vector.shape_cast %253 : vector<1x8x16xf32> to vector<8x16xf32>
    %c0_108 = arith.constant 0 : index
    %c0_109 = arith.constant 0 : index
    %255 = vector.load %arg16[%c0_108, %c0_109] : memref<8x16xf32, #tpu.memory_space<vmem>>, vector<8x16xf32>
    tpu.vector_store %arg16[%c0_108, %c0_109], %254 {strides = array<i32>} : memref<8x16xf32, #tpu.memory_space<vmem>>, vector<8x16xf32>,
    %c1_i32_110 = arith.constant 1 : i32
    %256 = arith.addi %c2_i32, %c1_i32_110 : i32
    %257 = arith.index_cast %256 : i32 to index
    %258 = memref.load %arg0[%257] : memref<6xi32, #tpu.memory_space<smem>>
    %c0_i32_111 = arith.constant 0 : i32
    %259 = arith.cmpi eq, %258, %c0_i32_111 : i32
    %260 = arith.extui %259 : i1 to i32
    %c0_i32_112 = arith.constant 0 : i32
    %261 = arith.cmpi ne, %260, %c0_i32_112 : i32
    scf.if %261 {
      %cst_167 = arith.constant -3.000000e+38 : f32
      %424 = vector.broadcast %cst_167 : f32 to vector<8x128xf32>
      %425 = arith.select %13, %245, %424 : vector<8x128xi1>, vector<8x128xf32>
      %cst_168 = arith.constant dense<0xFF800000> : vector<8xf32>
      %426 = vector.multi_reduction <maximumf>, %425, %cst_168 [1] : vector<8x128xf32> to vector<8xf32>
      %427 = vector.shape_cast %426 : vector<8xf32> to vector<8x1xf32>
      %428 = vector.broadcast %427 : vector<8x1xf32> to vector<8x128xf32>
      %429 = arith.cmpf oeq, %425, %428 : vector<8x128xf32>
      %c128_i32 = arith.constant 128 : i32
      %430 = vector.broadcast %c128_i32 : i32 to vector<8x128xi32>
      %431 = arith.select %429, %11, %430 : vector<8x128xi1>, vector<8x128xi32>
      %cst_169 = arith.constant dense<2147483647> : vector<8xi32>
      %432 = vector.multi_reduction <minsi>, %431, %cst_169 [1] : vector<8x128xi32> to vector<8xi32>
      %433 = vector.shape_cast %432 : vector<8xi32> to vector<8x1xi32>
      %434 = vector.broadcast %433 : vector<8x1xi32> to vector<8x128xi32>
      %435 = arith.cmpi eq, %11, %434 : vector<8x128xi32>
      %436 = arith.extui %435 : vector<8x128xi1> to vector<8x128xi32>
      %437 = arith.sitofp %436 : vector<8x128xi32> to vector<8x128xf32>
      %438 = arith.truncf %437 : vector<8x128xf32> to vector<8x128xbf16>
      %cst_170 = arith.constant dense<0.000000e+00> : vector<8x16xf32>
      %439 = tpu.matmul %438, %10, %cst_170 {dimension_numbers = #tpu.dot_dimension_numbers<[1], [0], [0], [1], [0, 0, 1, 1], [], []>} : vector<8x128xbf16>, vector<128x16xbf16>, vector<8x16xf32> -> vector<8x16xf32>
      %c0_171 = arith.constant 0 : index
      %c0_172 = arith.constant 0 : index
      %440 = vector.load %arg16[%c0_171, %c0_172] : memref<8x16xf32, #tpu.memory_space<vmem>>, vector<8x16xf32>
      tpu.vector_store %arg16[%c0_171, %c0_172], %439 {strides = array<i32>} : memref<8x16xf32, #tpu.memory_space<vmem>>, vector<8x16xf32>,
    } else {
    }
    %c3_i32 = arith.constant 3 : i32
    %c0_113 = arith.constant 0 : index
    %c0_114 = arith.constant 0 : index
    %262 = vector.load %arg15[%c0_113, %c0_114] : memref<8x32xf32, #tpu.memory_space<vmem>>, vector<8x32xf32>
    %c0_115 = arith.constant 0 : index
    %c0_116 = arith.constant 0 : index
    %263 = vector.load %arg16[%c0_115, %c0_116] : memref<8x16xf32, #tpu.memory_space<vmem>>, vector<8x16xf32>
    %264 = vector.broadcast %3 : vector<1x32xf32> to vector<8x32xf32>
    %265 = arith.mulf %262, %264 : vector<8x32xf32>
    %cst_117 = arith.constant dense<0.000000e+00> : vector<8xf32>
    %266 = vector.multi_reduction <add>, %265, %cst_117 [1] : vector<8x32xf32> to vector<8xf32>
    %267 = vector.shape_cast %266 : vector<8xf32> to vector<8x1xf32>
    %268 = vector.shape_cast %267 : vector<8x1xf32> to vector<1x8x1xf32>
    %269 = vector.broadcast %268 : vector<1x8x1xf32> to vector<8x8x1xf32>
    %270 = arith.addf %2, %269 : vector<8x8x1xf32>
    %cst_118 = arith.constant dense<0xFF800000> : vector<8x1xf32>
    %271 = vector.multi_reduction <maximumf>, %270, %cst_118 [0] : vector<8x8x1xf32> to vector<8x1xf32>
    %272 = vector.shape_cast %271 : vector<8x1xf32> to vector<1x8x1xf32>
    %273 = vector.broadcast %272 : vector<1x8x1xf32> to vector<8x8x1xf32>
    %274 = arith.subf %270, %273 : vector<8x8x1xf32>
    %275 = math.exp %274 : vector<8x8x1xf32>
    %cst_119 = arith.constant dense<0.000000e+00> : vector<8x1xf32>
    %276 = vector.multi_reduction <add>, %275, %cst_119 [0] : vector<8x8x1xf32> to vector<8x1xf32>
    %277 = vector.shape_cast %276 : vector<8x1xf32> to vector<1x8x1xf32>
    %278 = tpu.reciprocal %277 {approx = true} : vector<1x8x1xf32> -> vector<1x8x1xf32>
    %279 = vector.broadcast %278 : vector<1x8x1xf32> to vector<8x8x1xf32>
    %280 = arith.mulf %275, %279 : vector<8x8x1xf32>
    %281 = vector.broadcast %280 : vector<8x8x1xf32> to vector<8x8x16xf32>
    %282 = arith.mulf %0, %281 : vector<8x8x16xf32>
    %cst_120 = arith.constant dense<0.000000e+00> : vector<8x16xf32>
    %283 = vector.multi_reduction <add>, %282, %cst_120 [0] : vector<8x8x16xf32> to vector<8x16xf32>
    %284 = vector.broadcast %280 : vector<8x8x1xf32> to vector<8x8x16xf32>
    %285 = arith.mulf %1, %284 : vector<8x8x16xf32>
    %cst_121 = arith.constant dense<0.000000e+00> : vector<8x16xf32>
    %286 = vector.multi_reduction <add>, %285, %cst_121 [0] : vector<8x8x16xf32> to vector<8x16xf32>
    %287 = tpu.concatenate %263, %283, %286 in 1 : vector<8x16xf32>, vector<8x16xf32>, vector<8x16xf32> -> vector<8x48xf32>
    %288 = arith.truncf %287 : vector<8x48xf32> to vector<8x48xbf16>
    %cst_122 = arith.constant dense<0.000000e+00> : vector<8x96xf32>
    %289 = tpu.matmul %288, %4, %cst_122 {dimension_numbers = #tpu.dot_dimension_numbers<[1], [0], [0], [1], [0, 0, 1, 1], [], []>} : vector<8x48xbf16>, vector<48x96xbf16>, vector<8x96xf32> -> vector<8x96xf32>
    %290 = vector.broadcast %5 : vector<1x96xf32> to vector<8x96xf32>
    %291 = arith.addf %289, %290 : vector<8x96xf32>
    %292 = arith.truncf %262 : vector<8x32xf32> to vector<8x32xbf16>
    %cst_123 = arith.constant dense<0.000000e+00> : vector<8x96xf32>
    %293 = tpu.matmul %292, %6, %cst_123 {dimension_numbers = #tpu.dot_dimension_numbers<[1], [0], [0], [1], [0, 0, 1, 1], [], []>} : vector<8x32xbf16>, vector<32x96xbf16>, vector<8x96xf32> -> vector<8x96xf32>
    %294 = vector.broadcast %7 : vector<1x96xf32> to vector<8x96xf32>
    %295 = arith.addf %293, %294 : vector<8x96xf32>
    %296 = vector.extract_strided_slice %291 {offsets = [0, 0], sizes = [8, 32], strides = [1, 1]} : vector<8x96xf32> to vector<8x32xf32>
    %297 = vector.extract_strided_slice %295 {offsets = [0, 0], sizes = [8, 32], strides = [1, 1]} : vector<8x96xf32> to vector<8x32xf32>
    %298 = arith.addf %296, %297 : vector<8x32xf32>
    %299 = arith.negf %298 : vector<8x32xf32>
    %300 = math.exp %299 : vector<8x32xf32>
    %cst_124 = arith.constant 1.000000e+00 : f32
    %301 = vector.broadcast %cst_124 : f32 to vector<8x32xf32>
    %302 = arith.addf %301, %300 : vector<8x32xf32>
    %303 = arith.divf %301, %302 : vector<8x32xf32>
    %304 = vector.extract_strided_slice %291 {offsets = [0, 32], sizes = [8, 32], strides = [1, 1]} : vector<8x96xf32> to vector<8x32xf32>
    %305 = vector.extract_strided_slice %295 {offsets = [0, 32], sizes = [8, 32], strides = [1, 1]} : vector<8x96xf32> to vector<8x32xf32>
    %306 = arith.addf %304, %305 : vector<8x32xf32>
    %307 = arith.negf %306 : vector<8x32xf32>
    %308 = math.exp %307 : vector<8x32xf32>
    %cst_125 = arith.constant 1.000000e+00 : f32
    %309 = vector.broadcast %cst_125 : f32 to vector<8x32xf32>
    %310 = arith.addf %309, %308 : vector<8x32xf32>
    %311 = arith.divf %309, %310 : vector<8x32xf32>
    %312 = vector.extract_strided_slice %291 {offsets = [0, 64], sizes = [8, 32], strides = [1, 1]} : vector<8x96xf32> to vector<8x32xf32>
    %313 = vector.extract_strided_slice %295 {offsets = [0, 64], sizes = [8, 32], strides = [1, 1]} : vector<8x96xf32> to vector<8x32xf32>
    %314 = arith.mulf %303, %313 : vector<8x32xf32>
    %315 = arith.addf %312, %314 : vector<8x32xf32>
    %316 = math.tanh %315 : vector<8x32xf32>
    %cst_126 = arith.constant 1.000000e+00 : f32
    %317 = vector.broadcast %cst_126 : f32 to vector<8x32xf32>
    %318 = arith.subf %317, %311 : vector<8x32xf32>
    %319 = arith.mulf %318, %316 : vector<8x32xf32>
    %320 = arith.mulf %311, %262 : vector<8x32xf32>
    %321 = arith.addf %319, %320 : vector<8x32xf32>
    %322 = tpu.concatenate %263, %283, %286, %321 in 1 : vector<8x16xf32>, vector<8x16xf32>, vector<8x16xf32>, vector<8x32xf32> -> vector<8x80xf32>
    %323 = arith.truncf %322 : vector<8x80xf32> to vector<8x80xbf16>
    %cst_127 = arith.constant dense<0.000000e+00> : vector<8x128xf32>
    %324 = tpu.matmul %323, %8, %cst_127 {dimension_numbers = #tpu.dot_dimension_numbers<[1], [0], [0], [1], [0, 0, 1, 1], [], []>} : vector<8x80xbf16>, vector<80x128xbf16>, vector<8x128xf32> -> vector<8x128xf32>
    %325 = vector.broadcast %9 : vector<1x128xf32> to vector<8x128xf32>
    %326 = arith.addf %324, %325 : vector<8x128xf32>
    %327 = arith.index_cast %c3_i32 : i32 to index
    %c0_128 = arith.constant 0 : index
    %c0_129 = arith.constant 0 : index
    %328 = vector.load %arg14[%327, %c0_128, %c0_129] : memref<5x8x128xf32, #tpu.memory_space<vmem>>, vector<1x8x128xf32>
    %329 = vector.shape_cast %328 : vector<1x8x128xf32> to vector<8x128xf32>
    %330 = vector.shape_cast %326 : vector<8x128xf32> to vector<1x8x128xf32>
    tpu.vector_store %arg14[%327, %c0_128, %c0_129], %330 {strides = array<i32>} : memref<5x8x128xf32, #tpu.memory_space<vmem>>, vector<1x8x128xf32>,
    %c0_130 = arith.constant 0 : index
    %c0_131 = arith.constant 0 : index
    %331 = vector.load %arg15[%c0_130, %c0_131] : memref<8x32xf32, #tpu.memory_space<vmem>>, vector<8x32xf32>
    tpu.vector_store %arg15[%c0_130, %c0_131], %321 {strides = array<i32>} : memref<8x32xf32, #tpu.memory_space<vmem>>, vector<8x32xf32>,
    %c1_i32_132 = arith.constant 1 : i32
    %332 = arith.addi %c3_i32, %c1_i32_132 : i32
    %333 = arith.index_cast %332 : i32 to index
    %c0_133 = arith.constant 0 : index
    %c0_134 = arith.constant 0 : index
    %334 = vector.load %arg1[%333, %c0_133, %c0_134] : memref<6x8x16xf32, #tpu.memory_space<vmem>>, vector<1x8x16xf32>
    %335 = vector.shape_cast %334 : vector<1x8x16xf32> to vector<8x16xf32>
    %c0_135 = arith.constant 0 : index
    %c0_136 = arith.constant 0 : index
    %336 = vector.load %arg16[%c0_135, %c0_136] : memref<8x16xf32, #tpu.memory_space<vmem>>, vector<8x16xf32>
    tpu.vector_store %arg16[%c0_135, %c0_136], %335 {strides = array<i32>} : memref<8x16xf32, #tpu.memory_space<vmem>>, vector<8x16xf32>,
    %c1_i32_137 = arith.constant 1 : i32
    %337 = arith.addi %c3_i32, %c1_i32_137 : i32
    %338 = arith.index_cast %337 : i32 to index
    %339 = memref.load %arg0[%338] : memref<6xi32, #tpu.memory_space<smem>>
    %c0_i32_138 = arith.constant 0 : i32
    %340 = arith.cmpi eq, %339, %c0_i32_138 : i32
    %341 = arith.extui %340 : i1 to i32
    %c0_i32_139 = arith.constant 0 : i32
    %342 = arith.cmpi ne, %341, %c0_i32_139 : i32
    scf.if %342 {
      %cst_167 = arith.constant -3.000000e+38 : f32
      %424 = vector.broadcast %cst_167 : f32 to vector<8x128xf32>
      %425 = arith.select %13, %326, %424 : vector<8x128xi1>, vector<8x128xf32>
      %cst_168 = arith.constant dense<0xFF800000> : vector<8xf32>
      %426 = vector.multi_reduction <maximumf>, %425, %cst_168 [1] : vector<8x128xf32> to vector<8xf32>
      %427 = vector.shape_cast %426 : vector<8xf32> to vector<8x1xf32>
      %428 = vector.broadcast %427 : vector<8x1xf32> to vector<8x128xf32>
      %429 = arith.cmpf oeq, %425, %428 : vector<8x128xf32>
      %c128_i32 = arith.constant 128 : i32
      %430 = vector.broadcast %c128_i32 : i32 to vector<8x128xi32>
      %431 = arith.select %429, %11, %430 : vector<8x128xi1>, vector<8x128xi32>
      %cst_169 = arith.constant dense<2147483647> : vector<8xi32>
      %432 = vector.multi_reduction <minsi>, %431, %cst_169 [1] : vector<8x128xi32> to vector<8xi32>
      %433 = vector.shape_cast %432 : vector<8xi32> to vector<8x1xi32>
      %434 = vector.broadcast %433 : vector<8x1xi32> to vector<8x128xi32>
      %435 = arith.cmpi eq, %11, %434 : vector<8x128xi32>
      %436 = arith.extui %435 : vector<8x128xi1> to vector<8x128xi32>
      %437 = arith.sitofp %436 : vector<8x128xi32> to vector<8x128xf32>
      %438 = arith.truncf %437 : vector<8x128xf32> to vector<8x128xbf16>
      %cst_170 = arith.constant dense<0.000000e+00> : vector<8x16xf32>
      %439 = tpu.matmul %438, %10, %cst_170 {dimension_numbers = #tpu.dot_dimension_numbers<[1], [0], [0], [1], [0, 0, 1, 1], [], []>} : vector<8x128xbf16>, vector<128x16xbf16>, vector<8x16xf32> -> vector<8x16xf32>
      %c0_171 = arith.constant 0 : index
      %c0_172 = arith.constant 0 : index
      %440 = vector.load %arg16[%c0_171, %c0_172] : memref<8x16xf32, #tpu.memory_space<vmem>>, vector<8x16xf32>
      tpu.vector_store %arg16[%c0_171, %c0_172], %439 {strides = array<i32>} : memref<8x16xf32, #tpu.memory_space<vmem>>, vector<8x16xf32>,
    } else {
    }
    %c4_i32 = arith.constant 4 : i32
    %c0_140 = arith.constant 0 : index
    %c0_141 = arith.constant 0 : index
    %343 = vector.load %arg15[%c0_140, %c0_141] : memref<8x32xf32, #tpu.memory_space<vmem>>, vector<8x32xf32>
    %c0_142 = arith.constant 0 : index
    %c0_143 = arith.constant 0 : index
    %344 = vector.load %arg16[%c0_142, %c0_143] : memref<8x16xf32, #tpu.memory_space<vmem>>, vector<8x16xf32>
    %345 = vector.broadcast %3 : vector<1x32xf32> to vector<8x32xf32>
    %346 = arith.mulf %343, %345 : vector<8x32xf32>
    %cst_144 = arith.constant dense<0.000000e+00> : vector<8xf32>
    %347 = vector.multi_reduction <add>, %346, %cst_144 [1] : vector<8x32xf32> to vector<8xf32>
    %348 = vector.shape_cast %347 : vector<8xf32> to vector<8x1xf32>
    %349 = vector.shape_cast %348 : vector<8x1xf32> to vector<1x8x1xf32>
    %350 = vector.broadcast %349 : vector<1x8x1xf32> to vector<8x8x1xf32>
    %351 = arith.addf %2, %350 : vector<8x8x1xf32>
    %cst_145 = arith.constant dense<0xFF800000> : vector<8x1xf32>
    %352 = vector.multi_reduction <maximumf>, %351, %cst_145 [0] : vector<8x8x1xf32> to vector<8x1xf32>
    %353 = vector.shape_cast %352 : vector<8x1xf32> to vector<1x8x1xf32>
    %354 = vector.broadcast %353 : vector<1x8x1xf32> to vector<8x8x1xf32>
    %355 = arith.subf %351, %354 : vector<8x8x1xf32>
    %356 = math.exp %355 : vector<8x8x1xf32>
    %cst_146 = arith.constant dense<0.000000e+00> : vector<8x1xf32>
    %357 = vector.multi_reduction <add>, %356, %cst_146 [0] : vector<8x8x1xf32> to vector<8x1xf32>
    %358 = vector.shape_cast %357 : vector<8x1xf32> to vector<1x8x1xf32>
    %359 = tpu.reciprocal %358 {approx = true} : vector<1x8x1xf32> -> vector<1x8x1xf32>
    %360 = vector.broadcast %359 : vector<1x8x1xf32> to vector<8x8x1xf32>
    %361 = arith.mulf %356, %360 : vector<8x8x1xf32>
    %362 = vector.broadcast %361 : vector<8x8x1xf32> to vector<8x8x16xf32>
    %363 = arith.mulf %0, %362 : vector<8x8x16xf32>
    %cst_147 = arith.constant dense<0.000000e+00> : vector<8x16xf32>
    %364 = vector.multi_reduction <add>, %363, %cst_147 [0] : vector<8x8x16xf32> to vector<8x16xf32>
    %365 = vector.broadcast %361 : vector<8x8x1xf32> to vector<8x8x16xf32>
    %366 = arith.mulf %1, %365 : vector<8x8x16xf32>
    %cst_148 = arith.constant dense<0.000000e+00> : vector<8x16xf32>
    %367 = vector.multi_reduction <add>, %366, %cst_148 [0] : vector<8x8x16xf32> to vector<8x16xf32>
    %368 = tpu.concatenate %344, %364, %367 in 1 : vector<8x16xf32>, vector<8x16xf32>, vector<8x16xf32> -> vector<8x48xf32>
    %369 = arith.truncf %368 : vector<8x48xf32> to vector<8x48xbf16>
    %cst_149 = arith.constant dense<0.000000e+00> : vector<8x96xf32>
    %370 = tpu.matmul %369, %4, %cst_149 {dimension_numbers = #tpu.dot_dimension_numbers<[1], [0], [0], [1], [0, 0, 1, 1], [], []>} : vector<8x48xbf16>, vector<48x96xbf16>, vector<8x96xf32> -> vector<8x96xf32>
    %371 = vector.broadcast %5 : vector<1x96xf32> to vector<8x96xf32>
    %372 = arith.addf %370, %371 : vector<8x96xf32>
    %373 = arith.truncf %343 : vector<8x32xf32> to vector<8x32xbf16>
    %cst_150 = arith.constant dense<0.000000e+00> : vector<8x96xf32>
    %374 = tpu.matmul %373, %6, %cst_150 {dimension_numbers = #tpu.dot_dimension_numbers<[1], [0], [0], [1], [0, 0, 1, 1], [], []>} : vector<8x32xbf16>, vector<32x96xbf16>, vector<8x96xf32> -> vector<8x96xf32>
    %375 = vector.broadcast %7 : vector<1x96xf32> to vector<8x96xf32>
    %376 = arith.addf %374, %375 : vector<8x96xf32>
    %377 = vector.extract_strided_slice %372 {offsets = [0, 0], sizes = [8, 32], strides = [1, 1]} : vector<8x96xf32> to vector<8x32xf32>
    %378 = vector.extract_strided_slice %376 {offsets = [0, 0], sizes = [8, 32], strides = [1, 1]} : vector<8x96xf32> to vector<8x32xf32>
    %379 = arith.addf %377, %378 : vector<8x32xf32>
    %380 = arith.negf %379 : vector<8x32xf32>
    %381 = math.exp %380 : vector<8x32xf32>
    %cst_151 = arith.constant 1.000000e+00 : f32
    %382 = vector.broadcast %cst_151 : f32 to vector<8x32xf32>
    %383 = arith.addf %382, %381 : vector<8x32xf32>
    %384 = arith.divf %382, %383 : vector<8x32xf32>
    %385 = vector.extract_strided_slice %372 {offsets = [0, 32], sizes = [8, 32], strides = [1, 1]} : vector<8x96xf32> to vector<8x32xf32>
    %386 = vector.extract_strided_slice %376 {offsets = [0, 32], sizes = [8, 32], strides = [1, 1]} : vector<8x96xf32> to vector<8x32xf32>
    %387 = arith.addf %385, %386 : vector<8x32xf32>
    %388 = arith.negf %387 : vector<8x32xf32>
    %389 = math.exp %388 : vector<8x32xf32>
    %cst_152 = arith.constant 1.000000e+00 : f32
    %390 = vector.broadcast %cst_152 : f32 to vector<8x32xf32>
    %391 = arith.addf %390, %389 : vector<8x32xf32>
    %392 = arith.divf %390, %391 : vector<8x32xf32>
    %393 = vector.extract_strided_slice %372 {offsets = [0, 64], sizes = [8, 32], strides = [1, 1]} : vector<8x96xf32> to vector<8x32xf32>
    %394 = vector.extract_strided_slice %376 {offsets = [0, 64], sizes = [8, 32], strides = [1, 1]} : vector<8x96xf32> to vector<8x32xf32>
    %395 = arith.mulf %384, %394 : vector<8x32xf32>
    %396 = arith.addf %393, %395 : vector<8x32xf32>
    %397 = math.tanh %396 : vector<8x32xf32>
    %cst_153 = arith.constant 1.000000e+00 : f32
    %398 = vector.broadcast %cst_153 : f32 to vector<8x32xf32>
    %399 = arith.subf %398, %392 : vector<8x32xf32>
    %400 = arith.mulf %399, %397 : vector<8x32xf32>
    %401 = arith.mulf %392, %343 : vector<8x32xf32>
    %402 = arith.addf %400, %401 : vector<8x32xf32>
    %403 = tpu.concatenate %344, %364, %367, %402 in 1 : vector<8x16xf32>, vector<8x16xf32>, vector<8x16xf32>, vector<8x32xf32> -> vector<8x80xf32>
    %404 = arith.truncf %403 : vector<8x80xf32> to vector<8x80xbf16>
    %cst_154 = arith.constant dense<0.000000e+00> : vector<8x128xf32>
    %405 = tpu.matmul %404, %8, %cst_154 {dimension_numbers = #tpu.dot_dimension_numbers<[1], [0], [0], [1], [0, 0, 1, 1], [], []>} : vector<8x80xbf16>, vector<80x128xbf16>, vector<8x128xf32> -> vector<8x128xf32>
    %406 = vector.broadcast %9 : vector<1x128xf32> to vector<8x128xf32>
    %407 = arith.addf %405, %406 : vector<8x128xf32>
    %408 = arith.index_cast %c4_i32 : i32 to index
    %c0_155 = arith.constant 0 : index
    %c0_156 = arith.constant 0 : index
    %409 = vector.load %arg14[%408, %c0_155, %c0_156] : memref<5x8x128xf32, #tpu.memory_space<vmem>>, vector<1x8x128xf32>
    %410 = vector.shape_cast %409 : vector<1x8x128xf32> to vector<8x128xf32>
    %411 = vector.shape_cast %407 : vector<8x128xf32> to vector<1x8x128xf32>
    tpu.vector_store %arg14[%408, %c0_155, %c0_156], %411 {strides = array<i32>} : memref<5x8x128xf32, #tpu.memory_space<vmem>>, vector<1x8x128xf32>,
    %c0_157 = arith.constant 0 : index
    %c0_158 = arith.constant 0 : index
    %412 = vector.load %arg15[%c0_157, %c0_158] : memref<8x32xf32, #tpu.memory_space<vmem>>, vector<8x32xf32>
    tpu.vector_store %arg15[%c0_157, %c0_158], %402 {strides = array<i32>} : memref<8x32xf32, #tpu.memory_space<vmem>>, vector<8x32xf32>,
    %c1_i32_159 = arith.constant 1 : i32
    %413 = arith.addi %c4_i32, %c1_i32_159 : i32
    %414 = arith.index_cast %413 : i32 to index
    %c0_160 = arith.constant 0 : index
    %c0_161 = arith.constant 0 : index
    %415 = vector.load %arg1[%414, %c0_160, %c0_161] : memref<6x8x16xf32, #tpu.memory_space<vmem>>, vector<1x8x16xf32>
    %416 = vector.shape_cast %415 : vector<1x8x16xf32> to vector<8x16xf32>
    %c0_162 = arith.constant 0 : index
    %c0_163 = arith.constant 0 : index
    %417 = vector.load %arg16[%c0_162, %c0_163] : memref<8x16xf32, #tpu.memory_space<vmem>>, vector<8x16xf32>
    tpu.vector_store %arg16[%c0_162, %c0_163], %416 {strides = array<i32>} : memref<8x16xf32, #tpu.memory_space<vmem>>, vector<8x16xf32>,
    %c1_i32_164 = arith.constant 1 : i32
    %418 = arith.addi %c4_i32, %c1_i32_164 : i32
    %419 = arith.index_cast %418 : i32 to index
    %420 = memref.load %arg0[%419] : memref<6xi32, #tpu.memory_space<smem>>
    %c0_i32_165 = arith.constant 0 : i32
    %421 = arith.cmpi eq, %420, %c0_i32_165 : i32
    %422 = arith.extui %421 : i1 to i32
    %c0_i32_166 = arith.constant 0 : i32
    %423 = arith.cmpi ne, %422, %c0_i32_166 : i32
    scf.if %423 {
      %cst_167 = arith.constant -3.000000e+38 : f32
      %424 = vector.broadcast %cst_167 : f32 to vector<8x128xf32>
      %425 = arith.select %13, %407, %424 : vector<8x128xi1>, vector<8x128xf32>
      %cst_168 = arith.constant dense<0xFF800000> : vector<8xf32>
      %426 = vector.multi_reduction <maximumf>, %425, %cst_168 [1] : vector<8x128xf32> to vector<8xf32>
      %427 = vector.shape_cast %426 : vector<8xf32> to vector<8x1xf32>
      %428 = vector.broadcast %427 : vector<8x1xf32> to vector<8x128xf32>
      %429 = arith.cmpf oeq, %425, %428 : vector<8x128xf32>
      %c128_i32 = arith.constant 128 : i32
      %430 = vector.broadcast %c128_i32 : i32 to vector<8x128xi32>
      %431 = arith.select %429, %11, %430 : vector<8x128xi1>, vector<8x128xi32>
      %cst_169 = arith.constant dense<2147483647> : vector<8xi32>
      %432 = vector.multi_reduction <minsi>, %431, %cst_169 [1] : vector<8x128xi32> to vector<8xi32>
      %433 = vector.shape_cast %432 : vector<8xi32> to vector<8x1xi32>
      %434 = vector.broadcast %433 : vector<8x1xi32> to vector<8x128xi32>
      %435 = arith.cmpi eq, %11, %434 : vector<8x128xi32>
      %436 = arith.extui %435 : vector<8x128xi1> to vector<8x128xi32>
      %437 = arith.sitofp %436 : vector<8x128xi32> to vector<8x128xf32>
      %438 = arith.truncf %437 : vector<8x128xf32> to vector<8x128xbf16>
      %cst_170 = arith.constant dense<0.000000e+00> : vector<8x16xf32>
      %439 = tpu.matmul %438, %10, %cst_170 {dimension_numbers = #tpu.dot_dimension_numbers<[1], [0], [0], [1], [0, 0, 1, 1], [], []>} : vector<8x128xbf16>, vector<128x16xbf16>, vector<8x16xf32> -> vector<8x16xf32>
      %c0_171 = arith.constant 0 : index
      %c0_172 = arith.constant 0 : index
      %440 = vector.load %arg16[%c0_171, %c0_172] : memref<8x16xf32, #tpu.memory_space<vmem>>, vector<8x16xf32>
      tpu.vector_store %arg16[%c0_171, %c0_172], %439 {strides = array<i32>} : memref<8x16xf32, #tpu.memory_space<vmem>>, vector<8x16xf32>,
    } else {
    }
    %c5_i32 = arith.constant 5 : i32
    return
  }
}

</mosaic_0001>

<llo_original>
// kernel: _forward_impl.2
$region0: #{_forward_impl.2}
  #allocation0 [shape = 'u32[]', space=smem, size = 0x4, offset = 0x4, fixed_abs, tag = 'smem constant byte address 0x4 - core index']
  #allocation1 [shape = 'u32[144,128]{1,0:T(1,128)}', space=vmem, size = 0x12000, scoped, tag = 'internal scratch']
  #allocation2 [shape = 'f32[1,1,1]{2,1,0:T(1,128)S(1)}', space=vmem, size = 0x200, scoped, tag = 'scoped memory for _forward_impl.2']
  %s0 = inlined_call_operand.vmem [shape: f32[64,16], index: 0, kind: input, shape index: {}]
  %s1 = inlined_call_operand.vmem [shape: bf16[16,48], index: 1, kind: input, shape index: {}]
  %s2 = inlined_call_operand.vmem [shape: bf16[16,48], index: 2, kind: input, shape index: {}]
  %s3 = inlined_call_operand.vmem [shape: f32[1,48], index: 3, kind: input, shape index: {}]
  %s4 = inlined_call_operand.vmem [shape: f32[1,48], index: 4, kind: input, shape index: {}]
  %s5 = inlined_call_operand.vmem [shape: bf16[16,48], index: 5, kind: input, shape index: {}]
  %s6 = inlined_call_operand.vmem [shape: bf16[16,48], index: 6, kind: input, shape index: {}]
  %s7 = inlined_call_operand.vmem [shape: f32[1,48], index: 7, kind: input, shape index: {}]
  %s8 = inlined_call_operand.vmem [shape: f32[1,48], index: 8, kind: input, shape index: {}]
  %s9 = inlined_call_operand.vmem [shape: bf16[32,32], index: 9, kind: input, shape index: {}]
  %s10 = inlined_call_operand.vmem [shape: f32[1,32], index: 10, kind: input, shape index: {}]
  %s11 = inlined_call_operand.vmem [shape: f32[1,1,16], index: 11, kind: input, shape index: {}]
  %s12 = inlined_call_operand.vmem [shape: f32[1,1,16], index: 12, kind: input, shape index: {}]
  %s13 = inlined_call_operand.<no memory space> [shape: f32[1,1,1], index: 13, kind: input, shape index: {}]
  %s14 = inlined_call_operand.vmem [shape: f32[8,8,16], index: 14, kind: output, shape index: {0}]
  %s15 = inlined_call_operand.vmem [shape: f32[8,8,16], index: 15, kind: output, shape index: {1}]
  %s16 = inlined_call_operand.vmem [shape: f32[8,8,1], index: 16, kind: output, shape index: {2}]
  %s17 = inlined_call_operand.vmem [shape: f32[8,32], index: 17, kind: output, shape index: {3}]
  %18 = xla_tuple %s14, %s15, %s16, %s17
  %s19 = sld [smem:[#allocation0]]
  $region90: #{_forward_impl.2} parent=0
    _
  %s21 = ssub.s32 1, %s19
  %s22 = scalar_select 0, %s21, %s19
  %v23 = vstv %s13
  %24 = vst [vmem:[#allocation2] sm:$0x1] %v23
  // Predicated region
  $region2: #{_forward_impl.2} parent=0 // pred_check
    _
  $region3: #{_forward_impl.2} parent=0 // pred_check_branch
    %26 = sbr.rel (0) target = $region5
  $region4: #{_forward_impl.2} parent=0 // pred_region
    _
  $region5: #{_forward_impl.2} parent=0 // pred_fallthru
    _
  // Predicated region
  $region6: #{_forward_impl.2} parent=0 // pred_check
    _
  $region7: #{_forward_impl.2} parent=0 // pred_check_branch
    %28 = sbr.rel (0) target = $region9
  $region8: #{_forward_impl.2} parent=0 // pred_region
    _
  $region9: #{_forward_impl.2} parent=0 // pred_fallthru
    _
  // Predicated region
  $region10: #{_forward_impl.2} parent=0 // pred_check
    _
  $region11: #{_forward_impl.2} parent=0 // pred_check_branch
    %30 = sbr.rel (0) target = $region13
  $region12: #{_forward_impl.2} parent=0 // pred_region
    _
  $region13: #{_forward_impl.2} parent=0 // pred_fallthru
    _
  // Predicated region
  $region14: #{_forward_impl.2} parent=0 // pred_check
    _
  $region15: #{_forward_impl.2} parent=0 // pred_check_branch
    %32 = sbr.rel (0) target = $region17
  $region16: #{_forward_impl.2} parent=0 // pred_region
    _
  $region17: #{_forward_impl.2} parent=0 // pred_fallthru
    _
  // Predicated region
  $region18: #{_forward_impl.2} parent=0 // pred_check
    _
  $region19: #{_forward_impl.2} parent=0 // pred_check_branch
    %34 = sbr.rel (0) target = $region21
  $region20: #{_forward_impl.2} parent=0 // pred_region
    _
  $region21: #{_forward_impl.2} parent=0 // pred_fallthru
    _
  // Predicated region
  $region22: #{_forward_impl.2} parent=0 // pred_check
    _
  $region23: #{_forward_impl.2} parent=0 // pred_check_branch
    %36 = sbr.rel (0) target = $region25
  $region24: #{_forward_impl.2} parent=0 // pred_region
    _
  $region25: #{_forward_impl.2} parent=0 // pred_fallthru
    _
  // Predicated region
  $region26: #{_forward_impl.2} parent=0 // pred_check
    _
  $region27: #{_forward_impl.2} parent=0 // pred_check_branch
    %38 = sbr.rel (0) target = $region29
  $region28: #{_forward_impl.2} parent=0 // pred_region
    _
  $region29: #{_forward_impl.2} parent=0 // pred_fallthru
    _
  // Predicated region
  $region30: #{_forward_impl.2} parent=0 // pred_check
    _
  $region31: #{_forward_impl.2} parent=0 // pred_check_branch
    %40 = sbr.rel (0) target = $region33
  $region32: #{_forward_impl.2} parent=0 // pred_region
    _
  $region33: #{_forward_impl.2} parent=0 // pred_fallthru
    _
  // Predicated region
  $region34: #{_forward_impl.2} parent=0 // pred_check
    _
  $region35: #{_forward_impl.2} parent=0 // pred_check_branch
    %42 = sbr.rel (0) target = $region37
  $region36: #{_forward_impl.2} parent=0 // pred_region
    _
  $region37: #{_forward_impl.2} parent=0 // pred_fallthru
    _
  // Predicated region
  $region38: #{_forward_impl.2} parent=0 // pred_check
    _
  $region39: #{_forward_impl.2} parent=0 // pred_check_branch
    %44 = sbr.rel (0) target = $region41
  $region40: #{_forward_impl.2} parent=0 // pred_region
    _
  $region41: #{_forward_impl.2} parent=0 // pred_fallthru
    _
  // Predicated region
  $region42: #{_forward_impl.2} parent=0 // pred_check
    _
  $region43: #{_forward_impl.2} parent=0 // pred_check_branch
    %46 = sbr.rel (0) target = $region45
  $region44: #{_forward_impl.2} parent=0 // pred_region
    _
  $region45: #{_forward_impl.2} parent=0 // pred_fallthru
    _
  // Predicated region
  $region46: #{_forward_impl.2} parent=0 // pred_check
    _
  $region47: #{_forward_impl.2} parent=0 // pred_check_branch
    %48 = sbr.rel (0) target = $region49
  $region48: #{_forward_impl.2} parent=0 // pred_region
    _
  $region49: #{_forward_impl.2} parent=0 // pred_fallthru
    _
  // Predicated region
  $region50: #{_forward_impl.2} parent=0 // pred_check
    _
  $region51: #{_forward_impl.2} parent=0 // pred_check_branch
    %50 = sbr.rel (0) target = $region53
  $region52: #{_forward_impl.2} parent=0 // pred_region
    _
  $region53: #{_forward_impl.2} parent=0 // pred_fallthru
    _
  // Predicated region
  $region54: #{_forward_impl.2} parent=0 // pred_check
    _
  $region55: #{_forward_impl.2} parent=0 // pred_check_branch
    %52 = sbr.rel (0) target = $region57
  $region56: #{_forward_impl.2} parent=0 // pred_region
    _
  $region57: #{_forward_impl.2} parent=0 // pred_fallthru
    _
  %v54 = vld [vmem:[%s0] sm:$0xff]
  %v55 = vld [vmem:[%s0 + $0x8] sm:$0xff]
  %v56 = vld [vmem:[%s0 + $0x10] sm:$0xff]
  %v57 = vld [vmem:[%s0 + $0x18] sm:$0xff]
  %v58 = vld [vmem:[%s0 + $0x20] sm:$0xff]
  %v59 = vld [vmem:[%s0 + $0x28] sm:$0xff]
  %v60 = vld [vmem:[%s0 + $0x30] sm:$0xff]
  %v61 = vld [vmem:[%s0 + $0x38] sm:$0xff]
  %v62 = vpack.c.bf16 %v55, %v54
  %v63 = vpack.c.bf16 %v57, %v56
  %v64 = vpack.c.bf16 %v59, %v58
  %v65 = vpack.c.bf16 %v61, %v60
  %v66 = vld [vmem:[%s1] sm:$0xf]
  %v67 = vld [vmem:[%s1 + $0x4] sm:$0xf]
  %v68 = vld [vmem:[%s3] sm:$0x1]
  %v70 = vlaneseq
  %v71 = vshrl.u32 %v70, 7
  %v72 = vsub.s32 0, %v71
  %v73 = vrot.slane %v68, %v72
  %v77 = vunpack.c.l.b16 %v66
  %v78 = vunpack.c.l.b16 %v67
  %v79 = vpack.c.b16 %v78, %v77
  %vm81 = vcmask 130048
  %v83 = vsel %vm81, %v62, 0
  %v86 = vsel %vm81, %v63, 0
  %v89 = vsel %vm81, %v64, 0
  %v92 = vsel %vm81, %v65, 0
  %94 = vmatprep.subr.bf16.mxu0 0
  %95 = vmatpush1.bf16.msra.mxu0 0
  %96 = vmatprep.subr.bf16.mxu0 0
  %97 = vmatpush1.bf16.msra.mxu0 0
  %98 = vmatprep.subr.bf16.mxu0 0
  %99 = vmatpush1.bf16.msra.mxu0 0
  %100 = vmatprep.subr.bf16.mxu0 0
  %101 = vmatpush1.bf16.msra.mxu0 0
  %102 = vmatprep.subr.bf16.mxu0 0
  %103 = vmatpush1.bf16.msra.mxu0 0
  %104 = vmatprep.subr.bf16.mxu0 0
  %105 = vmatpush1.bf16.msra.mxu0 0
  %106 = vmatprep.subr.bf16.mxu0 0
  %107 = vmatpush1.bf16.msra.mxu0 0
  %108 = vmatprep.subr.bf16.mxu0 0
  %109 = vmatpush1.bf16.msra.mxu0 %v79
  %110 = vmatprep.subr.bf16.mxu0 0
  %111 = vmatpush2.bf16.msra.mxu0 0
  %112 = vmatprep.subr.bf16.mxu0 0
  %113 = vmatpush2.bf16.msra.mxu0 0
  %114 = vmatprep.subr.bf16.mxu0 0
  %115 = vmatpush2.bf16.msra.mxu0 0
  %116 = vmatprep.subr.bf16.mxu0 0
  %117 = vmatpush2.bf16.msra.mxu0 0
  %118 = vmatprep.subr.bf16.mxu0 0
  %119 = vmatpush2.bf16.msra.mxu0 0
  %120 = vmatprep.subr.bf16.mxu0 0
  %121 = vmatpush2.bf16.msra.mxu0 0
  %122 = vmatprep.subr.bf16.mxu0 0
  %123 = vmatpush2.bf16.msra.mxu0 0
  %124 = vmatprep.subr.bf16.mxu0 0
  %125 = vmatpush2.bf16.msra.mxu0 0
  %126 = vmatprep.mubr.bf16.mxu0 0
  %127 = vmatmul.mubr.bf16.gmra.mxu0 %v83
  %v128 = vpop.f32.mrf.mxu0
  %v129 = vadd.f32 %v73, %v128
  %v130 = vpop.f32.mrf.mxu0
  %v131 = vpop.f32.mrf.mxu0
  %v132 = vadd.f32 %v73, %v131
  %v133 = vpop.f32.mrf.mxu0
  %134 = vmatprep.mubr.bf16.mxu0 0
  %135 = vmatmul.mubr.bf16.gmra.mxu0 %v86
  %v136 = vpop.f32.mrf.mxu0
  %v137 = vadd.f32 %v73, %v136
  %v138 = vpop.f32.mrf.mxu0
  %v139 = vpop.f32.mrf.mxu0
  %v140 = vadd.f32 %v73, %v139
  %v141 = vpop.f32.mrf.mxu0
  %142 = vmatprep.mubr.bf16.mxu0 0
  %143 = vmatmul.mubr.bf16.gmra.mxu0 %v89
  %v144 = vpop.f32.mrf.mxu0
  %v145 = vadd.f32 %v73, %v144
  %v146 = vpop.f32.mrf.mxu0
  %v147 = vpop.f32.mrf.mxu0
  %v148 = vadd.f32 %v73, %v147
  %v149 = vpop.f32.mrf.mxu0
  %150 = vmatprep.mubr.bf16.mxu0 0
  %151 = vmatmul.mubr.bf16.gmra.mxu0 %v92
  %v152 = vpop.f32.mrf.mxu0
  %v153 = vadd.f32 %v73, %v152
  %v154 = vpop.f32.mrf.mxu0
  %v155 = vpop.f32.mrf.mxu0
  %v156 = vadd.f32 %v73, %v155
  %v157 = vpop.f32.mrf.mxu0
  %158 = vdwg.mxu0
  %v159 = vld [vmem:[%s5] sm:$0xf]
  %v160 = vld [vmem:[%s5 + $0x4] sm:$0xf]
  %v161 = vld [vmem:[%s7] sm:$0x1]
  %v163 = vlaneseq
  %v164 = vshrl.u32 %v163, 7
  %v165 = vsub.s32 0, %v164
  %v166 = vrot.slane %v161, %v165
  %v170 = vunpack.c.l.b16 %v159
  %v171 = vunpack.c.l.b16 %v160
  %v172 = vpack.c.b16 %v171, %v170
  %174 = vmatprep.subr.bf16.mxu0 0
  %175 = vmatpush1.bf16.msra.mxu0 0
  %176 = vmatprep.subr.bf16.mxu0 0
  %177 = vmatpush1.bf16.msra.mxu0 0
  %178 = vmatprep.subr.bf16.mxu0 0
  %179 = vmatpush1.bf16.msra.mxu0 0
  %180 = vmatprep.subr.bf16.mxu0 0
  %181 = vmatpush1.bf16.msra.mxu0 0
  %182 = vmatprep.subr.bf16.mxu0 0
  %183 = vmatpush1.bf16.msra.mxu0 0
  %184 = vmatprep.subr.bf16.mxu0 0
  %185 = vmatpush1.bf16.msra.mxu0 0
  %186 = vmatprep.subr.bf16.mxu0 0
  %187 = vmatpush1.bf16.msra.mxu0 0
  %188 = vmatprep.subr.bf16.mxu0 0
  %189 = vmatpush1.bf16.msra.mxu0 %v172
  %190 = vmatprep.subr.bf16.mxu0 0
  %191 = vmatpush2.bf16.msra.mxu0 0
  %192 = vmatprep.subr.bf16.mxu0 0
  %193 = vmatpush2.bf16.msra.mxu0 0
  %194 = vmatprep.subr.bf16.mxu0 0
  %195 = vmatpush2.bf16.msra.mxu0 0
  %196 = vmatprep.subr.bf16.mxu0 0
  %197 = vmatpush2.bf16.msra.mxu0 0
  %198 = vmatprep.subr.bf16.mxu0 0
  %199 = vmatpush2.bf16.msra.mxu0 0
  %200 = vmatprep.subr.bf16.mxu0 0
  %201 = vmatpush2.bf16.msra.mxu0 0
  %202 = vmatprep.subr.bf16.mxu0 0
  %203 = vmatpush2.bf16.msra.mxu0 0
  %204 = vmatprep.subr.bf16.mxu0 0
  %205 = vmatpush2.bf16.msra.mxu0 0
  %206 = vmatprep.mubr.bf16.mxu0 0
  %207 = vmatmul.mubr.bf16.gmra.mxu0 %v83
  %v208 = vpop.f32.mrf.mxu0
  %v209 = vadd.f32 %v166, %v208
  %v210 = vpop.f32.mrf.mxu0
  %v211 = vpop.f32.mrf.mxu0
  %v212 = vadd.f32 %v166, %v211
  %v213 = vpop.f32.mrf.mxu0
  %214 = vmatprep.mubr.bf16.mxu0 0
  %215 = vmatmul.mubr.bf16.gmra.mxu0 %v86
  %v216 = vpop.f32.mrf.mxu0
  %v217 = vadd.f32 %v166, %v216
  %v218 = vpop.f32.mrf.mxu0
  %v219 = vpop.f32.mrf.mxu0
  %v220 = vadd.f32 %v166, %v219
  %v221 = vpop.f32.mrf.mxu0
  %222 = vmatprep.mubr.bf16.mxu0 0
  %223 = vmatmul.mubr.bf16.gmra.mxu0 %v89
  %v224 = vpop.f32.mrf.mxu0
  %v225 = vadd.f32 %v166, %v224
  %v226 = vpop.f32.mrf.mxu0
  %v227 = vpop.f32.mrf.mxu0
  %v228 = vadd.f32 %v166, %v227
  %v229 = vpop.f32.mrf.mxu0
  %230 = vmatprep.mubr.bf16.mxu0 0
  %231 = vmatmul.mubr.bf16.gmra.mxu0 %v92
  %v232 = vpop.f32.mrf.mxu0
  %v233 = vadd.f32 %v166, %v232
  %v234 = vpop.f32.mrf.mxu0
  %v235 = vpop.f32.mrf.mxu0
  %v236 = vadd.f32 %v166, %v235
  %v237 = vpop.f32.mrf.mxu0
  %238 = vdwg.mxu0
  %v239 = vld [vmem:[%s2] sm:$0xf]
  %v240 = vld [vmem:[%s2 + $0x4] sm:$0xf]
  %v241 = vld [vmem:[%s4] sm:$0x1]
  %v242 = vld [vmem:[%s6] sm:$0xf]
  %v243 = vld [vmem:[%s6 + $0x4] sm:$0xf]
  %v244 = vld [vmem:[%s8] sm:$0x1]
  %v246 = vlaneseq
  %v247 = vshrl.u32 %v246, 7
  %v248 = vsub.s32 0, %v247
  %v249 = vrot.slane %v241, %v248
  %v253 = vunpack.c.l.b16 %v239
  %v254 = vunpack.c.l.b16 %v240
  %v255 = vpack.c.b16 %v254, %v253
  %v258 = vsel %vm81, 0, 0
  %260 = vmatprep.subr.bf16.mxu0 0
  %261 = vmatpush1.bf16.msra.mxu0 0
  %262 = vmatprep.subr.bf16.mxu0 0
  %263 = vmatpush1.bf16.msra.mxu0 0
  %264 = vmatprep.subr.bf16.mxu0 0
  %265 = vmatpush1.bf16.msra.mxu0 0
  %266 = vmatprep.subr.bf16.mxu0 0
  %267 = vmatpush1.bf16.msra.mxu0 0
  %268 = vmatprep.subr.bf16.mxu0 0
  %269 = vmatpush1.bf16.msra.mxu0 0
  %270 = vmatprep.subr.bf16.mxu0 0
  %271 = vmatpush1.bf16.msra.mxu0 0
  %272 = vmatprep.subr.bf16.mxu0 0
  %273 = vmatpush1.bf16.msra.mxu0 0
  %274 = vmatprep.subr.bf16.mxu0 0
  %275 = vmatpush1.bf16.msra.mxu0 %v255
  %276 = vmatprep.subr.bf16.mxu0 0
  %277 = vmatpush2.bf16.msra.mxu0 0
  %278 = vmatprep.subr.bf16.mxu0 0
  %279 = vmatpush2.bf16.msra.mxu0 0
  %280 = vmatprep.subr.bf16.mxu0 0
  %281 = vmatpush2.bf16.msra.mxu0 0
  %282 = vmatprep.subr.bf16.mxu0 0
  %283 = vmatpush2.bf16.msra.mxu0 0
  %284 = vmatprep.subr.bf16.mxu0 0
  %285 = vmatpush2.bf16.msra.mxu0 0
  %286 = vmatprep.subr.bf16.mxu0 0
  %287 = vmatpush2.bf16.msra.mxu0 0
  %288 = vmatprep.subr.bf16.mxu0 0
  %289 = vmatpush2.bf16.msra.mxu0 0
  %290 = vmatprep.subr.bf16.mxu0 0
  %291 = vmatpush2.bf16.msra.mxu0 0
  %292 = vmatprep.mubr.bf16.mxu0 0
  %293 = vmatmul.mubr.bf16.gmra.mxu0 %v258
  %v294 = vpop.f32.mrf.mxu0
  %v295 = vadd.f32 %v249, %v294
  %v296 = vpop.f32.mrf.mxu0
  %v297 = vpop.f32.mrf.mxu0
  %v298 = vpop.f32.mrf.mxu0
  %299 = vdwg.mxu0
  %v300 = vadd.f32 %v129, %v295
  %v301 = vxor.u32 %v300, 2147483648
  %v302 = vmul.f32 %v301, 1.442695
  %v303 = vpow.pop %v302
  %v304 = vadd.f32 %v303, 1.0
  %v305 = vrcp.pop %v304
  %v306 = vmul.f32 1.0, %v305
  %308 = vrot.lane.b32.xlu0 %v295, 96
  %v309 = vpop.permute.xlu0 %308
  %v311 = vmul.f32 %v306, %v309
  %313 = vrot.lane.b32.xlu0 %v311, 32
  %v314 = vpop.permute.xlu0 %313
  %v316 = vadd.f32 %v129, %v314
  %v317 = vtanh.pop %v316
  %v318 = vsub.f32 1.0, %v306
  %320 = vrot.lane.b32.xlu0 %v317, 112
  %v321 = vpop.permute.xlu0 %320
  %v323 = vmul.f32 %v318, %v321
  %v324 = vmul.f32 %v306, 0.0
  %v325 = vadd.f32 %v323, %v324
  %327 = vrot.lane.b32.xlu0 %v325, 112
  %v328 = vpop.permute.xlu0 %327
  %330 = vst.msk [vmem:[%s14] sm:$0xff] %vm81, %v328
  %v332 = vlaneseq
  %v333 = vshrl.u32 %v332, 7
  %v334 = vsub.s32 0, %v333
  %v335 = vrot.slane %v244, %v334
  %v339 = vunpack.c.l.b16 %v242
  %v340 = vunpack.c.l.b16 %v243
  %v341 = vpack.c.b16 %v340, %v339
  %343 = vmatprep.subr.bf16.mxu0 0
  %344 = vmatpush1.bf16.msra.mxu0 0
  %345 = vmatprep.subr.bf16.mxu0 0
  %346 = vmatpush1.bf16.msra.mxu0 0
  %347 = vmatprep.subr.bf16.mxu0 0
  %348 = vmatpush1.bf16.msra.mxu0 0
  %349 = vmatprep.subr.bf16.mxu0 0
  %350 = vmatpush1.bf16.msra.mxu0 0
  %351 = vmatprep.subr.bf16.mxu0 0
  %352 = vmatpush1.bf16.msra.mxu0 0
  %353 = vmatprep.subr.bf16.mxu0 0
  %354 = vmatpush1.bf16.msra.mxu0 0
  %355 = vmatprep.subr.bf16.mxu0 0
  %356 = vmatpush1.bf16.msra.mxu0 0
  %357 = vmatprep.subr.bf16.mxu0 0
  %358 = vmatpush1.bf16.msra.mxu0 %v341
  %359 = vmatprep.subr.bf16.mxu0 0
  %360 = vmatpush2.bf16.msra.mxu0 0
  %361 = vmatprep.subr.bf16.mxu0 0
  %362 = vmatpush2.bf16.msra.mxu0 0
  %363 = vmatprep.subr.bf16.mxu0 0
  %364 = vmatpush2.bf16.msra.mxu0 0
  %365 = vmatprep.subr.bf16.mxu0 0
  %366 = vmatpush2.bf16.msra.mxu0 0
  %367 = vmatprep.subr.bf16.mxu0 0
  %368 = vmatpush2.bf16.msra.mxu0 0
  %369 = vmatprep.subr.bf16.mxu0 0
  %370 = vmatpush2.bf16.msra.mxu0 0
  %371 = vmatprep.subr.bf16.mxu0 0
  %372 = vmatpush2.bf16.msra.mxu0 0
  %373 = vmatprep.subr.bf16.mxu0 0
  %374 = vmatpush2.bf16.msra.mxu0 0
  %375 = vmatprep.mubr.bf16.mxu0 0
  %376 = vmatmul.mubr.bf16.gmra.mxu0 %v258
  %v377 = vpop.f32.mrf.mxu0
  %v378 = vadd.f32 %v335, %v377
  %v379 = vpop.f32.mrf.mxu0
  %v380 = vpop.f32.mrf.mxu0
  %v381 = vpop.f32.mrf.mxu0
  %382 = vdwg.mxu0
  %v383 = vadd.f32 %v236, %v378
  %v384 = vxor.u32 %v383, 2147483648
  %v385 = vmul.f32 %v384, 1.442695
  %v386 = vpow.pop %v385
  %v387 = vadd.f32 %v386, 1.0
  %v388 = vrcp.pop %v387
  %v389 = vmul.f32 1.0, %v388
  %391 = vrot.lane.b32.xlu0 %v378, 96
  %v392 = vpop.permute.xlu0 %391
  %v394 = vmul.f32 %v389, %v392
  %396 = vrot.lane.b32.xlu0 %v394, 32
  %v397 = vpop.permute.xlu0 %396
  %v399 = vadd.f32 %v236, %v397
  %v400 = vtanh.pop %v399
  %v401 = vsub.f32 1.0, %v389
  %403 = vrot.lane.b32.xlu0 %v400, 112
  %v404 = vpop.permute.xlu0 %403
  %v406 = vmul.f32 %v401, %v404
  %v407 = vmul.f32 %v389, 0.0
  %v408 = vadd.f32 %v406, %v407
  %410 = vrot.lane.b32.xlu0 %v408, 112
  %v411 = vpop.permute.xlu0 %410
  %s413 = scalar_lea.vmem %s15, 56
  %414 = vst.msk [vmem:[%s413] sm:$0xff] %vm81, %v411
  %v415 = vpack.c.bf16 %v325, %v325
  %417 = vrot.lane.b32.xlu0 %v415, 112
  %v418 = vpop.permute.xlu0 %417
  %v420 = vsel %vm81, %v418, 0
  %422 = vmatprep.subr.bf16.mxu0 0
  %423 = vmatpush1.bf16.msra.mxu0 0
  %424 = vmatprep.subr.bf16.mxu0 0
  %425 = vmatpush1.bf16.msra.mxu0 0
  %426 = vmatprep.subr.bf16.mxu0 0
  %427 = vmatpush1.bf16.msra.mxu0 0
  %428 = vmatprep.subr.bf16.mxu0 0
  %429 = vmatpush1.bf16.msra.mxu0 0
  %430 = vmatprep.subr.bf16.mxu0 0
  %431 = vmatpush1.bf16.msra.mxu0 0
  %432 = vmatprep.subr.bf16.mxu0 0
  %433 = vmatpush1.bf16.msra.mxu0 0
  %434 = vmatprep.subr.bf16.mxu0 0
  %435 = vmatpush1.bf16.msra.mxu0 0
  %436 = vmatprep.subr.bf16.mxu0 0
  %437 = vmatpush1.bf16.msra.mxu0 %v255
  %438 = vmatprep.subr.bf16.mxu0 0
  %439 = vmatpush2.bf16.msra.mxu0 0
  %440 = vmatprep.subr.bf16.mxu0 0
  %441 = vmatpush2.bf16.msra.mxu0 0
  %442 = vmatprep.subr.bf16.mxu0 0
  %443 = vmatpush2.bf16.msra.mxu0 0
  %444 = vmatprep.subr.bf16.mxu0 0
  %445 = vmatpush2.bf16.msra.mxu0 0
  %446 = vmatprep.subr.bf16.mxu0 0
  %447 = vmatpush2.bf16.msra.mxu0 0
  %448 = vmatprep.subr.bf16.mxu0 0
  %449 = vmatpush2.bf16.msra.mxu0 0
  %450 = vmatprep.subr.bf16.mxu0 0
  %451 = vmatpush2.bf16.msra.mxu0 0
  %452 = vmatprep.subr.bf16.mxu0 0
  %453 = vmatpush2.bf16.msra.mxu0 0
  %454 = vmatprep.mubr.bf16.mxu0 0
  %455 = vmatmul.mubr.bf16.gmra.mxu0 %v420
  %v456 = vpop.f32.mrf.mxu0
  %v457 = vadd.f32 %v249, %v456
  %v458 = vpop.f32.mrf.mxu0
  %v459 = vpop.f32.mrf.mxu0
  %v460 = vpop.f32.mrf.mxu0
  %461 = vdwg.mxu0
  %v462 = vadd.f32 %v132, %v457
  %v463 = vxor.u32 %v462, 2147483648
  %v464 = vmul.f32 %v463, 1.442695
  %v465 = vpow.pop %v464
  %v466 = vadd.f32 %v465, 1.0
  %v467 = vrcp.pop %v466
  %v468 = vmul.f32 1.0, %v467
  %470 = vrot.lane.b32.xlu0 %v457, 96
  %v471 = vpop.permute.xlu0 %470
  %v473 = vmul.f32 %v468, %v471
  %475 = vrot.lane.b32.xlu0 %v473, 32
  %v476 = vpop.permute.xlu0 %475
  %v478 = vadd.f32 %v132, %v476
  %v479 = vtanh.pop %v478
  %v480 = vsub.f32 1.0, %v468
  %482 = vrot.lane.b32.xlu0 %v479, 112
  %v483 = vpop.permute.xlu0 %482
  %v485 = vmul.f32 %v480, %v483
  %v486 = vmul.f32 %v468, %v325
  %v487 = vadd.f32 %v485, %v486
  %489 = vrot.lane.b32.xlu0 %v487, 112
  %v490 = vpop.permute.xlu0 %489
  %s492 = scalar_lea.vmem %s14, 8
  %493 = vst.msk [vmem:[%s492] sm:$0xff] %vm81, %v490
  %v494 = vpack.c.bf16 %v408, %v408
  %496 = vrot.lane.b32.xlu0 %v494, 112
  %v497 = vpop.permute.xlu0 %496
  %v499 = vsel %vm81, %v497, 0
  %501 = vmatprep.subr.bf16.mxu0 0
  %502 = vmatpush1.bf16.msra.mxu0 0
  %503 = vmatprep.subr.bf16.mxu0 0
  %504 = vmatpush1.bf16.msra.mxu0 0
  %505 = vmatprep.subr.bf16.mxu0 0
  %506 = vmatpush1.bf16.msra.mxu0 0
  %507 = vmatprep.subr.bf16.mxu0 0
  %508 = vmatpush1.bf16.msra.mxu0 0
  %509 = vmatprep.subr.bf16.mxu0 0
  %510 = vmatpush1.bf16.msra.mxu0 0
  %511 = vmatprep.subr.bf16.mxu0 0
  %512 = vmatpush1.bf16.msra.mxu0 0
  %513 = vmatprep.subr.bf16.mxu0 0
  %514 = vmatpush1.bf16.msra.mxu0 0
  %515 = vmatprep.subr.bf16.mxu0 0
  %516 = vmatpush1.bf16.msra.mxu0 %v341
  %517 = vmatprep.subr.bf16.mxu0 0
  %518 = vmatpush2.bf16.msra.mxu0 0
  %519 = vmatprep.subr.bf16.mxu0 0
  %520 = vmatpush2.bf16.msra.mxu0 0
  %521 = vmatprep.subr.bf16.mxu0 0
  %522 = vmatpush2.bf16.msra.mxu0 0
  %523 = vmatprep.subr.bf16.mxu0 0
  %524 = vmatpush2.bf16.msra.mxu0 0
  %525 = vmatprep.subr.bf16.mxu0 0
  %526 = vmatpush2.bf16.msra.mxu0 0
  %527 = vmatprep.subr.bf16.mxu0 0
  %528 = vmatpush2.bf16.msra.mxu0 0
  %529 = vmatprep.subr.bf16.mxu0 0
  %530 = vmatpush2.bf16.msra.mxu0 0
  %531 = vmatprep.subr.bf16.mxu0 0
  %532 = vmatpush2.bf16.msra.mxu0 0
  %533 = vmatprep.mubr.bf16.mxu0 0
  %534 = vmatmul.mubr.bf16.gmra.mxu0 %v499
  %v535 = vpop.f32.mrf.mxu0
  %v536 = vadd.f32 %v335, %v535
  %v537 = vpop.f32.mrf.mxu0
  %v538 = vpop.f32.mrf.mxu0
  %v539 = vpop.f32.mrf.mxu0
  %540 = vdwg.mxu0
  %v541 = vadd.f32 %v233, %v536
  %v542 = vxor.u32 %v541, 2147483648
  %v543 = vmul.f32 %v542, 1.442695
  %v544 = vpow.pop %v543
  %v545 = vadd.f32 %v544, 1.0
  %v546 = vrcp.pop %v545
  %v547 = vmul.f32 1.0, %v546
  %549 = vrot.lane.b32.xlu0 %v536, 96
  %v550 = vpop.permute.xlu0 %549
  %v552 = vmul.f32 %v547, %v550
  %554 = vrot.lane.b32.xlu0 %v552, 32
  %v555 = vpop.permute.xlu0 %554
  %v557 = vadd.f32 %v233, %v555
  %v558 = vtanh.pop %v557
  %v559 = vsub.f32 1.0, %v547
  %561 = vrot.lane.b32.xlu0 %v558, 112
  %v562 = vpop.permute.xlu0 %561
  %v564 = vmul.f32 %v559, %v562
  %v565 = vmul.f32 %v547, %v408
  %v566 = vadd.f32 %v564, %v565
  %568 = vrot.lane.b32.xlu0 %v566, 112
  %v569 = vpop.permute.xlu0 %568
  %s571 = scalar_lea.vmem %s15, 48
  %572 = vst.msk [vmem:[%s571] sm:$0xff] %vm81, %v569
  %v573 = vpack.c.bf16 %v487, %v487
  %575 = vrot.lane.b32.xlu0 %v573, 112
  %v576 = vpop.permute.xlu0 %575
  %v578 = vsel %vm81, %v576, 0
  %580 = vmatprep.subr.bf16.mxu0 0
  %581 = vmatpush1.bf16.msra.mxu0 0
  %582 = vmatprep.subr.bf16.mxu0 0
  %583 = vmatpush1.bf16.msra.mxu0 0
  %584 = vmatprep.subr.bf16.mxu0 0
  %585 = vmatpush1.bf16.msra.mxu0 0
  %586 = vmatprep.subr.bf16.mxu0 0
  %587 = vmatpush1.bf16.msra.mxu0 0
  %588 = vmatprep.subr.bf16.mxu0 0
  %589 = vmatpush1.bf16.msra.mxu0 0
  %590 = vmatprep.subr.bf16.mxu0 0
  %591 = vmatpush1.bf16.msra.mxu0 0
  %592 = vmatprep.subr.bf16.mxu0 0
  %593 = vmatpush1.bf16.msra.mxu0 0
  %594 = vmatprep.subr.bf16.mxu0 0
  %595 = vmatpush1.bf16.msra.mxu0 %v255
  %596 = vmatprep.subr.bf16.mxu0 0
  %597 = vmatpush2.bf16.msra.mxu0 0
  %598 = vmatprep.subr.bf16.mxu0 0
  %599 = vmatpush2.bf16.msra.mxu0 0
  %600 = vmatprep.subr.bf16.mxu0 0
  %601 = vmatpush2.bf16.msra.mxu0 0
  %602 = vmatprep.subr.bf16.mxu0 0
  %603 = vmatpush2.bf16.msra.mxu0 0
  %604 = vmatprep.subr.bf16.mxu0 0
  %605 = vmatpush2.bf16.msra.mxu0 0
  %606 = vmatprep.subr.bf16.mxu0 0
  %607 = vmatpush2.bf16.msra.mxu0 0
  %608 = vmatprep.subr.bf16.mxu0 0
  %609 = vmatpush2.bf16.msra.mxu0 0
  %610 = vmatprep.subr.bf16.mxu0 0
  %611 = vmatpush2.bf16.msra.mxu0 0
  %612 = vmatprep.mubr.bf16.mxu0 0
  %613 = vmatmul.mubr.bf16.gmra.mxu0 %v578
  %v614 = vpop.f32.mrf.mxu0
  %v615 = vadd.f32 %v249, %v614
  %v616 = vpop.f32.mrf.mxu0
  %v617 = vpop.f32.mrf.mxu0
  %v618 = vpop.f32.mrf.mxu0
  %619 = vdwg.mxu0
  %v620 = vadd.f32 %v137, %v615
  %v621 = vxor.u32 %v620, 2147483648
  %v622 = vmul.f32 %v621, 1.442695
  %v623 = vpow.pop %v622
  %v624 = vadd.f32 %v623, 1.0
  %v625 = vrcp.pop %v624
  %v626 = vmul.f32 1.0, %v625
  %628 = vrot.lane.b32.xlu0 %v615, 96
  %v629 = vpop.permute.xlu0 %628
  %v631 = vmul.f32 %v626, %v629
  %633 = vrot.lane.b32.xlu0 %v631, 32
  %v634 = vpop.permute.xlu0 %633
  %v636 = vadd.f32 %v137, %v634
  %v637 = vtanh.pop %v636
  %v638 = vsub.f32 1.0, %v626
  %640 = vrot.lane.b32.xlu0 %v637, 112
  %v641 = vpop.permute.xlu0 %640
  %v643 = vmul.f32 %v638, %v641
  %v644 = vmul.f32 %v626, %v487
  %v645 = vadd.f32 %v643, %v644
  %647 = vrot.lane.b32.xlu0 %v645, 112
  %v648 = vpop.permute.xlu0 %647
  %s650 = scalar_lea.vmem %s14, 16
  %651 = vst.msk [vmem:[%s650] sm:$0xff] %vm81, %v648
  %v652 = vpack.c.bf16 %v566, %v566
  %654 = vrot.lane.b32.xlu0 %v652, 112
  %v655 = vpop.permute.xlu0 %654
  %v657 = vsel %vm81, %v655, 0
  %659 = vmatprep.subr.bf16.mxu0 0
  %660 = vmatpush1.bf16.msra.mxu0 0
  %661 = vmatprep.subr.bf16.mxu0 0
  %662 = vmatpush1.bf16.msra.mxu0 0
  %663 = vmatprep.subr.bf16.mxu0 0
  %664 = vmatpush1.bf16.msra.mxu0 0
  %665 = vmatprep.subr.bf16.mxu0 0
  %666 = vmatpush1.bf16.msra.mxu0 0
  %667 = vmatprep.subr.bf16.mxu0 0
  %668 = vmatpush1.bf16.msra.mxu0 0
  %669 = vmatprep.subr.bf16.mxu0 0
  %670 = vmatpush1.bf16.msra.mxu0 0
  %671 = vmatprep.subr.bf16.mxu0 0
  %672 = vmatpush1.bf16.msra.mxu0 0
  %673 = vmatprep.subr.bf16.mxu0 0
  %674 = vmatpush1.bf16.msra.mxu0 %v341
  %675 = vmatprep.subr.bf16.mxu0 0
  %676 = vmatpush2.bf16.msra.mxu0 0
  %677 = vmatprep.subr.bf16.mxu0 0
  %678 = vmatpush2.bf16.msra.mxu0 0
  %679 = vmatprep.subr.bf16.mxu0 0
  %680 = vmatpush2.bf16.msra.mxu0 0
  %681 = vmatprep.subr.bf16.mxu0 0
  %682 = vmatpush2.bf16.msra.mxu0 0
  %683 = vmatprep.subr.bf16.mxu0 0
  %684 = vmatpush2.bf16.msra.mxu0 0
  %685 = vmatprep.subr.bf16.mxu0 0
  %686 = vmatpush2.bf16.msra.mxu0 0
  %687 = vmatprep.subr.bf16.mxu0 0
  %688 = vmatpush2.bf16.msra.mxu0 0
  %689 = vmatprep.subr.bf16.mxu0 0
  %690 = vmatpush2.bf16.msra.mxu0 0
  %691 = vmatprep.mubr.bf16.mxu0 0
  %692 = vmatmul.mubr.bf16.gmra.mxu0 %v657
  %v693 = vpop.f32.mrf.mxu0
  %v694 = vadd.f32 %v335, %v693
  %v695 = vpop.f32.mrf.mxu0
  %v696 = vpop.f32.mrf.mxu0
  %v697 = vpop.f32.mrf.mxu0
  %698 = vdwg.mxu0
  %v699 = vadd.f32 %v228, %v694
  %v700 = vxor.u32 %v699, 2147483648
  %v701 = vmul.f32 %v700, 1.442695
  %v702 = vpow.pop %v701
  %v703 = vadd.f32 %v702, 1.0
  %v704 = vrcp.pop %v703
  %v705 = vmul.f32 1.0, %v704
  %707 = vrot.lane.b32.xlu0 %v694, 96
  %v708 = vpop.permute.xlu0 %707
  %v710 = vmul.f32 %v705, %v708
  %712 = vrot.lane.b32.xlu0 %v710, 32
  %v713 = vpop.permute.xlu0 %712
  %v715 = vadd.f32 %v228, %v713
  %v716 = vtanh.pop %v715
  %v717 = vsub.f32 1.0, %v705
  %719 = vrot.lane.b32.xlu0 %v716, 112
  %v720 = vpop.permute.xlu0 %719
  %v722 = vmul.f32 %v717, %v720
  %v723 = vmul.f32 %v705, %v566
  %v724 = vadd.f32 %v722, %v723
  %726 = vrot.lane.b32.xlu0 %v724, 112
  %v727 = vpop.permute.xlu0 %726
  %s729 = scalar_lea.vmem %s15, 40
  %730 = vst.msk [vmem:[%s729] sm:$0xff] %vm81, %v727
  %v731 = vpack.c.bf16 %v645, %v645
  %733 = vrot.lane.b32.xlu0 %v731, 112
  %v734 = vpop.permute.xlu0 %733
  %v736 = vsel %vm81, %v734, 0
  %738 = vmatprep.subr.bf16.mxu0 0
  %739 = vmatpush1.bf16.msra.mxu0 0
  %740 = vmatprep.subr.bf16.mxu0 0
  %741 = vmatpush1.bf16.msra.mxu0 0
  %742 = vmatprep.subr.bf16.mxu0 0
  %743 = vmatpush1.bf16.msra.mxu0 0
  %744 = vmatprep.subr.bf16.mxu0 0
  %745 = vmatpush1.bf16.msra.mxu0 0
  %746 = vmatprep.subr.bf16.mxu0 0
  %747 = vmatpush1.bf16.msra.mxu0 0
  %748 = vmatprep.subr.bf16.mxu0 0
  %749 = vmatpush1.bf16.msra.mxu0 0
  %750 = vmatprep.subr.bf16.mxu0 0
  %751 = vmatpush1.bf16.msra.mxu0 0
  %752 = vmatprep.subr.bf16.mxu0 0
  %753 = vmatpush1.bf16.msra.mxu0 %v255
  %754 = vmatprep.subr.bf16.mxu0 0
  %755 = vmatpush2.bf16.msra.mxu0 0
  %756 = vmatprep.subr.bf16.mxu0 0
  %757 = vmatpush2.bf16.msra.mxu0 0
  %758 = vmatprep.subr.bf16.mxu0 0
  %759 = vmatpush2.bf16.msra.mxu0 0
  %760 = vmatprep.subr.bf16.mxu0 0
  %761 = vmatpush2.bf16.msra.mxu0 0
  %762 = vmatprep.subr.bf16.mxu0 0
  %763 = vmatpush2.bf16.msra.mxu0 0
  %764 = vmatprep.subr.bf16.mxu0 0
  %765 = vmatpush2.bf16.msra.mxu0 0
  %766 = vmatprep.subr.bf16.mxu0 0
  %767 = vmatpush2.bf16.msra.mxu0 0
  %768 = vmatprep.subr.bf16.mxu0 0
  %769 = vmatpush2.bf16.msra.mxu0 0
  %770 = vmatprep.mubr.bf16.mxu0 0
  %771 = vmatmul.mubr.bf16.gmra.mxu0 %v736
  %v772 = vpop.f32.mrf.mxu0
  %v773 = vadd.f32 %v249, %v772
  %v774 = vpop.f32.mrf.mxu0
  %v775 = vpop.f32.mrf.mxu0
  %v776 = vpop.f32.mrf.mxu0
  %777 = vdwg.mxu0
  %v778 = vadd.f32 %v140, %v773
  %v779 = vxor.u32 %v778, 2147483648
  %v780 = vmul.f32 %v779, 1.442695
  %v781 = vpow.pop %v780
  %v782 = vadd.f32 %v781, 1.0
  %v783 = vrcp.pop %v782
  %v784 = vmul.f32 1.0, %v783
  %786 = vrot.lane.b32.xlu0 %v773, 96
  %v787 = vpop.permute.xlu0 %786
  %v789 = vmul.f32 %v784, %v787
  %791 = vrot.lane.b32.xlu0 %v789, 32
  %v792 = vpop.permute.xlu0 %791
  %v794 = vadd.f32 %v140, %v792
  %v795 = vtanh.pop %v794
  %v796 = vsub.f32 1.0, %v784
  %798 = vrot.lane.b32.xlu0 %v795, 112
  %v799 = vpop.permute.xlu0 %798
  %v801 = vmul.f32 %v796, %v799
  %v802 = vmul.f32 %v784, %v645
  %v803 = vadd.f32 %v801, %v802
  %805 = vrot.lane.b32.xlu0 %v803, 112
  %v806 = vpop.permute.xlu0 %805
  %s808 = scalar_lea.vmem %s14, 24
  %809 = vst.msk [vmem:[%s808] sm:$0xff] %vm81, %v806
  %v810 = vpack.c.bf16 %v724, %v724
  %812 = vrot.lane.b32.xlu0 %v810, 112
  %v813 = vpop.permute.xlu0 %812
  %v815 = vsel %vm81, %v813, 0
  %817 = vmatprep.subr.bf16.mxu0 0
  %818 = vmatpush1.bf16.msra.mxu0 0
  %819 = vmatprep.subr.bf16.mxu0 0
  %820 = vmatpush1.bf16.msra.mxu0 0
  %821 = vmatprep.subr.bf16.mxu0 0
  %822 = vmatpush1.bf16.msra.mxu0 0
  %823 = vmatprep.subr.bf16.mxu0 0
  %824 = vmatpush1.bf16.msra.mxu0 0
  %825 = vmatprep.subr.bf16.mxu0 0
  %826 = vmatpush1.bf16.msra.mxu0 0
  %827 = vmatprep.subr.bf16.mxu0 0
  %828 = vmatpush1.bf16.msra.mxu0 0
  %829 = vmatprep.subr.bf16.mxu0 0
  %830 = vmatpush1.bf16.msra.mxu0 0
  %831 = vmatprep.subr.bf16.mxu0 0
  %832 = vmatpush1.bf16.msra.mxu0 %v341
  %833 = vmatprep.subr.bf16.mxu0 0
  %834 = vmatpush2.bf16.msra.mxu0 0
  %835 = vmatprep.subr.bf16.mxu0 0
  %836 = vmatpush2.bf16.msra.mxu0 0
  %837 = vmatprep.subr.bf16.mxu0 0
  %838 = vmatpush2.bf16.msra.mxu0 0
  %839 = vmatprep.subr.bf16.mxu0 0
  %840 = vmatpush2.bf16.msra.mxu0 0
  %841 = vmatprep.subr.bf16.mxu0 0
  %842 = vmatpush2.bf16.msra.mxu0 0
  %843 = vmatprep.subr.bf16.mxu0 0
  %844 = vmatpush2.bf16.msra.mxu0 0
  %845 = vmatprep.subr.bf16.mxu0 0
  %846 = vmatpush2.bf16.msra.mxu0 0
  %847 = vmatprep.subr.bf16.mxu0 0
  %848 = vmatpush2.bf16.msra.mxu0 0
  %849 = vmatprep.mubr.bf16.mxu0 0
  %850 = vmatmul.mubr.bf16.gmra.mxu0 %v815
  %v851 = vpop.f32.mrf.mxu0
  %v852 = vadd.f32 %v335, %v851
  %v853 = vpop.f32.mrf.mxu0
  %v854 = vpop.f32.mrf.mxu0
  %v855 = vpop.f32.mrf.mxu0
  %856 = vdwg.mxu0
  %v857 = vadd.f32 %v225, %v852
  %v858 = vxor.u32 %v857, 2147483648
  %v859 = vmul.f32 %v858, 1.442695
  %v860 = vpow.pop %v859
  %v861 = vadd.f32 %v860, 1.0
  %v862 = vrcp.pop %v861
  %v863 = vmul.f32 1.0, %v862
  %865 = vrot.lane.b32.xlu0 %v852, 96
  %v866 = vpop.permute.xlu0 %865
  %v868 = vmul.f32 %v863, %v866
  %870 = vrot.lane.b32.xlu0 %v868, 32
  %v871 = vpop.permute.xlu0 %870
  %v873 = vadd.f32 %v225, %v871
  %v874 = vtanh.pop %v873
  %v875 = vsub.f32 1.0, %v863
  %877 = vrot.lane.b32.xlu0 %v874, 112
  %v878 = vpop.permute.xlu0 %877
  %v880 = vmul.f32 %v875, %v878
  %v881 = vmul.f32 %v863, %v724
  %v882 = vadd.f32 %v880, %v881
  %884 = vrot.lane.b32.xlu0 %v882, 112
  %v885 = vpop.permute.xlu0 %884
  %s887 = scalar_lea.vmem %s15, 32
  %888 = vst.msk [vmem:[%s887] sm:$0xff] %vm81, %v885
  %v889 = vpack.c.bf16 %v803, %v803
  %891 = vrot.lane.b32.xlu0 %v889, 112
  %v892 = vpop.permute.xlu0 %891
  %v894 = vsel %vm81, %v892, 0
  %896 = vmatprep.subr.bf16.mxu0 0
  %897 = vmatpush1.bf16.msra.mxu0 0
  %898 = vmatprep.subr.bf16.mxu0 0
  %899 = vmatpush1.bf16.msra.mxu0 0
  %900 = vmatprep.subr.bf16.mxu0 0
  %901 = vmatpush1.bf16.msra.mxu0 0
  %902 = vmatprep.subr.bf16.mxu0 0
  %903 = vmatpush1.bf16.msra.mxu0 0
  %904 = vmatprep.subr.bf16.mxu0 0
  %905 = vmatpush1.bf16.msra.mxu0 0
  %906 = vmatprep.subr.bf16.mxu0 0
  %907 = vmatpush1.bf16.msra.mxu0 0
  %908 = vmatprep.subr.bf16.mxu0 0
  %909 = vmatpush1.bf16.msra.mxu0 0
  %910 = vmatprep.subr.bf16.mxu0 0
  %911 = vmatpush1.bf16.msra.mxu0 %v255
  %912 = vmatprep.subr.bf16.mxu0 0
  %913 = vmatpush2.bf16.msra.mxu0 0
  %914 = vmatprep.subr.bf16.mxu0 0
  %915 = vmatpush2.bf16.msra.mxu0 0
  %916 = vmatprep.subr.bf16.mxu0 0
  %917 = vmatpush2.bf16.msra.mxu0 0
  %918 = vmatprep.subr.bf16.mxu0 0
  %919 = vmatpush2.bf16.msra.mxu0 0
  %920 = vmatprep.subr.bf16.mxu0 0
  %921 = vmatpush2.bf16.msra.mxu0 0
  %922 = vmatprep.subr.bf16.mxu0 0
  %923 = vmatpush2.bf16.msra.mxu0 0
  %924 = vmatprep.subr.bf16.mxu0 0
  %925 = vmatpush2.bf16.msra.mxu0 0
  %926 = vmatprep.subr.bf16.mxu0 0
  %927 = vmatpush2.bf16.msra.mxu0 0
  %928 = vmatprep.mubr.bf16.mxu0 0
  %929 = vmatmul.mubr.bf16.gmra.mxu0 %v894
  %v930 = vpop.f32.mrf.mxu0
  %v931 = vadd.f32 %v249, %v930
  %v932 = vpop.f32.mrf.mxu0
  %v933 = vpop.f32.mrf.mxu0
  %v934 = vpop.f32.mrf.mxu0
  %935 = vdwg.mxu0
  %v936 = vadd.f32 %v145, %v931
  %v937 = vxor.u32 %v936, 2147483648
  %v938 = vmul.f32 %v937, 1.442695
  %v939 = vpow.pop %v938
  %v940 = vadd.f32 %v939, 1.0
  %v941 = vrcp.pop %v940
  %v942 = vmul.f32 1.0, %v941
  %944 = vrot.lane.b32.xlu0 %v931, 96
  %v945 = vpop.permute.xlu0 %944
  %v947 = vmul.f32 %v942, %v945
  %949 = vrot.lane.b32.xlu0 %v947, 32
  %v950 = vpop.permute.xlu0 %949
  %v952 = vadd.f32 %v145, %v950
  %v953 = vtanh.pop %v952
  %v954 = vsub.f32 1.0, %v942
  %956 = vrot.lane.b32.xlu0 %v953, 112
  %v957 = vpop.permute.xlu0 %956
  %v959 = vmul.f32 %v954, %v957
  %v960 = vmul.f32 %v942, %v803
  %v961 = vadd.f32 %v959, %v960
  %963 = vrot.lane.b32.xlu0 %v961, 112
  %v964 = vpop.permute.xlu0 %963
  %s966 = scalar_lea.vmem %s14, 32
  %967 = vst.msk [vmem:[%s966] sm:$0xff] %vm81, %v964
  %v968 = vpack.c.bf16 %v882, %v882
  %970 = vrot.lane.b32.xlu0 %v968, 112
  %v971 = vpop.permute.xlu0 %970
  %v973 = vsel %vm81, %v971, 0
  %975 = vmatprep.subr.bf16.mxu0 0
  %976 = vmatpush1.bf16.msra.mxu0 0
  %977 = vmatprep.subr.bf16.mxu0 0
  %978 = vmatpush1.bf16.msra.mxu0 0
  %979 = vmatprep.subr.bf16.mxu0 0
  %980 = vmatpush1.bf16.msra.mxu0 0
  %981 = vmatprep.subr.bf16.mxu0 0
  %982 = vmatpush1.bf16.msra.mxu0 0
  %983 = vmatprep.subr.bf16.mxu0 0
  %984 = vmatpush1.bf16.msra.mxu0 0
  %985 = vmatprep.subr.bf16.mxu0 0
  %986 = vmatpush1.bf16.msra.mxu0 0
  %987 = vmatprep.subr.bf16.mxu0 0
  %988 = vmatpush1.bf16.msra.mxu0 0
  %989 = vmatprep.subr.bf16.mxu0 0
  %990 = vmatpush1.bf16.msra.mxu0 %v341
  %991 = vmatprep.subr.bf16.mxu0 0
  %992 = vmatpush2.bf16.msra.mxu0 0
  %993 = vmatprep.subr.bf16.mxu0 0
  %994 = vmatpush2.bf16.msra.mxu0 0
  %995 = vmatprep.subr.bf16.mxu0 0
  %996 = vmatpush2.bf16.msra.mxu0 0
  %997 = vmatprep.subr.bf16.mxu0 0
  %998 = vmatpush2.bf16.msra.mxu0 0
  %999 = vmatprep.subr.bf16.mxu0 0
  %1000 = vmatpush2.bf16.msra.mxu0 0
  %1001 = vmatprep.subr.bf16.mxu0 0
  %1002 = vmatpush2.bf16.msra.mxu0 0
  %1003 = vmatprep.subr.bf16.mxu0 0
  %1004 = vmatpush2.bf16.msra.mxu0 0
  %1005 = vmatprep.subr.bf16.mxu0 0
  %1006 = vmatpush2.bf16.msra.mxu0 0
  %1007 = vmatprep.mubr.bf16.mxu0 0
  %1008 = vmatmul.mubr.bf16.gmra.mxu0 %v973
  %v1009 = vpop.f32.mrf.mxu0
  %v1010 = vadd.f32 %v335, %v1009
  %v1011 = vpop.f32.mrf.mxu0
  %v1012 = vpop.f32.mrf.mxu0
  %v1013 = vpop.f32.mrf.mxu0
  %1014 = vdwg.mxu0
  %v1015 = vadd.f32 %v220, %v1010
  %v1016 = vxor.u32 %v1015, 2147483648
  %v1017 = vmul.f32 %v1016, 1.442695
  %v1018 = vpow.pop %v1017
  %v1019 = vadd.f32 %v1018, 1.0
  %v1020 = vrcp.pop %v1019
  %v1021 = vmul.f32 1.0, %v1020
  %1023 = vrot.lane.b32.xlu0 %v1010, 96
  %v1024 = vpop.permute.xlu0 %1023
  %v1026 = vmul.f32 %v1021, %v1024
  %1028 = vrot.lane.b32.xlu0 %v1026, 32
  %v1029 = vpop.permute.xlu0 %1028
  %v1031 = vadd.f32 %v220, %v1029
  %v1032 = vtanh.pop %v1031
  %v1033 = vsub.f32 1.0, %v1021
  %1035 = vrot.lane.b32.xlu0 %v1032, 112
  %v1036 = vpop.permute.xlu0 %1035
  %v1038 = vmul.f32 %v1033, %v1036
  %v1039 = vmul.f32 %v1021, %v882
  %v1040 = vadd.f32 %v1038, %v1039
  %1042 = vrot.lane.b32.xlu0 %v1040, 112
  %v1043 = vpop.permute.xlu0 %1042
  %s1045 = scalar_lea.vmem %s15, 24
  %1046 = vst.msk [vmem:[%s1045] sm:$0xff] %vm81, %v1043
  %v1047 = vpack.c.bf16 %v961, %v961
  %1049 = vrot.lane.b32.xlu0 %v1047, 112
  %v1050 = vpop.permute.xlu0 %1049
  %v1052 = vsel %vm81, %v1050, 0
  %1054 = vmatprep.subr.bf16.mxu0 0
  %1055 = vmatpush1.bf16.msra.mxu0 0
  %1056 = vmatprep.subr.bf16.mxu0 0
  %1057 = vmatpush1.bf16.msra.mxu0 0
  %1058 = vmatprep.subr.bf16.mxu0 0
  %1059 = vmatpush1.bf16.msra.mxu0 0
  %1060 = vmatprep.subr.bf16.mxu0 0
  %1061 = vmatpush1.bf16.msra.mxu0 0
  %1062 = vmatprep.subr.bf16.mxu0 0
  %1063 = vmatpush1.bf16.msra.mxu0 0
  %1064 = vmatprep.subr.bf16.mxu0 0
  %1065 = vmatpush1.bf16.msra.mxu0 0
  %1066 = vmatprep.subr.bf16.mxu0 0
  %1067 = vmatpush1.bf16.msra.mxu0 0
  %1068 = vmatprep.subr.bf16.mxu0 0
  %1069 = vmatpush1.bf16.msra.mxu0 %v255
  %1070 = vmatprep.subr.bf16.mxu0 0
  %1071 = vmatpush2.bf16.msra.mxu0 0
  %1072 = vmatprep.subr.bf16.mxu0 0
  %1073 = vmatpush2.bf16.msra.mxu0 0
  %1074 = vmatprep.subr.bf16.mxu0 0
  %1075 = vmatpush2.bf16.msra.mxu0 0
  %1076 = vmatprep.subr.bf16.mxu0 0
  %1077 = vmatpush2.bf16.msra.mxu0 0
  %1078 = vmatprep.subr.bf16.mxu0 0
  %1079 = vmatpush2.bf16.msra.mxu0 0
  %1080 = vmatprep.subr.bf16.mxu0 0
  %1081 = vmatpush2.bf16.msra.mxu0 0
  %1082 = vmatprep.subr.bf16.mxu0 0
  %1083 = vmatpush2.bf16.msra.mxu0 0
  %1084 = vmatprep.subr.bf16.mxu0 0
  %1085 = vmatpush2.bf16.msra.mxu0 0
  %1086 = vmatprep.mubr.bf16.mxu0 0
  %1087 = vmatmul.mubr.bf16.gmra.mxu0 %v1052
  %v1088 = vpop.f32.mrf.mxu0
  %v1089 = vadd.f32 %v249, %v1088
  %v1090 = vpop.f32.mrf.mxu0
  %v1091 = vpop.f32.mrf.mxu0
  %v1092 = vpop.f32.mrf.mxu0
  %1093 = vdwg.mxu0
  %v1094 = vadd.f32 %v148, %v1089
  %v1095 = vxor.u32 %v1094, 2147483648
  %v1096 = vmul.f32 %v1095, 1.442695
  %v1097 = vpow.pop %v1096
  %v1098 = vadd.f32 %v1097, 1.0
  %v1099 = vrcp.pop %v1098
  %v1100 = vmul.f32 1.0, %v1099
  %1102 = vrot.lane.b32.xlu0 %v1089, 96
  %v1103 = vpop.permute.xlu0 %1102
  %v1105 = vmul.f32 %v1100, %v1103
  %1107 = vrot.lane.b32.xlu0 %v1105, 32
  %v1108 = vpop.permute.xlu0 %1107
  %v1110 = vadd.f32 %v148, %v1108
  %v1111 = vtanh.pop %v1110
  %v1112 = vsub.f32 1.0, %v1100
  %1114 = vrot.lane.b32.xlu0 %v1111, 112
  %v1115 = vpop.permute.xlu0 %1114
  %v1117 = vmul.f32 %v1112, %v1115
  %v1118 = vmul.f32 %v1100, %v961
  %v1119 = vadd.f32 %v1117, %v1118
  %1121 = vrot.lane.b32.xlu0 %v1119, 112
  %v1122 = vpop.permute.xlu0 %1121
  %s1124 = scalar_lea.vmem %s14, 40
  %1125 = vst.msk [vmem:[%s1124] sm:$0xff] %vm81, %v1122
  %v1126 = vpack.c.bf16 %v1040, %v1040
  %1128 = vrot.lane.b32.xlu0 %v1126, 112
  %v1129 = vpop.permute.xlu0 %1128
  %v1131 = vsel %vm81, %v1129, 0
  %1133 = vmatprep.subr.bf16.mxu0 0
  %1134 = vmatpush1.bf16.msra.mxu0 0
  %1135 = vmatprep.subr.bf16.mxu0 0
  %1136 = vmatpush1.bf16.msra.mxu0 0
  %1137 = vmatprep.subr.bf16.mxu0 0
  %1138 = vmatpush1.bf16.msra.mxu0 0
  %1139 = vmatprep.subr.bf16.mxu0 0
  %1140 = vmatpush1.bf16.msra.mxu0 0
  %1141 = vmatprep.subr.bf16.mxu0 0
  %1142 = vmatpush1.bf16.msra.mxu0 0
  %1143 = vmatprep.subr.bf16.mxu0 0
  %1144 = vmatpush1.bf16.msra.mxu0 0
  %1145 = vmatprep.subr.bf16.mxu0 0
  %1146 = vmatpush1.bf16.msra.mxu0 0
  %1147 = vmatprep.subr.bf16.mxu0 0
  %1148 = vmatpush1.bf16.msra.mxu0 %v341
  %1149 = vmatprep.subr.bf16.mxu0 0
  %1150 = vmatpush2.bf16.msra.mxu0 0
  %1151 = vmatprep.subr.bf16.mxu0 0
  %1152 = vmatpush2.bf16.msra.mxu0 0
  %1153 = vmatprep.subr.bf16.mxu0 0
  %1154 = vmatpush2.bf16.msra.mxu0 0
  %1155 = vmatprep.subr.bf16.mxu0 0
  %1156 = vmatpush2.bf16.msra.mxu0 0
  %1157 = vmatprep.subr.bf16.mxu0 0
  %1158 = vmatpush2.bf16.msra.mxu0 0
  %1159 = vmatprep.subr.bf16.mxu0 0
  %1160 = vmatpush2.bf16.msra.mxu0 0
  %1161 = vmatprep.subr.bf16.mxu0 0
  %1162 = vmatpush2.bf16.msra.mxu0 0
  %1163 = vmatprep.subr.bf16.mxu0 0
  %1164 = vmatpush2.bf16.msra.mxu0 0
  %1165 = vmatprep.mubr.bf16.mxu0 0
  %1166 = vmatmul.mubr.bf16.gmra.mxu0 %v1131
  %v1167 = vpop.f32.mrf.mxu0
  %v1168 = vadd.f32 %v335, %v1167
  %v1169 = vpop.f32.mrf.mxu0
  %v1170 = vpop.f32.mrf.mxu0
  %v1171 = vpop.f32.mrf.mxu0
  %1172 = vdwg.mxu0
  %v1173 = vadd.f32 %v217, %v1168
  %v1174 = vxor.u32 %v1173, 2147483648
  %v1175 = vmul.f32 %v1174, 1.442695
  %v1176 = vpow.pop %v1175
  %v1177 = vadd.f32 %v1176, 1.0
  %v1178 = vrcp.pop %v1177
  %v1179 = vmul.f32 1.0, %v1178
  %1181 = vrot.lane.b32.xlu0 %v1168, 96
  %v1182 = vpop.permute.xlu0 %1181
  %v1184 = vmul.f32 %v1179, %v1182
  %1186 = vrot.lane.b32.xlu0 %v1184, 32
  %v1187 = vpop.permute.xlu0 %1186
  %v1189 = vadd.f32 %v217, %v1187
  %v1190 = vtanh.pop %v1189
  %v1191 = vsub.f32 1.0, %v1179
  %1193 = vrot.lane.b32.xlu0 %v1190, 112
  %v1194 = vpop.permute.xlu0 %1193
  %v1196 = vmul.f32 %v1191, %v1194
  %v1197 = vmul.f32 %v1179, %v1040
  %v1198 = vadd.f32 %v1196, %v1197
  %1200 = vrot.lane.b32.xlu0 %v1198, 112
  %v1201 = vpop.permute.xlu0 %1200
  %s1203 = scalar_lea.vmem %s15, 16
  %1204 = vst.msk [vmem:[%s1203] sm:$0xff] %vm81, %v1201
  %v1205 = vpack.c.bf16 %v1119, %v1119
  %1207 = vrot.lane.b32.xlu0 %v1205, 112
  %v1208 = vpop.permute.xlu0 %1207
  %v1210 = vsel %vm81, %v1208, 0
  %1212 = vmatprep.subr.bf16.mxu0 0
  %1213 = vmatpush1.bf16.msra.mxu0 0
  %1214 = vmatprep.subr.bf16.mxu0 0
  %1215 = vmatpush1.bf16.msra.mxu0 0
  %1216 = vmatprep.subr.bf16.mxu0 0
  %1217 = vmatpush1.bf16.msra.mxu0 0
  %1218 = vmatprep.subr.bf16.mxu0 0
  %1219 = vmatpush1.bf16.msra.mxu0 0
  %1220 = vmatprep.subr.bf16.mxu0 0
  %1221 = vmatpush1.bf16.msra.mxu0 0
  %1222 = vmatprep.subr.bf16.mxu0 0
  %1223 = vmatpush1.bf16.msra.mxu0 0
  %1224 = vmatprep.subr.bf16.mxu0 0
  %1225 = vmatpush1.bf16.msra.mxu0 0
  %1226 = vmatprep.subr.bf16.mxu0 0
  %1227 = vmatpush1.bf16.msra.mxu0 %v255
  %1228 = vmatprep.subr.bf16.mxu0 0
  %1229 = vmatpush2.bf16.msra.mxu0 0
  %1230 = vmatprep.subr.bf16.mxu0 0
  %1231 = vmatpush2.bf16.msra.mxu0 0
  %1232 = vmatprep.subr.bf16.mxu0 0
  %1233 = vmatpush2.bf16.msra.mxu0 0
  %1234 = vmatprep.subr.bf16.mxu0 0
  %1235 = vmatpush2.bf16.msra.mxu0 0
  %1236 = vmatprep.subr.bf16.mxu0 0
  %1237 = vmatpush2.bf16.msra.mxu0 0
  %1238 = vmatprep.subr.bf16.mxu0 0
  %1239 = vmatpush2.bf16.msra.mxu0 0
  %1240 = vmatprep.subr.bf16.mxu0 0
  %1241 = vmatpush2.bf16.msra.mxu0 0
  %1242 = vmatprep.subr.bf16.mxu0 0
  %1243 = vmatpush2.bf16.msra.mxu0 0
  %1244 = vmatprep.mubr.bf16.mxu0 0
  %1245 = vmatmul.mubr.bf16.gmra.mxu0 %v1210
  %v1246 = vpop.f32.mrf.mxu0
  %v1247 = vadd.f32 %v249, %v1246
  %v1248 = vpop.f32.mrf.mxu0
  %v1249 = vpop.f32.mrf.mxu0
  %v1250 = vpop.f32.mrf.mxu0
  %1251 = vdwg.mxu0
  %v1252 = vadd.f32 %v153, %v1247
  %v1253 = vxor.u32 %v1252, 2147483648
  %v1254 = vmul.f32 %v1253, 1.442695
  %v1255 = vpow.pop %v1254
  %v1256 = vadd.f32 %v1255, 1.0
  %v1257 = vrcp.pop %v1256
  %v1258 = vmul.f32 1.0, %v1257
  %1260 = vrot.lane.b32.xlu0 %v1247, 96
  %v1261 = vpop.permute.xlu0 %1260
  %v1263 = vmul.f32 %v1258, %v1261
  %1265 = vrot.lane.b32.xlu0 %v1263, 32
  %v1266 = vpop.permute.xlu0 %1265
  %v1268 = vadd.f32 %v153, %v1266
  %v1269 = vtanh.pop %v1268
  %v1270 = vsub.f32 1.0, %v1258
  %1272 = vrot.lane.b32.xlu0 %v1269, 112
  %v1273 = vpop.permute.xlu0 %1272
  %v1275 = vmul.f32 %v1270, %v1273
  %v1276 = vmul.f32 %v1258, %v1119
  %v1277 = vadd.f32 %v1275, %v1276
  %1279 = vrot.lane.b32.xlu0 %v1277, 112
  %v1280 = vpop.permute.xlu0 %1279
  %s1282 = scalar_lea.vmem %s14, 48
  %1283 = vst.msk [vmem:[%s1282] sm:$0xff] %vm81, %v1280
  %v1284 = vpack.c.bf16 %v1198, %v1198
  %1286 = vrot.lane.b32.xlu0 %v1284, 112
  %v1287 = vpop.permute.xlu0 %1286
  %v1289 = vsel %vm81, %v1287, 0
  %1291 = vmatprep.subr.bf16.mxu0 0
  %1292 = vmatpush1.bf16.msra.mxu0 0
  %1293 = vmatprep.subr.bf16.mxu0 0
  %1294 = vmatpush1.bf16.msra.mxu0 0
  %1295 = vmatprep.subr.bf16.mxu0 0
  %1296 = vmatpush1.bf16.msra.mxu0 0
  %1297 = vmatprep.subr.bf16.mxu0 0
  %1298 = vmatpush1.bf16.msra.mxu0 0
  %1299 = vmatprep.subr.bf16.mxu0 0
  %1300 = vmatpush1.bf16.msra.mxu0 0
  %1301 = vmatprep.subr.bf16.mxu0 0
  %1302 = vmatpush1.bf16.msra.mxu0 0
  %1303 = vmatprep.subr.bf16.mxu0 0
  %1304 = vmatpush1.bf16.msra.mxu0 0
  %1305 = vmatprep.subr.bf16.mxu0 0
  %1306 = vmatpush1.bf16.msra.mxu0 %v341
  %1307 = vmatprep.subr.bf16.mxu0 0
  %1308 = vmatpush2.bf16.msra.mxu0 0
  %1309 = vmatprep.subr.bf16.mxu0 0
  %1310 = vmatpush2.bf16.msra.mxu0 0
  %1311 = vmatprep.subr.bf16.mxu0 0
  %1312 = vmatpush2.bf16.msra.mxu0 0
  %1313 = vmatprep.subr.bf16.mxu0 0
  %1314 = vmatpush2.bf16.msra.mxu0 0
  %1315 = vmatprep.subr.bf16.mxu0 0
  %1316 = vmatpush2.bf16.msra.mxu0 0
  %1317 = vmatprep.subr.bf16.mxu0 0
  %1318 = vmatpush2.bf16.msra.mxu0 0
  %1319 = vmatprep.subr.bf16.mxu0 0
  %1320 = vmatpush2.bf16.msra.mxu0 0
  %1321 = vmatprep.subr.bf16.mxu0 0
  %1322 = vmatpush2.bf16.msra.mxu0 0
  %1323 = vmatprep.mubr.bf16.mxu0 0
  %1324 = vmatmul.mubr.bf16.gmra.mxu0 %v1289
  %v1325 = vpop.f32.mrf.mxu0
  %v1326 = vadd.f32 %v335, %v1325
  %v1327 = vpop.f32.mrf.mxu0
  %v1328 = vpop.f32.mrf.mxu0
  %v1329 = vpop.f32.mrf.mxu0
  %1330 = vdwg.mxu0
  %v1331 = vadd.f32 %v212, %v1326
  %v1332 = vxor.u32 %v1331, 2147483648
  %v1333 = vmul.f32 %v1332, 1.442695
  %v1334 = vpow.pop %v1333
  %v1335 = vadd.f32 %v1334, 1.0
  %v1336 = vrcp.pop %v1335
  %v1337 = vmul.f32 1.0, %v1336
  %1339 = vrot.lane.b32.xlu0 %v1326, 96
  %v1340 = vpop.permute.xlu0 %1339
  %v1342 = vmul.f32 %v1337, %v1340
  %1344 = vrot.lane.b32.xlu0 %v1342, 32
  %v1345 = vpop.permute.xlu0 %1344
  %v1347 = vadd.f32 %v212, %v1345
  %v1348 = vtanh.pop %v1347
  %v1349 = vsub.f32 1.0, %v1337
  %1351 = vrot.lane.b32.xlu0 %v1348, 112
  %v1352 = vpop.permute.xlu0 %1351
  %v1354 = vmul.f32 %v1349, %v1352
  %v1355 = vmul.f32 %v1337, %v1198
  %v1356 = vadd.f32 %v1354, %v1355
  %1358 = vrot.lane.b32.xlu0 %v1356, 112
  %v1359 = vpop.permute.xlu0 %1358
  %s1361 = scalar_lea.vmem %s15, 8
  %1362 = vst.msk [vmem:[%s1361] sm:$0xff] %vm81, %v1359
  %v1363 = vpack.c.bf16 %v1277, %v1277
  %1365 = vrot.lane.b32.xlu0 %v1363, 112
  %v1366 = vpop.permute.xlu0 %1365
  %v1368 = vsel %vm81, %v1366, 0
  %1370 = vmatprep.subr.bf16.mxu0 0
  %1371 = vmatpush1.bf16.msra.mxu0 0
  %1372 = vmatprep.subr.bf16.mxu0 0
  %1373 = vmatpush1.bf16.msra.mxu0 0
  %1374 = vmatprep.subr.bf16.mxu0 0
  %1375 = vmatpush1.bf16.msra.mxu0 0
  %1376 = vmatprep.subr.bf16.mxu0 0
  %1377 = vmatpush1.bf16.msra.mxu0 0
  %1378 = vmatprep.subr.bf16.mxu0 0
  %1379 = vmatpush1.bf16.msra.mxu0 0
  %1380 = vmatprep.subr.bf16.mxu0 0
  %1381 = vmatpush1.bf16.msra.mxu0 0
  %1382 = vmatprep.subr.bf16.mxu0 0
  %1383 = vmatpush1.bf16.msra.mxu0 0
  %1384 = vmatprep.subr.bf16.mxu0 0
  %1385 = vmatpush1.bf16.msra.mxu0 %v255
  %1386 = vmatprep.subr.bf16.mxu0 0
  %1387 = vmatpush2.bf16.msra.mxu0 0
  %1388 = vmatprep.subr.bf16.mxu0 0
  %1389 = vmatpush2.bf16.msra.mxu0 0
  %1390 = vmatprep.subr.bf16.mxu0 0
  %1391 = vmatpush2.bf16.msra.mxu0 0
  %1392 = vmatprep.subr.bf16.mxu0 0
  %1393 = vmatpush2.bf16.msra.mxu0 0
  %1394 = vmatprep.subr.bf16.mxu0 0
  %1395 = vmatpush2.bf16.msra.mxu0 0
  %1396 = vmatprep.subr.bf16.mxu0 0
  %1397 = vmatpush2.bf16.msra.mxu0 0
  %1398 = vmatprep.subr.bf16.mxu0 0
  %1399 = vmatpush2.bf16.msra.mxu0 0
  %1400 = vmatprep.subr.bf16.mxu0 0
  %1401 = vmatpush2.bf16.msra.mxu0 0
  %1402 = vmatprep.mubr.bf16.mxu0 0
  %1403 = vmatmul.mubr.bf16.gmra.mxu0 %v1368
  %v1404 = vpop.f32.mrf.mxu0
  %v1405 = vadd.f32 %v249, %v1404
  %v1406 = vpop.f32.mrf.mxu0
  %v1407 = vpop.f32.mrf.mxu0
  %v1408 = vpop.f32.mrf.mxu0
  %1409 = vdwg.mxu0
  %v1410 = vadd.f32 %v156, %v1405
  %v1411 = vxor.u32 %v1410, 2147483648
  %v1412 = vmul.f32 %v1411, 1.442695
  %v1413 = vpow.pop %v1412
  %v1414 = vadd.f32 %v1413, 1.0
  %v1415 = vrcp.pop %v1414
  %v1416 = vmul.f32 1.0, %v1415
  %1418 = vrot.lane.b32.xlu0 %v1405, 96
  %v1419 = vpop.permute.xlu0 %1418
  %v1421 = vmul.f32 %v1416, %v1419
  %1423 = vrot.lane.b32.xlu0 %v1421, 32
  %v1424 = vpop.permute.xlu0 %1423
  %v1426 = vadd.f32 %v156, %v1424
  %v1427 = vtanh.pop %v1426
  %v1428 = vsub.f32 1.0, %v1416
  %1430 = vrot.lane.b32.xlu0 %v1427, 112
  %v1431 = vpop.permute.xlu0 %1430
  %v1433 = vmul.f32 %v1428, %v1431
  %v1434 = vmul.f32 %v1416, %v1277
  %v1435 = vadd.f32 %v1433, %v1434
  %1437 = vrot.lane.b32.xlu0 %v1435, 112
  %v1438 = vpop.permute.xlu0 %1437
  %s1440 = scalar_lea.vmem %s14, 56
  %1441 = vst.msk [vmem:[%s1440] sm:$0xff] %vm81, %v1438
  %v1442 = vpack.c.bf16 %v1356, %v1356
  %1444 = vrot.lane.b32.xlu0 %v1442, 112
  %v1445 = vpop.permute.xlu0 %1444
  %v1447 = vsel %vm81, %v1445, 0
  %1449 = vmatprep.subr.bf16.mxu0 0
  %1450 = vmatpush1.bf16.msra.mxu0 0
  %1451 = vmatprep.subr.bf16.mxu0 0
  %1452 = vmatpush1.bf16.msra.mxu0 0
  %1453 = vmatprep.subr.bf16.mxu0 0
  %1454 = vmatpush1.bf16.msra.mxu0 0
  %1455 = vmatprep.subr.bf16.mxu0 0
  %1456 = vmatpush1.bf16.msra.mxu0 0
  %1457 = vmatprep.subr.bf16.mxu0 0
  %1458 = vmatpush1.bf16.msra.mxu0 0
  %1459 = vmatprep.subr.bf16.mxu0 0
  %1460 = vmatpush1.bf16.msra.mxu0 0
  %1461 = vmatprep.subr.bf16.mxu0 0
  %1462 = vmatpush1.bf16.msra.mxu0 0
  %1463 = vmatprep.subr.bf16.mxu0 0
  %1464 = vmatpush1.bf16.msra.mxu0 %v341
  %1465 = vmatprep.subr.bf16.mxu0 0
  %1466 = vmatpush2.bf16.msra.mxu0 0
  %1467 = vmatprep.subr.bf16.mxu0 0
  %1468 = vmatpush2.bf16.msra.mxu0 0
  %1469 = vmatprep.subr.bf16.mxu0 0
  %1470 = vmatpush2.bf16.msra.mxu0 0
  %1471 = vmatprep.subr.bf16.mxu0 0
  %1472 = vmatpush2.bf16.msra.mxu0 0
  %1473 = vmatprep.subr.bf16.mxu0 0
  %1474 = vmatpush2.bf16.msra.mxu0 0
  %1475 = vmatprep.subr.bf16.mxu0 0
  %1476 = vmatpush2.bf16.msra.mxu0 0
  %1477 = vmatprep.subr.bf16.mxu0 0
  %1478 = vmatpush2.bf16.msra.mxu0 0
  %1479 = vmatprep.subr.bf16.mxu0 0
  %1480 = vmatpush2.bf16.msra.mxu0 0
  %1481 = vmatprep.mubr.bf16.mxu0 0
  %1482 = vmatmul.mubr.bf16.gmra.mxu0 %v1447
  %v1483 = vpop.f32.mrf.mxu0
  %v1484 = vadd.f32 %v335, %v1483
  %v1485 = vpop.f32.mrf.mxu0
  %v1486 = vpop.f32.mrf.mxu0
  %v1487 = vpop.f32.mrf.mxu0
  %1488 = vdwg.mxu0
  %v1489 = vadd.f32 %v209, %v1484
  %v1490 = vxor.u32 %v1489, 2147483648
  %v1491 = vmul.f32 %v1490, 1.442695
  %v1492 = vpow.pop %v1491
  %v1493 = vadd.f32 %v1492, 1.0
  %v1494 = vrcp.pop %v1493
  %v1495 = vmul.f32 1.0, %v1494
  %1497 = vrot.lane.b32.xlu0 %v1484, 96
  %v1498 = vpop.permute.xlu0 %1497
  %v1500 = vmul.f32 %v1495, %v1498
  %1502 = vrot.lane.b32.xlu0 %v1500, 32
  %v1503 = vpop.permute.xlu0 %1502
  %v1505 = vadd.f32 %v209, %v1503
  %v1506 = vtanh.pop %v1505
  %v1507 = vsub.f32 1.0, %v1495
  %1509 = vrot.lane.b32.xlu0 %v1506, 112
  %v1510 = vpop.permute.xlu0 %1509
  %v1512 = vmul.f32 %v1507, %v1510
  %v1513 = vmul.f32 %v1495, %v1356
  %v1514 = vadd.f32 %v1512, %v1513
  %1516 = vrot.lane.b32.xlu0 %v1514, 112
  %v1517 = vpop.permute.xlu0 %1516
  %1519 = vst.msk [vmem:[%s15] sm:$0xff] %vm81, %v1517
  %v1520 = vld [vmem:[%s14] sm:$0xff]
  %v1521 = vld [vmem:[%s14 + $0x8] sm:$0xff]
  %v1522 = vld [vmem:[%s14 + $0x10] sm:$0xff]
  %v1523 = vld [vmem:[%s14 + $0x18] sm:$0xff]
  %v1524 = vld [vmem:[%s14 + $0x20] sm:$0xff]
  %v1525 = vld [vmem:[%s14 + $0x28] sm:$0xff]
  %v1526 = vld [vmem:[%s14 + $0x30] sm:$0xff]
  %v1527 = vld [vmem:[%s14 + $0x38] sm:$0xff]
  %v1528 = vld [vmem:[%s11] sm:$0x1]
  %v1530 = vlaneseq
  %v1531 = vshrl.u32 %v1530, 7
  %v1532 = vsub.s32 0, %v1531
  %v1533 = vrot.slane %v1528, %v1532
  %v1535 = vmul.f32 %v1520, %v1533
  %v1536 = vmul.f32 %v1521, %v1533
  %v1537 = vmul.f32 %v1522, %v1533
  %v1538 = vmul.f32 %v1523, %v1533
  %v1539 = vmul.f32 %v1524, %v1533
  %v1540 = vmul.f32 %v1525, %v1533
  %v1541 = vmul.f32 %v1526, %v1533
  %v1542 = vmul.f32 %v1527, %v1533
  %v1543 = vsel %vm81, %v1535, 0.0
  %1544 = vadd.xlane.f32.xlu0 %v1543
  %v1545 = vpop.xlane.xlu0 %1544
  %v1546 = vsel %vm81, %v1536, 0.0
  %1547 = vadd.xlane.f32.xlu0 %v1546
  %v1548 = vpop.xlane.xlu0 %1547
  %v1549 = vsel %vm81, %v1537, 0.0
  %1550 = vadd.xlane.f32.xlu0 %v1549
  %v1551 = vpop.xlane.xlu0 %1550
  %v1552 = vsel %vm81, %v1538, 0.0
  %1553 = vadd.xlane.f32.xlu0 %v1552
  %v1554 = vpop.xlane.xlu0 %1553
  %v1555 = vsel %vm81, %v1539, 0.0
  %1556 = vadd.xlane.f32.xlu0 %v1555
  %v1557 = vpop.xlane.xlu0 %1556
  %v1558 = vsel %vm81, %v1540, 0.0
  %1559 = vadd.xlane.f32.xlu0 %v1558
  %v1560 = vpop.xlane.xlu0 %1559
  %v1561 = vsel %vm81, %v1541, 0.0
  %1562 = vadd.xlane.f32.xlu0 %v1561
  %v1563 = vpop.xlane.xlu0 %1562
  %v1564 = vsel %vm81, %v1542, 0.0
  %1565 = vadd.xlane.f32.xlu0 %v1564
  %v1566 = vpop.xlane.xlu0 %1565
  %v1567 = vld [vmem:[%s15] sm:$0xff]
  %v1568 = vld [vmem:[%s15 + $0x8] sm:$0xff]
  %v1569 = vld [vmem:[%s15 + $0x10] sm:$0xff]
  %v1570 = vld [vmem:[%s15 + $0x18] sm:$0xff]
  %v1571 = vld [vmem:[%s15 + $0x20] sm:$0xff]
  %v1572 = vld [vmem:[%s15 + $0x28] sm:$0xff]
  %v1573 = vld [vmem:[%s15 + $0x30] sm:$0xff]
  %v1574 = vld [vmem:[%s15 + $0x38] sm:$0xff]
  %v1575 = vld [vmem:[%s12] sm:$0x1]
  %v1577 = vlaneseq
  %v1578 = vshrl.u32 %v1577, 7
  %v1579 = vsub.s32 0, %v1578
  %v1580 = vrot.slane %v1575, %v1579
  %v1582 = vmul.f32 %v1567, %v1580
  %v1583 = vmul.f32 %v1568, %v1580
  %v1584 = vmul.f32 %v1569, %v1580
  %v1585 = vmul.f32 %v1570, %v1580
  %v1586 = vmul.f32 %v1571, %v1580
  %v1587 = vmul.f32 %v1572, %v1580
  %v1588 = vmul.f32 %v1573, %v1580
  %v1589 = vmul.f32 %v1574, %v1580
  %v1590 = vsel %vm81, %v1582, 0.0
  %1591 = vadd.xlane.f32.xlu0 %v1590
  %v1592 = vpop.xlane.xlu0 %1591
  %v1593 = vsel %vm81, %v1583, 0.0
  %1594 = vadd.xlane.f32.xlu0 %v1593
  %v1595 = vpop.xlane.xlu0 %1594
  %v1596 = vsel %vm81, %v1584, 0.0
  %1597 = vadd.xlane.f32.xlu0 %v1596
  %v1598 = vpop.xlane.xlu0 %1597
  %v1599 = vsel %vm81, %v1585, 0.0
  %1600 = vadd.xlane.f32.xlu0 %v1599
  %v1601 = vpop.xlane.xlu0 %1600
  %v1602 = vsel %vm81, %v1586, 0.0
  %1603 = vadd.xlane.f32.xlu0 %v1602
  %v1604 = vpop.xlane.xlu0 %1603
  %v1605 = vsel %vm81, %v1587, 0.0
  %1606 = vadd.xlane.f32.xlu0 %v1605
  %v1607 = vpop.xlane.xlu0 %1606
  %v1608 = vsel %vm81, %v1588, 0.0
  %1609 = vadd.xlane.f32.xlu0 %v1608
  %v1610 = vpop.xlane.xlu0 %1609
  %v1611 = vsel %vm81, %v1589, 0.0
  %1612 = vadd.xlane.f32.xlu0 %v1611
  %v1613 = vpop.xlane.xlu0 %1612
  %v1614 = vadd.f32 %v1545, %v1592
  %v1615 = vadd.f32 %v1548, %v1595
  %v1616 = vadd.f32 %v1551, %v1598
  %v1617 = vadd.f32 %v1554, %v1601
  %v1618 = vadd.f32 %v1557, %v1604
  %v1619 = vadd.f32 %v1560, %v1607
  %v1620 = vadd.f32 %v1563, %v1610
  %v1621 = vadd.f32 %v1566, %v1613
  %v1622 = vld [vmem:[#allocation2] sm:$0x1]
  %v1624 = vlaneseq
  %v1625 = vshrl.u32 %v1624, 7
  %v1626 = vsub.s32 0, %v1625
  %v1627 = vrot.slane %v1622, %v1626
  %v1629 = vadd.f32 %v1614, %v1627
  %v1630 = vadd.f32 %v1615, %v1627
  %v1631 = vadd.f32 %v1616, %v1627
  %v1632 = vadd.f32 %v1617, %v1627
  %v1633 = vadd.f32 %v1618, %v1627
  %v1634 = vadd.f32 %v1619, %v1627
  %v1635 = vadd.f32 %v1620, %v1627
  %v1636 = vadd.f32 %v1621, %v1627
  %vm1637 = vcmask 7168
  %1638 = vst.msk [vmem:[%s16] sm:$0xff] %vm1637, %v1629
  %1639 = vst.msk [vmem:[%s16 + $0x8] sm:$0xff] %vm1637, %v1630
  %1640 = vst.msk [vmem:[%s16 + $0x10] sm:$0xff] %vm1637, %v1631
  %1641 = vst.msk [vmem:[%s16 + $0x18] sm:$0xff] %vm1637, %v1632
  %1642 = vst.msk [vmem:[%s16 + $0x20] sm:$0xff] %vm1637, %v1633
  %1643 = vst.msk [vmem:[%s16 + $0x28] sm:$0xff] %vm1637, %v1634
  %1644 = vst.msk [vmem:[%s16 + $0x30] sm:$0xff] %vm1637, %v1635
  %1645 = vst.msk [vmem:[%s16 + $0x38] sm:$0xff] %vm1637, %v1636
  %v1646 = vsel %vm81, %v1438, %v1514
  %v1647 = vpack.c.bf16 %v1646, %v1646
  %v1648 = vld [vmem:[%s9] sm:$0xf]
  %v1649 = vld [vmem:[%s9 + $0x4] sm:$0xf]
  %v1650 = vld [vmem:[%s9 + $0x8] sm:$0xf]
  %v1651 = vld [vmem:[%s9 + $0xc] sm:$0xf]
  %v1652 = vld [vmem:[%s10] sm:$0x1]
  %v1654 = vlaneseq
  %v1655 = vshrl.u32 %v1654, 7
  %v1656 = vsub.s32 0, %v1655
  %v1657 = vrot.slane %v1652, %v1656
  %v1663 = vunpack.c.l.b16 %v1648
  %v1664 = vunpack.c.l.b16 %v1649
  %v1665 = vunpack.c.l.b16 %v1650
  %v1666 = vunpack.c.l.b16 %v1651
  %v1667 = vpack.c.b16 %v1664, %v1663
  %v1668 = vpack.c.b16 %v1666, %v1665
  %vm1671 = vcmask 261120
  %v1673 = vsel %vm1671, %v1647, 0
  %1675 = vmatprep.subr.bf16.mxu0 0
  %1676 = vmatpush1.bf16.msra.mxu0 0
  %1677 = vmatprep.subr.bf16.mxu0 0
  %1678 = vmatpush1.bf16.msra.mxu0 0
  %1679 = vmatprep.subr.bf16.mxu0 0
  %1680 = vmatpush1.bf16.msra.mxu0 0
  %1681 = vmatprep.subr.bf16.mxu0 0
  %1682 = vmatpush1.bf16.msra.mxu0 0
  %1683 = vmatprep.subr.bf16.mxu0 0
  %1684 = vmatpush1.bf16.msra.mxu0 0
  %1685 = vmatprep.subr.bf16.mxu0 0
  %1686 = vmatpush1.bf16.msra.mxu0 0
  %1687 = vmatprep.subr.bf16.mxu0 0
  %1688 = vmatpush1.bf16.msra.mxu0 %v1668
  %1689 = vmatprep.subr.bf16.mxu0 0
  %1690 = vmatpush1.bf16.msra.mxu0 %v1667
  %1691 = vmatprep.subr.bf16.mxu0 0
  %1692 = vmatpush2.bf16.msra.mxu0 0
  %1693 = vmatprep.subr.bf16.mxu0 0
  %1694 = vmatpush2.bf16.msra.mxu0 0
  %1695 = vmatprep.subr.bf16.mxu0 0
  %1696 = vmatpush2.bf16.msra.mxu0 0
  %1697 = vmatprep.subr.bf16.mxu0 0
  %1698 = vmatpush2.bf16.msra.mxu0 0
  %1699 = vmatprep.subr.bf16.mxu0 0
  %1700 = vmatpush2.bf16.msra.mxu0 0
  %1701 = vmatprep.subr.bf16.mxu0 0
  %1702 = vmatpush2.bf16.msra.mxu0 0
  %1703 = vmatprep.subr.bf16.mxu0 0
  %1704 = vmatpush2.bf16.msra.mxu0 0
  %1705 = vmatprep.subr.bf16.mxu0 0
  %1706 = vmatpush2.bf16.msra.mxu0 0
  %1707 = vmatprep.mubr.bf16.mxu0 0
  %1708 = vmatmul.mubr.bf16.gmra.mxu0 %v1673
  %v1709 = vpop.f32.mrf.mxu0
  %v1710 = vadd.f32 %v1657, %v1709
  %v1711 = vpop.f32.mrf.mxu0
  %v1712 = vpop.f32.mrf.mxu0
  %v1713 = vpop.f32.mrf.mxu0
  %1714 = vdwg.mxu0
  %v1715 = vtanh.pop %v1710
  %1716 = vst.msk [vmem:[%s17] sm:$0xff] %vm1671, %v1715
  // Predicated region
  $region58: #{_forward_impl.2} parent=0 // pred_check
    _
  $region59: #{_forward_impl.2} parent=0 // pred_check_branch
    %1718 = sbr.rel (0) target = $region61
  $region60: #{_forward_impl.2} parent=0 // pred_region
    _
  $region61: #{_forward_impl.2} parent=0 // pred_fallthru
    _
  // Predicated region
  $region62: #{_forward_impl.2} parent=0 // pred_check
    _
  $region63: #{_forward_impl.2} parent=0 // pred_check_branch
    %1720 = sbr.rel (0) target = $region65
  $region64: #{_forward_impl.2} parent=0 // pred_region
    _
  $region65: #{_forward_impl.2} parent=0 // pred_fallthru
    _
  // Predicated region
  $region66: #{_forward_impl.2} parent=0 // pred_check
    _
  $region67: #{_forward_impl.2} parent=0 // pred_check_branch
    %1722 = sbr.rel (0) target = $region69
  $region68: #{_forward_impl.2} parent=0 // pred_region
    _
  $region69: #{_forward_impl.2} parent=0 // pred_fallthru
    _
  // Predicated region
  $region70: #{_forward_impl.2} parent=0 // pred_check
    _
  $region71: #{_forward_impl.2} parent=0 // pred_check_branch
    %1724 = sbr.rel (0) target = $region73
  $region72: #{_forward_impl.2} parent=0 // pred_region
    _
  $region73: #{_forward_impl.2} parent=0 // pred_fallthru
    _
  // Predicated region
  $region74: #{_forward_impl.2} parent=0 // pred_check
    _
  $region75: #{_forward_impl.2} parent=0 // pred_check_branch
    %1726 = sbr.rel (0) target = $region77
  $region76: #{_forward_impl.2} parent=0 // pred_region
    _
  $region77: #{_forward_impl.2} parent=0 // pred_fallthru
    _
  // Predicated region
  $region78: #{_forward_impl.2} parent=0 // pred_check
    _
  $region79: #{_forward_impl.2} parent=0 // pred_check_branch
    %1728 = sbr.rel (0) target = $region81
  $region80: #{_forward_impl.2} parent=0 // pred_region
    _
  $region81: #{_forward_impl.2} parent=0 // pred_fallthru
    _
  // Predicated region
  $region82: #{_forward_impl.2} parent=0 // pred_check
    _
  $region83: #{_forward_impl.2} parent=0 // pred_check_branch
    %1730 = sbr.rel (0) target = $region85
  $region84: #{_forward_impl.2} parent=0 // pred_region
    _
  $region85: #{_forward_impl.2} parent=0 // pred_fallthru
    _
  // Predicated region
  $region86: #{_forward_impl.2} parent=0 // pred_check
    _
  $region87: #{_forward_impl.2} parent=0 // pred_check_branch
    %1732 = sbr.rel (0) target = $region89
  $region88: #{_forward_impl.2} parent=0 // pred_region
    _
  $region89: #{_forward_impl.2} parent=0 // pred_fallthru
    _

// kernel: _forward_impl.3
$region0: #{_forward_impl.3}
  #allocation0 [shape = 'u32[]', space=smem, size = 0x4, offset = 0x4, fixed_abs, tag = 'smem constant byte address 0x4 - core index']
  #allocation1 [shape = 'u32[144,128]{1,0:T(1,128)}', space=vmem, size = 0x12000, scoped, tag = 'internal scratch']
  #allocation2 [shape = 'f32[8,32]{1,0:T(8,128)}', space=vmem, size = 0x1000, scoped, tag = 'scratch operand']
  #allocation3 [shape = 'f32[8,16]{1,0:T(8,128)}', space=vmem, size = 0x1000, scoped, tag = 'scratch operand']
  %s0 = inlined_call_operand.vmem [shape: s32[6], index: 0, kind: input, shape index: {}]
  %s1 = inlined_call_operand.vmem [shape: f32[6,8,16], index: 1, kind: input, shape index: {}]
  %s2 = inlined_call_operand.vmem [shape: f32[8,32], index: 2, kind: input, shape index: {}]
  %s3 = inlined_call_operand.vmem [shape: f32[8,8,16], index: 3, kind: input, shape index: {}]
  %s4 = inlined_call_operand.vmem [shape: f32[8,8,16], index: 4, kind: input, shape index: {}]
  %s5 = inlined_call_operand.vmem [shape: f32[8,8,1], index: 5, kind: input, shape index: {}]
  %s6 = inlined_call_operand.vmem [shape: bf16[128,16], index: 6, kind: input, shape index: {}]
  %s7 = inlined_call_operand.vmem [shape: f32[1,32], index: 7, kind: input, shape index: {}]
  %s8 = inlined_call_operand.vmem [shape: bf16[48,96], index: 8, kind: input, shape index: {}]
  %s9 = inlined_call_operand.vmem [shape: f32[1,96], index: 9, kind: input, shape index: {}]
  %s10 = inlined_call_operand.vmem [shape: bf16[32,96], index: 10, kind: input, shape index: {}]
  %s11 = inlined_call_operand.vmem [shape: f32[1,96], index: 11, kind: input, shape index: {}]
  %s12 = inlined_call_operand.vmem [shape: bf16[80,128], index: 12, kind: input, shape index: {}]
  %s13 = inlined_call_operand.vmem [shape: f32[1,128], index: 13, kind: input, shape index: {}]
  %s14 = inlined_call_operand.vmem [shape: f32[5,8,128], index: 14, kind: output, shape index: {}]
  %s15 = sld [smem:[#allocation0]]
  $region90: #{_forward_impl.3} parent=0
    _
  %s17 = ssub.s32 1, %s15
  %s18 = scalar_select 0, %s17, %s15
  $region1: #{_forward_impl.3} parent=0
    #allocation4 [shape = 'u8[512]{0}', space=smem, size = 0x200, scoped, tag = 'input window, operand 0, single buffered']
    #allocation5 [shape = 's32[1]{0}', space=sflag, size = 0x4, scoped, tag = 'scoped memory for _forward_impl.3']
    %19 = vsyncpa [#allocation5], 0
    // Predicated region
    $region2: #{_forward_impl.3} parent=1 // pred_check
      _
    $region3: #{_forward_impl.3} parent=1 // pred_check_branch
      %21 = sbr.rel (0) target = $region5
    $region4: #{_forward_impl.3} parent=1 // pred_region
      %s23 = ssub.s32 16, 16
      %24 = vsyncadd [#allocation5], %s23
      %s26 = sshll.u32 %s0, 4
      %s27 = int_to_ptr.vmem [resolvable:$true] %s26
      %29 = dma.vmem_to_smem %s27, 16, [#allocation4], [#allocation5]
    $region5: #{_forward_impl.3} parent=1 // pred_fallthru
      _
    // Predicated region
    $region6: #{_forward_impl.3} parent=1 // pred_check
      _
    $region7: #{_forward_impl.3} parent=1 // pred_check_branch
      %31 = sbr.rel (0) target = $region9
    $region8: #{_forward_impl.3} parent=1 // pred_region
      _
    $region9: #{_forward_impl.3} parent=1 // pred_fallthru
      _
    // Predicated region
    $region10: #{_forward_impl.3} parent=1 // pred_check
      _
    $region11: #{_forward_impl.3} parent=1 // pred_check_branch
      %33 = sbr.rel (0) target = $region13
    $region12: #{_forward_impl.3} parent=1 // pred_region
      _
    $region13: #{_forward_impl.3} parent=1 // pred_fallthru
      _
    // Predicated region
    $region14: #{_forward_impl.3} parent=1 // pred_check
      _
    $region15: #{_forward_impl.3} parent=1 // pred_check_branch
      %35 = sbr.rel (0) target = $region17
    $region16: #{_forward_impl.3} parent=1 // pred_region
      _
    $region17: #{_forward_impl.3} parent=1 // pred_fallthru
      _
    // Predicated region
    $region18: #{_forward_impl.3} parent=1 // pred_check
      _
    $region19: #{_forward_impl.3} parent=1 // pred_check_branch
      %37 = sbr.rel (0) target = $region21
    $region20: #{_forward_impl.3} parent=1 // pred_region
      _
    $region21: #{_forward_impl.3} parent=1 // pred_fallthru
      _
    // Predicated region
    $region22: #{_forward_impl.3} parent=1 // pred_check
      _
    $region23: #{_forward_impl.3} parent=1 // pred_check_branch
      %39 = sbr.rel (0) target = $region25
    $region24: #{_forward_impl.3} parent=1 // pred_region
      _
    $region25: #{_forward_impl.3} parent=1 // pred_fallthru
      _
    // Predicated region
    $region26: #{_forward_impl.3} parent=1 // pred_check
      _
    $region27: #{_forward_impl.3} parent=1 // pred_check_branch
      %41 = sbr.rel (0) target = $region29
    $region28: #{_forward_impl.3} parent=1 // pred_region
      _
    $region29: #{_forward_impl.3} parent=1 // pred_fallthru
      _
    // Predicated region
    $region30: #{_forward_impl.3} parent=1 // pred_check
      _
    $region31: #{_forward_impl.3} parent=1 // pred_check_branch
      %43 = sbr.rel (0) target = $region33
    $region32: #{_forward_impl.3} parent=1 // pred_region
      _
    $region33: #{_forward_impl.3} parent=1 // pred_fallthru
      _
    // Predicated region
    $region34: #{_forward_impl.3} parent=1 // pred_check
      _
    $region35: #{_forward_impl.3} parent=1 // pred_check_branch
      %45 = sbr.rel (0) target = $region37
    $region36: #{_forward_impl.3} parent=1 // pred_region
      _
    $region37: #{_forward_impl.3} parent=1 // pred_fallthru
      _
    // Predicated region
    $region38: #{_forward_impl.3} parent=1 // pred_check
      _
    $region39: #{_forward_impl.3} parent=1 // pred_check_branch
      %47 = sbr.rel (0) target = $region41
    $region40: #{_forward_impl.3} parent=1 // pred_region
      _
    $region41: #{_forward_impl.3} parent=1 // pred_fallthru
      _
    // Predicated region
    $region42: #{_forward_impl.3} parent=1 // pred_check
      _
    $region43: #{_forward_impl.3} parent=1 // pred_check_branch
      %49 = sbr.rel (0) target = $region45
    $region44: #{_forward_impl.3} parent=1 // pred_region
      _
    $region45: #{_forward_impl.3} parent=1 // pred_fallthru
      _
    // Predicated region
    $region46: #{_forward_impl.3} parent=1 // pred_check
      _
    $region47: #{_forward_impl.3} parent=1 // pred_check_branch
      %51 = sbr.rel (0) target = $region49
    $region48: #{_forward_impl.3} parent=1 // pred_region
      _
    $region49: #{_forward_impl.3} parent=1 // pred_fallthru
      _
    // Predicated region
    $region50: #{_forward_impl.3} parent=1 // pred_check
      _
    $region51: #{_forward_impl.3} parent=1 // pred_check_branch
      %53 = sbr.rel (0) target = $region53
    $region52: #{_forward_impl.3} parent=1 // pred_region
      _
    $region53: #{_forward_impl.3} parent=1 // pred_fallthru
      _
    // Predicated region
    $region54: #{_forward_impl.3} parent=1 // pred_check
      _
    $region55: #{_forward_impl.3} parent=1 // pred_check_branch
      %55 = sbr.rel (0) target = $region57
    $region56: #{_forward_impl.3} parent=1 // pred_region
      _
    $region57: #{_forward_impl.3} parent=1 // pred_fallthru
      _
    // Predicated region
    $region58: #{_forward_impl.3} parent=1 // pred_check
      _
    $region59: #{_forward_impl.3} parent=1 // pred_check_branch
      %57 = sbr.rel (0) target = $region61
    $region60: #{_forward_impl.3} parent=1 // pred_region
      %58 = dma.done [#allocation5], 16
    $region61: #{_forward_impl.3} parent=1 // pred_fallthru
      _
    %59 = sfence
    %v61 = vld [vmem:[%s3] sm:$0xff]
    %v62 = vld [vmem:[%s3 + $0x8] sm:$0xff]
    %v63 = vld [vmem:[%s3 + $0x10] sm:$0xff]
    %v64 = vld [vmem:[%s3 + $0x18] sm:$0xff]
    %v65 = vld [vmem:[%s3 + $0x20] sm:$0xff]
    %v66 = vld [vmem:[%s3 + $0x28] sm:$0xff]
    %v67 = vld [vmem:[%s3 + $0x30] sm:$0xff]
    %v68 = vld [vmem:[%s3 + $0x38] sm:$0xff]
    %v69 = vld [vmem:[%s4] sm:$0xff]
    %v70 = vld [vmem:[%s4 + $0x8] sm:$0xff]
    %v71 = vld [vmem:[%s4 + $0x10] sm:$0xff]
    %v72 = vld [vmem:[%s4 + $0x18] sm:$0xff]
    %v73 = vld [vmem:[%s4 + $0x20] sm:$0xff]
    %v74 = vld [vmem:[%s4 + $0x28] sm:$0xff]
    %v75 = vld [vmem:[%s4 + $0x30] sm:$0xff]
    %v76 = vld [vmem:[%s4 + $0x38] sm:$0xff]
    %v77 = vld [vmem:[%s5] sm:$0xff]
    %v78 = vld [vmem:[%s5 + $0x8] sm:$0xff]
    %v79 = vld [vmem:[%s5 + $0x10] sm:$0xff]
    %v80 = vld [vmem:[%s5 + $0x18] sm:$0xff]
    %v81 = vld [vmem:[%s5 + $0x20] sm:$0xff]
    %v82 = vld [vmem:[%s5 + $0x28] sm:$0xff]
    %v83 = vld [vmem:[%s5 + $0x30] sm:$0xff]
    %v84 = vld [vmem:[%s5 + $0x38] sm:$0xff]
    %v85 = vld [vmem:[%s7] sm:$0x1]
    %v86 = vld [vmem:[%s8] sm:$0xf]
    %v87 = vld [vmem:[%s8 + $0x4] sm:$0xf]
    %v88 = vld [vmem:[%s8 + $0x8] sm:$0xf]
    %v89 = vld [vmem:[%s8 + $0xc] sm:$0xf]
    %v90 = vld [vmem:[%s8 + $0x10] sm:$0xf]
    %v91 = vld [vmem:[%s8 + $0x14] sm:$0xf]
    %v92 = vld [vmem:[%s9] sm:$0x1]
    %v93 = vld [vmem:[%s10] sm:$0xf]
    %v94 = vld [vmem:[%s10 + $0x4] sm:$0xf]
    %v95 = vld [vmem:[%s10 + $0x8] sm:$0xf]
    %v96 = vld [vmem:[%s10 + $0xc] sm:$0xf]
    %v97 = vld [vmem:[%s11] sm:$0x1]
    %v98 = vld [vmem:[%s12] sm:$0xf]
    %v99 = vld [vmem:[%s12 + $0x4] sm:$0xf]
    %v100 = vld [vmem:[%s12 + $0x8] sm:$0xf]
    %v101 = vld [vmem:[%s12 + $0xc] sm:$0xf]
    %v102 = vld [vmem:[%s12 + $0x10] sm:$0xf]
    %v103 = vld [vmem:[%s12 + $0x14] sm:$0xf]
    %v104 = vld [vmem:[%s12 + $0x18] sm:$0xf]
    %v105 = vld [vmem:[%s12 + $0x1c] sm:$0xf]
    %v106 = vld [vmem:[%s12 + $0x20] sm:$0xf]
    %v107 = vld [vmem:[%s12 + $0x24] sm:$0xf]
    %v108 = vld [vmem:[%s13] sm:$0x1]
    %v109 = vld [vmem:[%s6] sm:$0xf]
    %v110 = vld [vmem:[%s6 + $0x4] sm:$0xf]
    %v111 = vld [vmem:[%s6 + $0x8] sm:$0xf]
    %v112 = vld [vmem:[%s6 + $0xc] sm:$0xf]
    %v113 = vld [vmem:[%s6 + $0x10] sm:$0xf]
    %v114 = vld [vmem:[%s6 + $0x14] sm:$0xf]
    %v115 = vld [vmem:[%s6 + $0x18] sm:$0xf]
    %v116 = vld [vmem:[%s6 + $0x1c] sm:$0xf]
    %v117 = vld [vmem:[%s6 + $0x20] sm:$0xf]
    %v118 = vld [vmem:[%s6 + $0x24] sm:$0xf]
    %v119 = vld [vmem:[%s6 + $0x28] sm:$0xf]
    %v120 = vld [vmem:[%s6 + $0x2c] sm:$0xf]
    %v121 = vld [vmem:[%s6 + $0x30] sm:$0xf]
    %v122 = vld [vmem:[%s6 + $0x34] sm:$0xf]
    %v123 = vld [vmem:[%s6 + $0x38] sm:$0xf]
    %v124 = vld [vmem:[%s6 + $0x3c] sm:$0xf]
    %v125 = vlaneseq
    %v126 = vand.u32 %v125, 127
    %vm127 = vcmp.lt.s32.totalorder %v126, 32
    %v128 = vld [vmem:[%s2] sm:$0xff]
    %vm129 = vcmask 261120
    %130 = vst.msk [vmem:[#allocation2] sm:$0xff] %vm129, %v128
    %v131 = vld [vmem:[%s1] sm:$0xff]
    %vm132 = vcmask 130048
    %133 = vst.msk [vmem:[#allocation3] sm:$0xff] %vm132, %v131
    %v134 = vld [vmem:[#allocation2] sm:$0xff]
    %v135 = vld [vmem:[#allocation3] sm:$0xff]
    %v137 = vlaneseq
    %v138 = vshrl.u32 %v137, 7
    %v139 = vsub.s32 0, %v138
    %v140 = vrot.slane %v85, %v139
    %v142 = vmul.f32 %v134, %v140
    %v143 = vsel %vm129, %v142, 0.0
    %144 = vadd.xlane.f32.xlu0 %v143
    %v145 = vpop.xlane.xlu0 %144
    %v146 = vadd.f32 %v77, %v145
    %v147 = vadd.f32 %v78, %v145
    %v148 = vadd.f32 %v79, %v145
    %v149 = vadd.f32 %v80, %v145
    %v150 = vadd.f32 %v81, %v145
    %v151 = vadd.f32 %v82, %v145
    %v152 = vadd.f32 %v83, %v145
    %v153 = vadd.f32 %v84, %v145
    %vm154 = vcmask 7168
    %v155 = vsel %vm154, %v146, -inf
    %v156 = vsel %vm154, %v147, -inf
    %v157 = vsel %vm154, %v148, -inf
    %v158 = vsel %vm154, %v149, -inf
    %v159 = vsel %vm154, %v150, -inf
    %v160 = vmax.f32 %v155, %v159
    %v161 = vsel %vm154, %v151, -inf
    %v162 = vmax.f32 %v156, %v161
    %v163 = vsel %vm154, %v152, -inf
    %v164 = vmax.f32 %v157, %v163
    %v165 = vsel %vm154, %v153, -inf
    %v166 = vmax.f32 %v158, %v165
    %v167 = vmax.f32 %v160, %v162
    %v168 = vmax.f32 %v164, %v166
    %v169 = vmax.f32 %v167, %v168
    %v170 = vsub.f32 %v146, %v169
    %v171 = vsub.f32 %v147, %v169
    %v172 = vsub.f32 %v148, %v169
    %v173 = vsub.f32 %v149, %v169
    %v174 = vsub.f32 %v150, %v169
    %v175 = vsub.f32 %v151, %v169
    %v176 = vsub.f32 %v152, %v169
    %v177 = vsub.f32 %v153, %v169
    %v178 = vmul.f32 %v170, 1.442695
    %v179 = vpow.pop %v178
    %v180 = vmul.f32 %v171, 1.442695
    %v181 = vpow.pop %v180
    %v182 = vmul.f32 %v172, 1.442695
    %v183 = vpow.pop %v182
    %v184 = vmul.f32 %v173, 1.442695
    %v185 = vpow.pop %v184
    %v186 = vmul.f32 %v174, 1.442695
    %v187 = vpow.pop %v186
    %v188 = vmul.f32 %v175, 1.442695
    %v189 = vpow.pop %v188
    %v190 = vmul.f32 %v176, 1.442695
    %v191 = vpow.pop %v190
    %v192 = vmul.f32 %v177, 1.442695
    %v193 = vpow.pop %v192
    %v194 = vsel %vm154, %v179, 0.0
    %v195 = vsel %vm154, %v181, 0.0
    %v196 = vadd.f32 %v194, %v195
    %v197 = vsel %vm154, %v183, 0.0
    %v198 = vadd.f32 %v196, %v197
    %v199 = vsel %vm154, %v185, 0.0
    %v200 = vadd.f32 %v198, %v199
    %v201 = vsel %vm154, %v187, 0.0
    %v202 = vadd.f32 %v200, %v201
    %v203 = vsel %vm154, %v189, 0.0
    %v204 = vadd.f32 %v202, %v203
    %v205 = vsel %vm154, %v191, 0.0
    %v206 = vadd.f32 %v204, %v205
    %v207 = vsel %vm154, %v193, 0.0
    %v208 = vadd.f32 %v206, %v207
    %v209 = vrcp.pop %v208
    %v210 = vmul.f32 %v179, %v209
    %v211 = vmul.f32 %v181, %v209
    %v212 = vmul.f32 %v183, %v209
    %v213 = vmul.f32 %v185, %v209
    %v214 = vmul.f32 %v187, %v209
    %v215 = vmul.f32 %v189, %v209
    %v216 = vmul.f32 %v191, %v209
    %v217 = vmul.f32 %v193, %v209
    %219 = vset.pattern.permute.xlu0 0
    %220 = vperm.xlu0 %219, %v210
    %v221 = vpop.permute.xlu0 %220
    %224 = vset.pattern.permute.xlu0 0
    %225 = vperm.xlu0 %224, %v211
    %v226 = vpop.permute.xlu0 %225
    %229 = vset.pattern.permute.xlu0 0
    %230 = vperm.xlu0 %229, %v212
    %v231 = vpop.permute.xlu0 %230
    %234 = vset.pattern.permute.xlu0 0
    %235 = vperm.xlu0 %234, %v213
    %v236 = vpop.permute.xlu0 %235
    %239 = vset.pattern.permute.xlu0 0
    %240 = vperm.xlu0 %239, %v214
    %v241 = vpop.permute.xlu0 %240
    %244 = vset.pattern.permute.xlu0 0
    %245 = vperm.xlu0 %244, %v215
    %v246 = vpop.permute.xlu0 %245
    %249 = vset.pattern.permute.xlu0 0
    %250 = vperm.xlu0 %249, %v216
    %v251 = vpop.permute.xlu0 %250
    %254 = vset.pattern.permute.xlu0 0
    %255 = vperm.xlu0 %254, %v217
    %v256 = vpop.permute.xlu0 %255
    %v258 = vmul.f32 %v61, %v221
    %v259 = vmul.f32 %v62, %v226
    %v260 = vmul.f32 %v63, %v231
    %v261 = vmul.f32 %v64, %v236
    %v262 = vmul.f32 %v65, %v241
    %v263 = vmul.f32 %v66, %v246
    %v264 = vmul.f32 %v67, %v251
    %v265 = vmul.f32 %v68, %v256
    %v266 = vsel %vm132, %v258, 0.0
    %v267 = vsel %vm132, %v259, 0.0
    %v268 = vadd.f32 %v266, %v267
    %v269 = vsel %vm132, %v260, 0.0
    %v270 = vadd.f32 %v268, %v269
    %v271 = vsel %vm132, %v261, 0.0
    %v272 = vadd.f32 %v270, %v271
    %v273 = vsel %vm132, %v262, 0.0
    %v274 = vadd.f32 %v272, %v273
    %v275 = vsel %vm132, %v263, 0.0
    %v276 = vadd.f32 %v274, %v275
    %v277 = vsel %vm132, %v264, 0.0
    %v278 = vadd.f32 %v276, %v277
    %v279 = vsel %vm132, %v265, 0.0
    %v280 = vadd.f32 %v278, %v279
    %v281 = vmul.f32 %v69, %v221
    %v282 = vmul.f32 %v70, %v226
    %v283 = vmul.f32 %v71, %v231
    %v284 = vmul.f32 %v72, %v236
    %v285 = vmul.f32 %v73, %v241
    %v286 = vmul.f32 %v74, %v246
    %v287 = vmul.f32 %v75, %v251
    %v288 = vmul.f32 %v76, %v256
    %v289 = vsel %vm132, %v281, 0.0
    %v290 = vsel %vm132, %v282, 0.0
    %v291 = vadd.f32 %v289, %v290
    %v292 = vsel %vm132, %v283, 0.0
    %v293 = vadd.f32 %v291, %v292
    %v294 = vsel %vm132, %v284, 0.0
    %v295 = vadd.f32 %v293, %v294
    %v296 = vsel %vm132, %v285, 0.0
    %v297 = vadd.f32 %v295, %v296
    %v298 = vsel %vm132, %v286, 0.0
    %v299 = vadd.f32 %v297, %v298
    %v300 = vsel %vm132, %v287, 0.0
    %v301 = vadd.f32 %v299, %v300
    %v302 = vsel %vm132, %v288, 0.0
    %v303 = vadd.f32 %v301, %v302
    %305 = vrot.lane.b32.xlu0 %v280, 16
    %v306 = vpop.permute.xlu0 %305
    %309 = vrot.lane.b32.xlu0 %v303, 32
    %v310 = vpop.permute.xlu0 %309
    %v312 = vsel %vm132, %v135, %v306
    %v313 = vsel %vm129, %v312, %v310
    %v314 = vpack.c.bf16 %v313, %v313
    %v316 = vlaneseq
    %v317 = vshrl.u32 %v316, 7
    %v318 = vsub.s32 0, %v317
    %v319 = vrot.slane %v92, %v318
    %v327 = vunpack.c.l.b16 %v86
    %v328 = vunpack.c.l.b16 %v87
    %v329 = vunpack.c.l.b16 %v88
    %v330 = vunpack.c.l.b16 %v89
    %v331 = vunpack.c.l.b16 %v90
    %v332 = vunpack.c.l.b16 %v91
    %v333 = vpack.c.b16 %v328, %v327
    %v334 = vpack.c.b16 %v330, %v329
    %v335 = vpack.c.b16 %v332, %v331
    %vm339 = vcmask 392192
    %v341 = vsel %vm339, %v314, 0
    %343 = vmatprep.subr.bf16.mxu0 0
    %344 = vmatpush1.bf16.msra.mxu0 0
    %345 = vmatprep.subr.bf16.mxu0 0
    %346 = vmatpush1.bf16.msra.mxu0 0
    %347 = vmatprep.subr.bf16.mxu0 0
    %348 = vmatpush1.bf16.msra.mxu0 0
    %349 = vmatprep.subr.bf16.mxu0 0
    %350 = vmatpush1.bf16.msra.mxu0 0
    %351 = vmatprep.subr.bf16.mxu0 0
    %352 = vmatpush1.bf16.msra.mxu0 0
    %353 = vmatprep.subr.bf16.mxu0 0
    %354 = vmatpush1.bf16.msra.mxu0 %v335
    %355 = vmatprep.subr.bf16.mxu0 0
    %356 = vmatpush1.bf16.msra.mxu0 %v334
    %357 = vmatprep.subr.bf16.mxu0 0
    %358 = vmatpush1.bf16.msra.mxu0 %v333
    %359 = vmatprep.subr.bf16.mxu0 0
    %360 = vmatpush2.bf16.msra.mxu0 0
    %361 = vmatprep.subr.bf16.mxu0 0
    %362 = vmatpush2.bf16.msra.mxu0 0
    %363 = vmatprep.subr.bf16.mxu0 0
    %364 = vmatpush2.bf16.msra.mxu0 0
    %365 = vmatprep.subr.bf16.mxu0 0
    %366 = vmatpush2.bf16.msra.mxu0 0
    %367 = vmatprep.subr.bf16.mxu0 0
    %368 = vmatpush2.bf16.msra.mxu0 0
    %369 = vmatprep.subr.bf16.mxu0 0
    %370 = vmatpush2.bf16.msra.mxu0 0
    %371 = vmatprep.subr.bf16.mxu0 0
    %372 = vmatpush2.bf16.msra.mxu0 0
    %373 = vmatprep.subr.bf16.mxu0 0
    %374 = vmatpush2.bf16.msra.mxu0 0
    %375 = vmatprep.mubr.bf16.mxu0 0
    %376 = vmatmul.mubr.bf16.gmra.mxu0 %v341
    %v377 = vpop.f32.mrf.mxu0
    %v378 = vadd.f32 %v319, %v377
    %v379 = vpop.f32.mrf.mxu0
    %v380 = vpop.f32.mrf.mxu0
    %v381 = vpop.f32.mrf.mxu0
    %382 = vdwg.mxu0
    %v383 = vpack.c.bf16 %v134, %v134
    %v385 = vlaneseq
    %v386 = vshrl.u32 %v385, 7
    %v387 = vsub.s32 0, %v386
    %v388 = vrot.slane %v97, %v387
    %v394 = vunpack.c.l.b16 %v93
    %v395 = vunpack.c.l.b16 %v94
    %v396 = vunpack.c.l.b16 %v95
    %v397 = vunpack.c.l.b16 %v96
    %v398 = vpack.c.b16 %v395, %v394
    %v399 = vpack.c.b16 %v397, %v396
    %v403 = vsel %vm129, %v383, 0
    %405 = vmatprep.subr.bf16.mxu0 0
    %406 = vmatpush1.bf16.msra.mxu0 0
    %407 = vmatprep.subr.bf16.mxu0 0
    %408 = vmatpush1.bf16.msra.mxu0 0
    %409 = vmatprep.subr.bf16.mxu0 0
    %410 = vmatpush1.bf16.msra.mxu0 0
    %411 = vmatprep.subr.bf16.mxu0 0
    %412 = vmatpush1.bf16.msra.mxu0 0
    %413 = vmatprep.subr.bf16.mxu0 0
    %414 = vmatpush1.bf16.msra.mxu0 0
    %415 = vmatprep.subr.bf16.mxu0 0
    %416 = vmatpush1.bf16.msra.mxu0 0
    %417 = vmatprep.subr.bf16.mxu0 0
    %418 = vmatpush1.bf16.msra.mxu0 %v399
    %419 = vmatprep.subr.bf16.mxu0 0
    %420 = vmatpush1.bf16.msra.mxu0 %v398
    %421 = vmatprep.subr.bf16.mxu0 0
    %422 = vmatpush2.bf16.msra.mxu0 0
    %423 = vmatprep.subr.bf16.mxu0 0
    %424 = vmatpush2.bf16.msra.mxu0 0
    %425 = vmatprep.subr.bf16.mxu0 0
    %426 = vmatpush2.bf16.msra.mxu0 0
    %427 = vmatprep.subr.bf16.mxu0 0
    %428 = vmatpush2.bf16.msra.mxu0 0
    %429 = vmatprep.subr.bf16.mxu0 0
    %430 = vmatpush2.bf16.msra.mxu0 0
    %431 = vmatprep.subr.bf16.mxu0 0
    %432 = vmatpush2.bf16.msra.mxu0 0
    %433 = vmatprep.subr.bf16.mxu0 0
    %434 = vmatpush2.bf16.msra.mxu0 0
    %435 = vmatprep.subr.bf16.mxu0 0
    %436 = vmatpush2.bf16.msra.mxu0 0
    %437 = vmatprep.mubr.bf16.mxu0 0
    %438 = vmatmul.mubr.bf16.gmra.mxu0 %v403
    %v439 = vpop.f32.mrf.mxu0
    %v440 = vadd.f32 %v388, %v439
    %v441 = vpop.f32.mrf.mxu0
    %v442 = vpop.f32.mrf.mxu0
    %v443 = vpop.f32.mrf.mxu0
    %444 = vdwg.mxu0
    %v445 = vadd.f32 %v378, %v440
    %v446 = vxor.u32 %v445, 2147483648
    %v447 = vmul.f32 %v446, 1.442695
    %v448 = vpow.pop %v447
    %v449 = vadd.f32 %v448, 1.0
    %v450 = vrcp.pop %v449
    %v451 = vmul.f32 1.0, %v450
    %453 = vrot.lane.b32.xlu0 %v440, 64
    %v454 = vpop.permute.xlu0 %453
    %v456 = vmul.f32 %v451, %v454
    %458 = vrot.lane.b32.xlu0 %v456, 64
    %v459 = vpop.permute.xlu0 %458
    %v461 = vadd.f32 %v378, %v459
    %v462 = vtanh.pop %v461
    %v463 = vsub.f32 1.0, %v451
    %465 = vrot.lane.b32.xlu0 %v462, 96
    %v466 = vpop.permute.xlu0 %465
    %v468 = vmul.f32 %v463, %v466
    %470 = vrot.lane.b32.xlu0 %v134, 32
    %v471 = vpop.permute.xlu0 %470
    %v473 = vmul.f32 %v451, %v471
    %v474 = vadd.f32 %v468, %v473
    %476 = vrot.lane.b32.xlu0 %v474, 16
    %v477 = vpop.permute.xlu0 %476
    %v479 = vsel %vm339, %v313, %v477
    %v480 = vpack.c.bf16 %v479, %v479
    %v482 = vlaneseq
    %v483 = vshrl.u32 %v482, 7
    %v484 = vsub.s32 0, %v483
    %v485 = vrot.slane %v108, %v484
    %v497 = vunpack.c.l.b16 %v98
    %v498 = vunpack.c.l.b16 %v99
    %v499 = vunpack.c.l.b16 %v100
    %v500 = vunpack.c.l.b16 %v101
    %v501 = vunpack.c.l.b16 %v102
    %v502 = vunpack.c.l.b16 %v103
    %v503 = vunpack.c.l.b16 %v104
    %v504 = vunpack.c.l.b16 %v105
    %v505 = vunpack.c.l.b16 %v106
    %v506 = vunpack.c.l.b16 %v107
    %v507 = vpack.c.b16 %v498, %v497
    %v508 = vpack.c.b16 %v500, %v499
    %v509 = vpack.c.b16 %v502, %v501
    %v510 = vpack.c.b16 %v504, %v503
    %v511 = vpack.c.b16 %v506, %v505
    %vm517 = vcmask 654336
    %v519 = vsel %vm517, %v480, 0
    %521 = vmatprep.subr.bf16.mxu0 0
    %522 = vmatpush1.bf16.msra.mxu0 0
    %523 = vmatprep.subr.bf16.mxu0 0
    %524 = vmatpush1.bf16.msra.mxu0 0
    %525 = vmatprep.subr.bf16.mxu0 0
    %526 = vmatpush1.bf16.msra.mxu0 0
    %527 = vmatprep.subr.bf16.mxu0 0
    %528 = vmatpush1.bf16.msra.mxu0 %v511
    %529 = vmatprep.subr.bf16.mxu0 0
    %530 = vmatpush1.bf16.msra.mxu0 %v510
    %531 = vmatprep.subr.bf16.mxu0 0
    %532 = vmatpush1.bf16.msra.mxu0 %v509
    %533 = vmatprep.subr.bf16.mxu0 0
    %534 = vmatpush1.bf16.msra.mxu0 %v508
    %535 = vmatprep.subr.bf16.mxu0 0
    %536 = vmatpush1.bf16.msra.mxu0 %v507
    %537 = vmatprep.subr.bf16.mxu0 0
    %538 = vmatpush2.bf16.msra.mxu0 0
    %539 = vmatprep.subr.bf16.mxu0 0
    %540 = vmatpush2.bf16.msra.mxu0 0
    %541 = vmatprep.subr.bf16.mxu0 0
    %542 = vmatpush2.bf16.msra.mxu0 0
    %543 = vmatprep.subr.bf16.mxu0 0
    %544 = vmatpush2.bf16.msra.mxu0 0
    %545 = vmatprep.subr.bf16.mxu0 0
    %546 = vmatpush2.bf16.msra.mxu0 0
    %547 = vmatprep.subr.bf16.mxu0 0
    %548 = vmatpush2.bf16.msra.mxu0 0
    %549 = vmatprep.subr.bf16.mxu0 0
    %550 = vmatpush2.bf16.msra.mxu0 0
    %551 = vmatprep.subr.bf16.mxu0 0
    %552 = vmatpush2.bf16.msra.mxu0 0
    %553 = vmatprep.mubr.bf16.mxu0 0
    %554 = vmatmul.mubr.bf16.gmra.mxu0 %v519
    %v555 = vpop.f32.mrf.mxu0
    %v556 = vadd.f32 %v485, %v555
    %v557 = vpop.f32.mrf.mxu0
    %v558 = vpop.f32.mrf.mxu0
    %v559 = vpop.f32.mrf.mxu0
    %560 = vdwg.mxu0
    %561 = vst [vmem:[%s14] sm:$0xff] %v556
    %562 = vrot.lane.b32.xlu0 %v474, 96
    %v563 = vpop.permute.xlu0 %562
    %565 = vst.msk [vmem:[#allocation2] sm:$0xff] %vm129, %v563
    %s566 = scalar_lea.vmem %s1, 8
    %v567 = vld [vmem:[%s566] sm:$0xff]
    %568 = vst.msk [vmem:[#allocation3] sm:$0xff] %vm132, %v567
    %s569 = sld [smem:[#allocation4 + $0x1]]
    %p570 = scmp.eq.s32.totalorder %s569, 0
    // Predicated region
    $region62: #{_forward_impl.3} parent=1 // pred_check
      %p571 = pneg %p570
    $region63: #{_forward_impl.3} parent=1 // pred_check_branch
      %573 = sbr.rel (%p571) target = $region65
    $region64: #{_forward_impl.3} parent=1 // pred_region
      %v574 = vsel %vm127, %v556, -3e+38
      %575 = vmax.xlane.f32.xlu0 %v574
      %v576 = vpop.xlane.xlu0 %575
      %vm577 = vcmp.eq.f32.partialorder %v574, %v576
      %v578 = vsel %vm577, %v126, 128
      %v579 = vand.u32 %v578, 65535
      %v580 = vshra.s32 %v578, 16
      %v581 = vcvt.s32.f32 %v579
      %v582 = vcvt.s32.f32 %v580
      %583 = vmin.xlane.f32.xlu0 %v582
      %v584 = vpop.xlane.xlu0 %583
      %vm585 = vcmp.eq.f32.partialorder %v582, %v584
      %v586 = vsel %vm585, %v581, inf
      %587 = vmin.xlane.f32.xlu0 %v586
      %v588 = vpop.xlane.xlu0 %587
      %v589 = vcvt.f32.s32 %v588
      %v590 = vcvt.f32.s32 %v584
      %v591 = vshll.u32 %v590, 16
      %v592 = vadd.s32 %v591, %v589
      %vm593 = vcmp.eq.s32.totalorder %v126, %v592
      %v594 = vsel %vm593, 1, 0
      %v595 = vcvt.s32.f32 %v594
      %v596 = vpack.c.bf16 %v595, %v595
      %v613 = vunpack.c.l.b16 %v109
      %v614 = vunpack.c.l.b16 %v110
      %v615 = vunpack.c.l.b16 %v111
      %v616 = vunpack.c.l.b16 %v112
      %v617 = vunpack.c.l.b16 %v113
      %v618 = vunpack.c.l.b16 %v114
      %v619 = vunpack.c.l.b16 %v115
      %v620 = vunpack.c.l.b16 %v116
      %v621 = vunpack.c.l.b16 %v117
      %v622 = vunpack.c.l.b16 %v118
      %v623 = vunpack.c.l.b16 %v119
      %v624 = vunpack.c.l.b16 %v120
      %v625 = vunpack.c.l.b16 %v121
      %v626 = vunpack.c.l.b16 %v122
      %v627 = vunpack.c.l.b16 %v123
      %v628 = vunpack.c.l.b16 %v124
      %v629 = vpack.c.b16 %v614, %v613
      %v630 = vpack.c.b16 %v616, %v615
      %v631 = vpack.c.b16 %v618, %v617
      %v632 = vpack.c.b16 %v620, %v619
      %v633 = vpack.c.b16 %v622, %v621
      %v634 = vpack.c.b16 %v624, %v623
      %v635 = vpack.c.b16 %v626, %v625
      %v636 = vpack.c.b16 %v628, %v627
      %645 = vmatprep.subr.bf16.mxu0 0
      %646 = vmatpush1.bf16.msra.mxu0 %v636
      %647 = vmatprep.subr.bf16.mxu0 0
      %648 = vmatpush1.bf16.msra.mxu0 %v635
      %649 = vmatprep.subr.bf16.mxu0 0
      %650 = vmatpush1.bf16.msra.mxu0 %v634
      %651 = vmatprep.subr.bf16.mxu0 0
      %652 = vmatpush1.bf16.msra.mxu0 %v633
      %653 = vmatprep.subr.bf16.mxu0 0
      %654 = vmatpush1.bf16.msra.mxu0 %v632
      %655 = vmatprep.subr.bf16.mxu0 0
      %656 = vmatpush1.bf16.msra.mxu0 %v631
      %657 = vmatprep.subr.bf16.mxu0 0
      %658 = vmatpush1.bf16.msra.mxu0 %v630
      %659 = vmatprep.subr.bf16.mxu0 0
      %660 = vmatpush1.bf16.msra.mxu0 %v629
      %661 = vmatprep.subr.bf16.mxu0 0
      %662 = vmatpush2.bf16.msra.mxu0 0
      %663 = vmatprep.subr.bf16.mxu0 0
      %664 = vmatpush2.bf16.msra.mxu0 0
      %665 = vmatprep.subr.bf16.mxu0 0
      %666 = vmatpush2.bf16.msra.mxu0 0
      %667 = vmatprep.subr.bf16.mxu0 0
      %668 = vmatpush2.bf16.msra.mxu0 0
      %669 = vmatprep.subr.bf16.mxu0 0
      %670 = vmatpush2.bf16.msra.mxu0 0
      %671 = vmatprep.subr.bf16.mxu0 0
      %672 = vmatpush2.bf16.msra.mxu0 0
      %673 = vmatprep.subr.bf16.mxu0 0
      %674 = vmatpush2.bf16.msra.mxu0 0
      %675 = vmatprep.subr.bf16.mxu0 0
      %676 = vmatpush2.bf16.msra.mxu0 0
      %677 = vmatprep.mubr.bf16.mxu0 0
      %678 = vmatmul.mubr.bf16.gmra.mxu0 %v596
      %v679 = vpop.f32.mrf.mxu0
      %v680 = vadd.f32 0.0, %v679
      %v681 = vpop.f32.mrf.mxu0
      %v682 = vpop.f32.mrf.mxu0
      %v683 = vpop.f32.mrf.mxu0
      %684 = vdwg.mxu0
      %685 = vst.msk [vmem:[#allocation3] sm:$0xff] %vm132, %v680
    $region65: #{_forward_impl.3} parent=1 // pred_fallthru
      _
    %v686 = vld [vmem:[#allocation2] sm:$0xff]
    %v687 = vld [vmem:[#allocation3] sm:$0xff]
    %v688 = vmul.f32 %v686, %v140
    %v689 = vsel %vm129, %v688, 0.0
    %690 = vadd.xlane.f32.xlu0 %v689
    %v691 = vpop.xlane.xlu0 %690
    %v692 = vadd.f32 %v77, %v691
    %v693 = vadd.f32 %v78, %v691
    %v694 = vadd.f32 %v79, %v691
    %v695 = vadd.f32 %v80, %v691
    %v696 = vadd.f32 %v81, %v691
    %v697 = vadd.f32 %v82, %v691
    %v698 = vadd.f32 %v83, %v691
    %v699 = vadd.f32 %v84, %v691
    %v700 = vsel %vm154, %v692, -inf
    %v701 = vsel %vm154, %v693, -inf
    %v702 = vsel %vm154, %v694, -inf
    %v703 = vsel %vm154, %v695, -inf
    %v704 = vsel %vm154, %v696, -inf
    %v705 = vmax.f32 %v700, %v704
    %v706 = vsel %vm154, %v697, -inf
    %v707 = vmax.f32 %v701, %v706
    %v708 = vsel %vm154, %v698, -inf
    %v709 = vmax.f32 %v702, %v708
    %v710 = vsel %vm154, %v699, -inf
    %v711 = vmax.f32 %v703, %v710
    %v712 = vmax.f32 %v705, %v707
    %v713 = vmax.f32 %v709, %v711
    %v714 = vmax.f32 %v712, %v713
    %v715 = vsub.f32 %v692, %v714
    %v716 = vsub.f32 %v693, %v714
    %v717 = vsub.f32 %v694, %v714
    %v718 = vsub.f32 %v695, %v714
    %v719 = vsub.f32 %v696, %v714
    %v720 = vsub.f32 %v697, %v714
    %v721 = vsub.f32 %v698, %v714
    %v722 = vsub.f32 %v699, %v714
    %v723 = vmul.f32 %v715, 1.442695
    %v724 = vpow.pop %v723
    %v725 = vmul.f32 %v716, 1.442695
    %v726 = vpow.pop %v725
    %v727 = vmul.f32 %v717, 1.442695
    %v728 = vpow.pop %v727
    %v729 = vmul.f32 %v718, 1.442695
    %v730 = vpow.pop %v729
    %v731 = vmul.f32 %v719, 1.442695
    %v732 = vpow.pop %v731
    %v733 = vmul.f32 %v720, 1.442695
    %v734 = vpow.pop %v733
    %v735 = vmul.f32 %v721, 1.442695
    %v736 = vpow.pop %v735
    %v737 = vmul.f32 %v722, 1.442695
    %v738 = vpow.pop %v737
    %v739 = vsel %vm154, %v724, 0.0
    %v740 = vsel %vm154, %v726, 0.0
    %v741 = vadd.f32 %v739, %v740
    %v742 = vsel %vm154, %v728, 0.0
    %v743 = vadd.f32 %v741, %v742
    %v744 = vsel %vm154, %v730, 0.0
    %v745 = vadd.f32 %v743, %v744
    %v746 = vsel %vm154, %v732, 0.0
    %v747 = vadd.f32 %v745, %v746
    %v748 = vsel %vm154, %v734, 0.0
    %v749 = vadd.f32 %v747, %v748
    %v750 = vsel %vm154, %v736, 0.0
    %v751 = vadd.f32 %v749, %v750
    %v752 = vsel %vm154, %v738, 0.0
    %v753 = vadd.f32 %v751, %v752
    %v754 = vrcp.pop %v753
    %v755 = vmul.f32 %v724, %v754
    %v756 = vmul.f32 %v726, %v754
    %v757 = vmul.f32 %v728, %v754
    %v758 = vmul.f32 %v730, %v754
    %v759 = vmul.f32 %v732, %v754
    %v760 = vmul.f32 %v734, %v754
    %v761 = vmul.f32 %v736, %v754
    %v762 = vmul.f32 %v738, %v754
    %764 = vset.pattern.permute.xlu0 0
    %765 = vperm.xlu0 %764, %v755
    %v766 = vpop.permute.xlu0 %765
    %769 = vset.pattern.permute.xlu0 0
    %770 = vperm.xlu0 %769, %v756
    %v771 = vpop.permute.xlu0 %770
    %774 = vset.pattern.permute.xlu0 0
    %775 = vperm.xlu0 %774, %v757
    %v776 = vpop.permute.xlu0 %775
    %779 = vset.pattern.permute.xlu0 0
    %780 = vperm.xlu0 %779, %v758
    %v781 = vpop.permute.xlu0 %780
    %784 = vset.pattern.permute.xlu0 0
    %785 = vperm.xlu0 %784, %v759
    %v786 = vpop.permute.xlu0 %785
    %789 = vset.pattern.permute.xlu0 0
    %790 = vperm.xlu0 %789, %v760
    %v791 = vpop.permute.xlu0 %790
    %794 = vset.pattern.permute.xlu0 0
    %795 = vperm.xlu0 %794, %v761
    %v796 = vpop.permute.xlu0 %795
    %799 = vset.pattern.permute.xlu0 0
    %800 = vperm.xlu0 %799, %v762
    %v801 = vpop.permute.xlu0 %800
    %v803 = vmul.f32 %v61, %v766
    %v804 = vmul.f32 %v62, %v771
    %v805 = vmul.f32 %v63, %v776
    %v806 = vmul.f32 %v64, %v781
    %v807 = vmul.f32 %v65, %v786
    %v808 = vmul.f32 %v66, %v791
    %v809 = vmul.f32 %v67, %v796
    %v810 = vmul.f32 %v68, %v801
    %v811 = vsel %vm132, %v803, 0.0
    %v812 = vsel %vm132, %v804, 0.0
    %v813 = vadd.f32 %v811, %v812
    %v814 = vsel %vm132, %v805, 0.0
    %v815 = vadd.f32 %v813, %v814
    %v816 = vsel %vm132, %v806, 0.0
    %v817 = vadd.f32 %v815, %v816
    %v818 = vsel %vm132, %v807, 0.0
    %v819 = vadd.f32 %v817, %v818
    %v820 = vsel %vm132, %v808, 0.0
    %v821 = vadd.f32 %v819, %v820
    %v822 = vsel %vm132, %v809, 0.0
    %v823 = vadd.f32 %v821, %v822
    %v824 = vsel %vm132, %v810, 0.0
    %v825 = vadd.f32 %v823, %v824
    %v826 = vmul.f32 %v69, %v766
    %v827 = vmul.f32 %v70, %v771
    %v828 = vmul.f32 %v71, %v776
    %v829 = vmul.f32 %v72, %v781
    %v830 = vmul.f32 %v73, %v786
    %v831 = vmul.f32 %v74, %v791
    %v832 = vmul.f32 %v75, %v796
    %v833 = vmul.f32 %v76, %v801
    %v834 = vsel %vm132, %v826, 0.0
    %v835 = vsel %vm132, %v827, 0.0
    %v836 = vadd.f32 %v834, %v835
    %v837 = vsel %vm132, %v828, 0.0
    %v838 = vadd.f32 %v836, %v837
    %v839 = vsel %vm132, %v829, 0.0
    %v840 = vadd.f32 %v838, %v839
    %v841 = vsel %vm132, %v830, 0.0
    %v842 = vadd.f32 %v840, %v841
    %v843 = vsel %vm132, %v831, 0.0
    %v844 = vadd.f32 %v842, %v843
    %v845 = vsel %vm132, %v832, 0.0
    %v846 = vadd.f32 %v844, %v845
    %v847 = vsel %vm132, %v833, 0.0
    %v848 = vadd.f32 %v846, %v847
    %850 = vrot.lane.b32.xlu0 %v825, 16
    %v851 = vpop.permute.xlu0 %850
    %854 = vrot.lane.b32.xlu0 %v848, 32
    %v855 = vpop.permute.xlu0 %854
    %v857 = vsel %vm132, %v687, %v851
    %v858 = vsel %vm129, %v857, %v855
    %v859 = vpack.c.bf16 %v858, %v858
    %v861 = vsel %vm339, %v859, 0
    %863 = vmatprep.subr.bf16.mxu0 0
    %864 = vmatpush1.bf16.msra.mxu0 0
    %865 = vmatprep.subr.bf16.mxu0 0
    %866 = vmatpush1.bf16.msra.mxu0 0
    %867 = vmatprep.subr.bf16.mxu0 0
    %868 = vmatpush1.bf16.msra.mxu0 0
    %869 = vmatprep.subr.bf16.mxu0 0
    %870 = vmatpush1.bf16.msra.mxu0 0
    %871 = vmatprep.subr.bf16.mxu0 0
    %872 = vmatpush1.bf16.msra.mxu0 0
    %873 = vmatprep.subr.bf16.mxu0 0
    %874 = vmatpush1.bf16.msra.mxu0 %v335
    %875 = vmatprep.subr.bf16.mxu0 0
    %876 = vmatpush1.bf16.msra.mxu0 %v334
    %877 = vmatprep.subr.bf16.mxu0 0
    %878 = vmatpush1.bf16.msra.mxu0 %v333
    %879 = vmatprep.subr.bf16.mxu0 0
    %880 = vmatpush2.bf16.msra.mxu0 0
    %881 = vmatprep.subr.bf16.mxu0 0
    %882 = vmatpush2.bf16.msra.mxu0 0
    %883 = vmatprep.subr.bf16.mxu0 0
    %884 = vmatpush2.bf16.msra.mxu0 0
    %885 = vmatprep.subr.bf16.mxu0 0
    %886 = vmatpush2.bf16.msra.mxu0 0
    %887 = vmatprep.subr.bf16.mxu0 0
    %888 = vmatpush2.bf16.msra.mxu0 0
    %889 = vmatprep.subr.bf16.mxu0 0
    %890 = vmatpush2.bf16.msra.mxu0 0
    %891 = vmatprep.subr.bf16.mxu0 0
    %892 = vmatpush2.bf16.msra.mxu0 0
    %893 = vmatprep.subr.bf16.mxu0 0
    %894 = vmatpush2.bf16.msra.mxu0 0
    %895 = vmatprep.mubr.bf16.mxu0 0
    %896 = vmatmul.mubr.bf16.gmra.mxu0 %v861
    %v897 = vpop.f32.mrf.mxu0
    %v898 = vadd.f32 %v319, %v897
    %v899 = vpop.f32.mrf.mxu0
    %v900 = vpop.f32.mrf.mxu0
    %v901 = vpop.f32.mrf.mxu0
    %902 = vdwg.mxu0
    %v903 = vpack.c.bf16 %v686, %v686
    %v905 = vsel %vm129, %v903, 0
    %907 = vmatprep.subr.bf16.mxu0 0
    %908 = vmatpush1.bf16.msra.mxu0 0
    %909 = vmatprep.subr.bf16.mxu0 0
    %910 = vmatpush1.bf16.msra.mxu0 0
    %911 = vmatprep.subr.bf16.mxu0 0
    %912 = vmatpush1.bf16.msra.mxu0 0
    %913 = vmatprep.subr.bf16.mxu0 0
    %914 = vmatpush1.bf16.msra.mxu0 0
    %915 = vmatprep.subr.bf16.mxu0 0
    %916 = vmatpush1.bf16.msra.mxu0 0
    %917 = vmatprep.subr.bf16.mxu0 0
    %918 = vmatpush1.bf16.msra.mxu0 0
    %919 = vmatprep.subr.bf16.mxu0 0
    %920 = vmatpush1.bf16.msra.mxu0 %v399
    %921 = vmatprep.subr.bf16.mxu0 0
    %922 = vmatpush1.bf16.msra.mxu0 %v398
    %923 = vmatprep.subr.bf16.mxu0 0
    %924 = vmatpush2.bf16.msra.mxu0 0
    %925 = vmatprep.subr.bf16.mxu0 0
    %926 = vmatpush2.bf16.msra.mxu0 0
    %927 = vmatprep.subr.bf16.mxu0 0
    %928 = vmatpush2.bf16.msra.mxu0 0
    %929 = vmatprep.subr.bf16.mxu0 0
    %930 = vmatpush2.bf16.msra.mxu0 0
    %931 = vmatprep.subr.bf16.mxu0 0
    %932 = vmatpush2.bf16.msra.mxu0 0
    %933 = vmatprep.subr.bf16.mxu0 0
    %934 = vmatpush2.bf16.msra.mxu0 0
    %935 = vmatprep.subr.bf16.mxu0 0
    %936 = vmatpush2.bf16.msra.mxu0 0
    %937 = vmatprep.subr.bf16.mxu0 0
    %938 = vmatpush2.bf16.msra.mxu0 0
    %939 = vmatprep.mubr.bf16.mxu0 0
    %940 = vmatmul.mubr.bf16.gmra.mxu0 %v905
    %v941 = vpop.f32.mrf.mxu0
    %v942 = vadd.f32 %v388, %v941
    %v943 = vpop.f32.mrf.mxu0
    %v944 = vpop.f32.mrf.mxu0
    %v945 = vpop.f32.mrf.mxu0
    %946 = vdwg.mxu0
    %v947 = vadd.f32 %v898, %v942
    %v948 = vxor.u32 %v947, 2147483648
    %v949 = vmul.f32 %v948, 1.442695
    %v950 = vpow.pop %v949
    %v951 = vadd.f32 %v950, 1.0
    %v952 = vrcp.pop %v951
    %v953 = vmul.f32 1.0, %v952
    %955 = vrot.lane.b32.xlu0 %v942, 64
    %v956 = vpop.permute.xlu0 %955
    %v958 = vmul.f32 %v953, %v956
    %960 = vrot.lane.b32.xlu0 %v958, 64
    %v961 = vpop.permute.xlu0 %960
    %v963 = vadd.f32 %v898, %v961
    %v964 = vtanh.pop %v963
    %v965 = vsub.f32 1.0, %v953
    %967 = vrot.lane.b32.xlu0 %v964, 96
    %v968 = vpop.permute.xlu0 %967
    %v970 = vmul.f32 %v965, %v968
    %972 = vrot.lane.b32.xlu0 %v686, 32
    %v973 = vpop.permute.xlu0 %972
    %v975 = vmul.f32 %v953, %v973
    %v976 = vadd.f32 %v970, %v975
    %978 = vrot.lane.b32.xlu0 %v976, 16
    %v979 = vpop.permute.xlu0 %978
    %v981 = vsel %vm339, %v858, %v979
    %v982 = vpack.c.bf16 %v981, %v981
    %v984 = vsel %vm517, %v982, 0
    %986 = vmatprep.subr.bf16.mxu0 0
    %987 = vmatpush1.bf16.msra.mxu0 0
    %988 = vmatprep.subr.bf16.mxu0 0
    %989 = vmatpush1.bf16.msra.mxu0 0
    %990 = vmatprep.subr.bf16.mxu0 0
    %991 = vmatpush1.bf16.msra.mxu0 0
    %992 = vmatprep.subr.bf16.mxu0 0
    %993 = vmatpush1.bf16.msra.mxu0 %v511
    %994 = vmatprep.subr.bf16.mxu0 0
    %995 = vmatpush1.bf16.msra.mxu0 %v510
    %996 = vmatprep.subr.bf16.mxu0 0
    %997 = vmatpush1.bf16.msra.mxu0 %v509
    %998 = vmatprep.subr.bf16.mxu0 0
    %999 = vmatpush1.bf16.msra.mxu0 %v508
    %1000 = vmatprep.subr.bf16.mxu0 0
    %1001 = vmatpush1.bf16.msra.mxu0 %v507
    %1002 = vmatprep.subr.bf16.mxu0 0
    %1003 = vmatpush2.bf16.msra.mxu0 0
    %1004 = vmatprep.subr.bf16.mxu0 0
    %1005 = vmatpush2.bf16.msra.mxu0 0
    %1006 = vmatprep.subr.bf16.mxu0 0
    %1007 = vmatpush2.bf16.msra.mxu0 0
    %1008 = vmatprep.subr.bf16.mxu0 0
    %1009 = vmatpush2.bf16.msra.mxu0 0
    %1010 = vmatprep.subr.bf16.mxu0 0
    %1011 = vmatpush2.bf16.msra.mxu0 0
    %1012 = vmatprep.subr.bf16.mxu0 0
    %1013 = vmatpush2.bf16.msra.mxu0 0
    %1014 = vmatprep.subr.bf16.mxu0 0
    %1015 = vmatpush2.bf16.msra.mxu0 0
    %1016 = vmatprep.subr.bf16.mxu0 0
    %1017 = vmatpush2.bf16.msra.mxu0 0
    %1018 = vmatprep.mubr.bf16.mxu0 0
    %1019 = vmatmul.mubr.bf16.gmra.mxu0 %v984
    %v1020 = vpop.f32.mrf.mxu0
    %v1021 = vadd.f32 %v485, %v1020
    %v1022 = vpop.f32.mrf.mxu0
    %v1023 = vpop.f32.mrf.mxu0
    %v1024 = vpop.f32.mrf.mxu0
    %1025 = vdwg.mxu0
    %s1026 = scalar_lea.vmem %s14, 8
    %1027 = vst [vmem:[%s1026] sm:$0xff] %v1021
    %1028 = vrot.lane.b32.xlu0 %v976, 96
    %v1029 = vpop.permute.xlu0 %1028
    %1031 = vst.msk [vmem:[#allocation2] sm:$0xff] %vm129, %v1029
    %s1032 = scalar_lea.vmem %s1, 16
    %v1033 = vld [vmem:[%s1032] sm:$0xff]
    %1034 = vst.msk [vmem:[#allocation3] sm:$0xff] %vm132, %v1033
    %s1035 = sld [smem:[#allocation4 + $0x2]]
    %p1036 = scmp.eq.s32.totalorder %s1035, 0
    // Predicated region
    $region66: #{_forward_impl.3} parent=1 // pred_check
      %p1037 = pneg %p1036
    $region67: #{_forward_impl.3} parent=1 // pred_check_branch
      %1039 = sbr.rel (%p1037) target = $region69
    $region68: #{_forward_impl.3} parent=1 // pred_region
      %v1040 = vsel %vm127, %v1021, -3e+38
      %1041 = vmax.xlane.f32.xlu0 %v1040
      %v1042 = vpop.xlane.xlu0 %1041
      %vm1043 = vcmp.eq.f32.partialorder %v1040, %v1042
      %v1044 = vsel %vm1043, %v126, 128
      %v1045 = vand.u32 %v1044, 65535
      %v1046 = vshra.s32 %v1044, 16
      %v1047 = vcvt.s32.f32 %v1045
      %v1048 = vcvt.s32.f32 %v1046
      %1049 = vmin.xlane.f32.xlu0 %v1048
      %v1050 = vpop.xlane.xlu0 %1049
      %vm1051 = vcmp.eq.f32.partialorder %v1048, %v1050
      %v1052 = vsel %vm1051, %v1047, inf
      %1053 = vmin.xlane.f32.xlu0 %v1052
      %v1054 = vpop.xlane.xlu0 %1053
      %v1055 = vcvt.f32.s32 %v1054
      %v1056 = vcvt.f32.s32 %v1050
      %v1057 = vshll.u32 %v1056, 16
      %v1058 = vadd.s32 %v1057, %v1055
      %vm1059 = vcmp.eq.s32.totalorder %v126, %v1058
      %v1060 = vsel %vm1059, 1, 0
      %v1061 = vcvt.s32.f32 %v1060
      %v1062 = vpack.c.bf16 %v1061, %v1061
      %v1079 = vunpack.c.l.b16 %v109
      %v1080 = vunpack.c.l.b16 %v110
      %v1081 = vunpack.c.l.b16 %v111
      %v1082 = vunpack.c.l.b16 %v112
      %v1083 = vunpack.c.l.b16 %v113
      %v1084 = vunpack.c.l.b16 %v114
      %v1085 = vunpack.c.l.b16 %v115
      %v1086 = vunpack.c.l.b16 %v116
      %v1087 = vunpack.c.l.b16 %v117
      %v1088 = vunpack.c.l.b16 %v118
      %v1089 = vunpack.c.l.b16 %v119
      %v1090 = vunpack.c.l.b16 %v120
      %v1091 = vunpack.c.l.b16 %v121
      %v1092 = vunpack.c.l.b16 %v122
      %v1093 = vunpack.c.l.b16 %v123
      %v1094 = vunpack.c.l.b16 %v124
      %v1095 = vpack.c.b16 %v1080, %v1079
      %v1096 = vpack.c.b16 %v1082, %v1081
      %v1097 = vpack.c.b16 %v1084, %v1083
      %v1098 = vpack.c.b16 %v1086, %v1085
      %v1099 = vpack.c.b16 %v1088, %v1087
      %v1100 = vpack.c.b16 %v1090, %v1089
      %v1101 = vpack.c.b16 %v1092, %v1091
      %v1102 = vpack.c.b16 %v1094, %v1093
      %1111 = vmatprep.subr.bf16.mxu0 0
      %1112 = vmatpush1.bf16.msra.mxu0 %v1102
      %1113 = vmatprep.subr.bf16.mxu0 0
      %1114 = vmatpush1.bf16.msra.mxu0 %v1101
      %1115 = vmatprep.subr.bf16.mxu0 0
      %1116 = vmatpush1.bf16.msra.mxu0 %v1100
      %1117 = vmatprep.subr.bf16.mxu0 0
      %1118 = vmatpush1.bf16.msra.mxu0 %v1099
      %1119 = vmatprep.subr.bf16.mxu0 0
      %1120 = vmatpush1.bf16.msra.mxu0 %v1098
      %1121 = vmatprep.subr.bf16.mxu0 0
      %1122 = vmatpush1.bf16.msra.mxu0 %v1097
      %1123 = vmatprep.subr.bf16.mxu0 0
      %1124 = vmatpush1.bf16.msra.mxu0 %v1096
      %1125 = vmatprep.subr.bf16.mxu0 0
      %1126 = vmatpush1.bf16.msra.mxu0 %v1095
      %1127 = vmatprep.subr.bf16.mxu0 0
      %1128 = vmatpush2.bf16.msra.mxu0 0
      %1129 = vmatprep.subr.bf16.mxu0 0
      %1130 = vmatpush2.bf16.msra.mxu0 0
      %1131 = vmatprep.subr.bf16.mxu0 0
      %1132 = vmatpush2.bf16.msra.mxu0 0
      %1133 = vmatprep.subr.bf16.mxu0 0
      %1134 = vmatpush2.bf16.msra.mxu0 0
      %1135 = vmatprep.subr.bf16.mxu0 0
      %1136 = vmatpush2.bf16.msra.mxu0 0
      %1137 = vmatprep.subr.bf16.mxu0 0
      %1138 = vmatpush2.bf16.msra.mxu0 0
      %1139 = vmatprep.subr.bf16.mxu0 0
      %1140 = vmatpush2.bf16.msra.mxu0 0
      %1141 = vmatprep.subr.bf16.mxu0 0
      %1142 = vmatpush2.bf16.msra.mxu0 0
      %1143 = vmatprep.mubr.bf16.mxu0 0
      %1144 = vmatmul.mubr.bf16.gmra.mxu0 %v1062
      %v1145 = vpop.f32.mrf.mxu0
      %v1146 = vadd.f32 0.0, %v1145
      %v1147 = vpop.f32.mrf.mxu0
      %v1148 = vpop.f32.mrf.mxu0
      %v1149 = vpop.f32.mrf.mxu0
      %1150 = vdwg.mxu0
      %1151 = vst.msk [vmem:[#allocation3] sm:$0xff] %vm132, %v1146
    $region69: #{_forward_impl.3} parent=1 // pred_fallthru
      _
    %v1152 = vld [vmem:[#allocation2] sm:$0xff]
    %v1153 = vld [vmem:[#allocation3] sm:$0xff]
    %v1154 = vmul.f32 %v1152, %v140
    %v1155 = vsel %vm129, %v1154, 0.0
    %1156 = vadd.xlane.f32.xlu0 %v1155
    %v1157 = vpop.xlane.xlu0 %1156
    %v1158 = vadd.f32 %v77, %v1157
    %v1159 = vadd.f32 %v78, %v1157
    %v1160 = vadd.f32 %v79, %v1157
    %v1161 = vadd.f32 %v80, %v1157
    %v1162 = vadd.f32 %v81, %v1157
    %v1163 = vadd.f32 %v82, %v1157
    %v1164 = vadd.f32 %v83, %v1157
    %v1165 = vadd.f32 %v84, %v1157
    %v1166 = vsel %vm154, %v1158, -inf
    %v1167 = vsel %vm154, %v1159, -inf
    %v1168 = vsel %vm154, %v1160, -inf
    %v1169 = vsel %vm154, %v1161, -inf
    %v1170 = vsel %vm154, %v1162, -inf
    %v1171 = vmax.f32 %v1166, %v1170
    %v1172 = vsel %vm154, %v1163, -inf
    %v1173 = vmax.f32 %v1167, %v1172
    %v1174 = vsel %vm154, %v1164, -inf
    %v1175 = vmax.f32 %v1168, %v1174
    %v1176 = vsel %vm154, %v1165, -inf
    %v1177 = vmax.f32 %v1169, %v1176
    %v1178 = vmax.f32 %v1171, %v1173
    %v1179 = vmax.f32 %v1175, %v1177
    %v1180 = vmax.f32 %v1178, %v1179
    %v1181 = vsub.f32 %v1158, %v1180
    %v1182 = vsub.f32 %v1159, %v1180
    %v1183 = vsub.f32 %v1160, %v1180
    %v1184 = vsub.f32 %v1161, %v1180
    %v1185 = vsub.f32 %v1162, %v1180
    %v1186 = vsub.f32 %v1163, %v1180
    %v1187 = vsub.f32 %v1164, %v1180
    %v1188 = vsub.f32 %v1165, %v1180
    %v1189 = vmul.f32 %v1181, 1.442695
    %v1190 = vpow.pop %v1189
    %v1191 = vmul.f32 %v1182, 1.442695
    %v1192 = vpow.pop %v1191
    %v1193 = vmul.f32 %v1183, 1.442695
    %v1194 = vpow.pop %v1193
    %v1195 = vmul.f32 %v1184, 1.442695
    %v1196 = vpow.pop %v1195
    %v1197 = vmul.f32 %v1185, 1.442695
    %v1198 = vpow.pop %v1197
    %v1199 = vmul.f32 %v1186, 1.442695
    %v1200 = vpow.pop %v1199
    %v1201 = vmul.f32 %v1187, 1.442695
    %v1202 = vpow.pop %v1201
    %v1203 = vmul.f32 %v1188, 1.442695
    %v1204 = vpow.pop %v1203
    %v1205 = vsel %vm154, %v1190, 0.0
    %v1206 = vsel %vm154, %v1192, 0.0
    %v1207 = vadd.f32 %v1205, %v1206
    %v1208 = vsel %vm154, %v1194, 0.0
    %v1209 = vadd.f32 %v1207, %v1208
    %v1210 = vsel %vm154, %v1196, 0.0
    %v1211 = vadd.f32 %v1209, %v1210
    %v1212 = vsel %vm154, %v1198, 0.0
    %v1213 = vadd.f32 %v1211, %v1212
    %v1214 = vsel %vm154, %v1200, 0.0
    %v1215 = vadd.f32 %v1213, %v1214
    %v1216 = vsel %vm154, %v1202, 0.0
    %v1217 = vadd.f32 %v1215, %v1216
    %v1218 = vsel %vm154, %v1204, 0.0
    %v1219 = vadd.f32 %v1217, %v1218
    %v1220 = vrcp.pop %v1219
    %v1221 = vmul.f32 %v1190, %v1220
    %v1222 = vmul.f32 %v1192, %v1220
    %v1223 = vmul.f32 %v1194, %v1220
    %v1224 = vmul.f32 %v1196, %v1220
    %v1225 = vmul.f32 %v1198, %v1220
    %v1226 = vmul.f32 %v1200, %v1220
    %v1227 = vmul.f32 %v1202, %v1220
    %v1228 = vmul.f32 %v1204, %v1220
    %1230 = vset.pattern.permute.xlu0 0
    %1231 = vperm.xlu0 %1230, %v1221
    %v1232 = vpop.permute.xlu0 %1231
    %1235 = vset.pattern.permute.xlu0 0
    %1236 = vperm.xlu0 %1235, %v1222
    %v1237 = vpop.permute.xlu0 %1236
    %1240 = vset.pattern.permute.xlu0 0
    %1241 = vperm.xlu0 %1240, %v1223
    %v1242 = vpop.permute.xlu0 %1241
    %1245 = vset.pattern.permute.xlu0 0
    %1246 = vperm.xlu0 %1245, %v1224
    %v1247 = vpop.permute.xlu0 %1246
    %1250 = vset.pattern.permute.xlu0 0
    %1251 = vperm.xlu0 %1250, %v1225
    %v1252 = vpop.permute.xlu0 %1251
    %1255 = vset.pattern.permute.xlu0 0
    %1256 = vperm.xlu0 %1255, %v1226
    %v1257 = vpop.permute.xlu0 %1256
    %1260 = vset.pattern.permute.xlu0 0
    %1261 = vperm.xlu0 %1260, %v1227
    %v1262 = vpop.permute.xlu0 %1261
    %1265 = vset.pattern.permute.xlu0 0
    %1266 = vperm.xlu0 %1265, %v1228
    %v1267 = vpop.permute.xlu0 %1266
    %v1269 = vmul.f32 %v61, %v1232
    %v1270 = vmul.f32 %v62, %v1237
    %v1271 = vmul.f32 %v63, %v1242
    %v1272 = vmul.f32 %v64, %v1247
    %v1273 = vmul.f32 %v65, %v1252
    %v1274 = vmul.f32 %v66, %v1257
    %v1275 = vmul.f32 %v67, %v1262
    %v1276 = vmul.f32 %v68, %v1267
    %v1277 = vsel %vm132, %v1269, 0.0
    %v1278 = vsel %vm132, %v1270, 0.0
    %v1279 = vadd.f32 %v1277, %v1278
    %v1280 = vsel %vm132, %v1271, 0.0
    %v1281 = vadd.f32 %v1279, %v1280
    %v1282 = vsel %vm132, %v1272, 0.0
    %v1283 = vadd.f32 %v1281, %v1282
    %v1284 = vsel %vm132, %v1273, 0.0
    %v1285 = vadd.f32 %v1283, %v1284
    %v1286 = vsel %vm132, %v1274, 0.0
    %v1287 = vadd.f32 %v1285, %v1286
    %v1288 = vsel %vm132, %v1275, 0.0
    %v1289 = vadd.f32 %v1287, %v1288
    %v1290 = vsel %vm132, %v1276, 0.0
    %v1291 = vadd.f32 %v1289, %v1290
    %v1292 = vmul.f32 %v69, %v1232
    %v1293 = vmul.f32 %v70, %v1237
    %v1294 = vmul.f32 %v71, %v1242
    %v1295 = vmul.f32 %v72, %v1247
    %v1296 = vmul.f32 %v73, %v1252
    %v1297 = vmul.f32 %v74, %v1257
    %v1298 = vmul.f32 %v75, %v1262
    %v1299 = vmul.f32 %v76, %v1267
    %v1300 = vsel %vm132, %v1292, 0.0
    %v1301 = vsel %vm132, %v1293, 0.0
    %v1302 = vadd.f32 %v1300, %v1301
    %v1303 = vsel %vm132, %v1294, 0.0
    %v1304 = vadd.f32 %v1302, %v1303
    %v1305 = vsel %vm132, %v1295, 0.0
    %v1306 = vadd.f32 %v1304, %v1305
    %v1307 = vsel %vm132, %v1296, 0.0
    %v1308 = vadd.f32 %v1306, %v1307
    %v1309 = vsel %vm132, %v1297, 0.0
    %v1310 = vadd.f32 %v1308, %v1309
    %v1311 = vsel %vm132, %v1298, 0.0
    %v1312 = vadd.f32 %v1310, %v1311
    %v1313 = vsel %vm132, %v1299, 0.0
    %v1314 = vadd.f32 %v1312, %v1313
    %1316 = vrot.lane.b32.xlu0 %v1291, 16
    %v1317 = vpop.permute.xlu0 %1316
    %1320 = vrot.lane.b32.xlu0 %v1314, 32
    %v1321 = vpop.permute.xlu0 %1320
    %v1323 = vsel %vm132, %v1153, %v1317
    %v1324 = vsel %vm129, %v1323, %v1321
    %v1325 = vpack.c.bf16 %v1324, %v1324
    %v1327 = vsel %vm339, %v1325, 0
    %1329 = vmatprep.subr.bf16.mxu0 0
    %1330 = vmatpush1.bf16.msra.mxu0 0
    %1331 = vmatprep.subr.bf16.mxu0 0
    %1332 = vmatpush1.bf16.msra.mxu0 0
    %1333 = vmatprep.subr.bf16.mxu0 0
    %1334 = vmatpush1.bf16.msra.mxu0 0
    %1335 = vmatprep.subr.bf16.mxu0 0
    %1336 = vmatpush1.bf16.msra.mxu0 0
    %1337 = vmatprep.subr.bf16.mxu0 0
    %1338 = vmatpush1.bf16.msra.mxu0 0
    %1339 = vmatprep.subr.bf16.mxu0 0
    %1340 = vmatpush1.bf16.msra.mxu0 %v335
    %1341 = vmatprep.subr.bf16.mxu0 0
    %1342 = vmatpush1.bf16.msra.mxu0 %v334
    %1343 = vmatprep.subr.bf16.mxu0 0
    %1344 = vmatpush1.bf16.msra.mxu0 %v333
    %1345 = vmatprep.subr.bf16.mxu0 0
    %1346 = vmatpush2.bf16.msra.mxu0 0
    %1347 = vmatprep.subr.bf16.mxu0 0
    %1348 = vmatpush2.bf16.msra.mxu0 0
    %1349 = vmatprep.subr.bf16.mxu0 0
    %1350 = vmatpush2.bf16.msra.mxu0 0
    %1351 = vmatprep.subr.bf16.mxu0 0
    %1352 = vmatpush2.bf16.msra.mxu0 0
    %1353 = vmatprep.subr.bf16.mxu0 0
    %1354 = vmatpush2.bf16.msra.mxu0 0
    %1355 = vmatprep.subr.bf16.mxu0 0
    %1356 = vmatpush2.bf16.msra.mxu0 0
    %1357 = vmatprep.subr.bf16.mxu0 0
    %1358 = vmatpush2.bf16.msra.mxu0 0
    %1359 = vmatprep.subr.bf16.mxu0 0
    %1360 = vmatpush2.bf16.msra.mxu0 0
    %1361 = vmatprep.mubr.bf16.mxu0 0
    %1362 = vmatmul.mubr.bf16.gmra.mxu0 %v1327
    %v1363 = vpop.f32.mrf.mxu0
    %v1364 = vadd.f32 %v319, %v1363
    %v1365 = vpop.f32.mrf.mxu0
    %v1366 = vpop.f32.mrf.mxu0
    %v1367 = vpop.f32.mrf.mxu0
    %1368 = vdwg.mxu0
    %v1369 = vpack.c.bf16 %v1152, %v1152
    %v1371 = vsel %vm129, %v1369, 0
    %1373 = vmatprep.subr.bf16.mxu0 0
    %1374 = vmatpush1.bf16.msra.mxu0 0
    %1375 = vmatprep.subr.bf16.mxu0 0
    %1376 = vmatpush1.bf16.msra.mxu0 0
    %1377 = vmatprep.subr.bf16.mxu0 0
    %1378 = vmatpush1.bf16.msra.mxu0 0
    %1379 = vmatprep.subr.bf16.mxu0 0
    %1380 = vmatpush1.bf16.msra.mxu0 0
    %1381 = vmatprep.subr.bf16.mxu0 0
    %1382 = vmatpush1.bf16.msra.mxu0 0
    %1383 = vmatprep.subr.bf16.mxu0 0
    %1384 = vmatpush1.bf16.msra.mxu0 0
    %1385 = vmatprep.subr.bf16.mxu0 0
    %1386 = vmatpush1.bf16.msra.mxu0 %v399
    %1387 = vmatprep.subr.bf16.mxu0 0
    %1388 = vmatpush1.bf16.msra.mxu0 %v398
    %1389 = vmatprep.subr.bf16.mxu0 0
    %1390 = vmatpush2.bf16.msra.mxu0 0
    %1391 = vmatprep.subr.bf16.mxu0 0
    %1392 = vmatpush2.bf16.msra.mxu0 0
    %1393 = vmatprep.subr.bf16.mxu0 0
    %1394 = vmatpush2.bf16.msra.mxu0 0
    %1395 = vmatprep.subr.bf16.mxu0 0
    %1396 = vmatpush2.bf16.msra.mxu0 0
    %1397 = vmatprep.subr.bf16.mxu0 0
    %1398 = vmatpush2.bf16.msra.mxu0 0
    %1399 = vmatprep.subr.bf16.mxu0 0
    %1400 = vmatpush2.bf16.msra.mxu0 0
    %1401 = vmatprep.subr.bf16.mxu0 0
    %1402 = vmatpush2.bf16.msra.mxu0 0
    %1403 = vmatprep.subr.bf16.mxu0 0
    %1404 = vmatpush2.bf16.msra.mxu0 0
    %1405 = vmatprep.mubr.bf16.mxu0 0
    %1406 = vmatmul.mubr.bf16.gmra.mxu0 %v1371
    %v1407 = vpop.f32.mrf.mxu0
    %v1408 = vadd.f32 %v388, %v1407
    %v1409 = vpop.f32.mrf.mxu0
    %v1410 = vpop.f32.mrf.mxu0
    %v1411 = vpop.f32.mrf.mxu0
    %1412 = vdwg.mxu0
    %v1413 = vadd.f32 %v1364, %v1408
    %v1414 = vxor.u32 %v1413, 2147483648
    %v1415 = vmul.f32 %v1414, 1.442695
    %v1416 = vpow.pop %v1415
    %v1417 = vadd.f32 %v1416, 1.0
    %v1418 = vrcp.pop %v1417
    %v1419 = vmul.f32 1.0, %v1418
    %1421 = vrot.lane.b32.xlu0 %v1408, 64
    %v1422 = vpop.permute.xlu0 %1421
    %v1424 = vmul.f32 %v1419, %v1422
    %1426 = vrot.lane.b32.xlu0 %v1424, 64
    %v1427 = vpop.permute.xlu0 %1426
    %v1429 = vadd.f32 %v1364, %v1427
    %v1430 = vtanh.pop %v1429
    %v1431 = vsub.f32 1.0, %v1419
    %1433 = vrot.lane.b32.xlu0 %v1430, 96
    %v1434 = vpop.permute.xlu0 %1433
    %v1436 = vmul.f32 %v1431, %v1434
    %1438 = vrot.lane.b32.xlu0 %v1152, 32
    %v1439 = vpop.permute.xlu0 %1438
    %v1441 = vmul.f32 %v1419, %v1439
    %v1442 = vadd.f32 %v1436, %v1441
    %1444 = vrot.lane.b32.xlu0 %v1442, 16
    %v1445 = vpop.permute.xlu0 %1444
    %v1447 = vsel %vm339, %v1324, %v1445
    %v1448 = vpack.c.bf16 %v1447, %v1447
    %v1450 = vsel %vm517, %v1448, 0
    %1452 = vmatprep.subr.bf16.mxu0 0
    %1453 = vmatpush1.bf16.msra.mxu0 0
    %1454 = vmatprep.subr.bf16.mxu0 0
    %1455 = vmatpush1.bf16.msra.mxu0 0
    %1456 = vmatprep.subr.bf16.mxu0 0
    %1457 = vmatpush1.bf16.msra.mxu0 0
    %1458 = vmatprep.subr.bf16.mxu0 0
    %1459 = vmatpush1.bf16.msra.mxu0 %v511
    %1460 = vmatprep.subr.bf16.mxu0 0
    %1461 = vmatpush1.bf16.msra.mxu0 %v510
    %1462 = vmatprep.subr.bf16.mxu0 0
    %1463 = vmatpush1.bf16.msra.mxu0 %v509
    %1464 = vmatprep.subr.bf16.mxu0 0
    %1465 = vmatpush1.bf16.msra.mxu0 %v508
    %1466 = vmatprep.subr.bf16.mxu0 0
    %1467 = vmatpush1.bf16.msra.mxu0 %v507
    %1468 = vmatprep.subr.bf16.mxu0 0
    %1469 = vmatpush2.bf16.msra.mxu0 0
    %1470 = vmatprep.subr.bf16.mxu0 0
    %1471 = vmatpush2.bf16.msra.mxu0 0
    %1472 = vmatprep.subr.bf16.mxu0 0
    %1473 = vmatpush2.bf16.msra.mxu0 0
    %1474 = vmatprep.subr.bf16.mxu0 0
    %1475 = vmatpush2.bf16.msra.mxu0 0
    %1476 = vmatprep.subr.bf16.mxu0 0
    %1477 = vmatpush2.bf16.msra.mxu0 0
    %1478 = vmatprep.subr.bf16.mxu0 0
    %1479 = vmatpush2.bf16.msra.mxu0 0
    %1480 = vmatprep.subr.bf16.mxu0 0
    %1481 = vmatpush2.bf16.msra.mxu0 0
    %1482 = vmatprep.subr.bf16.mxu0 0
    %1483 = vmatpush2.bf16.msra.mxu0 0
    %1484 = vmatprep.mubr.bf16.mxu0 0
    %1485 = vmatmul.mubr.bf16.gmra.mxu0 %v1450
    %v1486 = vpop.f32.mrf.mxu0
    %v1487 = vadd.f32 %v485, %v1486
    %v1488 = vpop.f32.mrf.mxu0
    %v1489 = vpop.f32.mrf.mxu0
    %v1490 = vpop.f32.mrf.mxu0
    %1491 = vdwg.mxu0
    %s1492 = scalar_lea.vmem %s14, 16
    %1493 = vst [vmem:[%s1492] sm:$0xff] %v1487
    %1494 = vrot.lane.b32.xlu0 %v1442, 96
    %v1495 = vpop.permute.xlu0 %1494
    %1497 = vst.msk [vmem:[#allocation2] sm:$0xff] %vm129, %v1495
    %s1498 = scalar_lea.vmem %s1, 24
    %v1499 = vld [vmem:[%s1498] sm:$0xff]
    %1500 = vst.msk [vmem:[#allocation3] sm:$0xff] %vm132, %v1499
    %s1501 = sld [smem:[#allocation4 + $0x3]]
    %p1502 = scmp.eq.s32.totalorder %s1501, 0
    // Predicated region
    $region70: #{_forward_impl.3} parent=1 // pred_check
      %p1503 = pneg %p1502
    $region71: #{_forward_impl.3} parent=1 // pred_check_branch
      %1505 = sbr.rel (%p1503) target = $region73
    $region72: #{_forward_impl.3} parent=1 // pred_region
      %v1506 = vsel %vm127, %v1487, -3e+38
      %1507 = vmax.xlane.f32.xlu0 %v1506
      %v1508 = vpop.xlane.xlu0 %1507
      %vm1509 = vcmp.eq.f32.partialorder %v1506, %v1508
      %v1510 = vsel %vm1509, %v126, 128
      %v1511 = vand.u32 %v1510, 65535
      %v1512 = vshra.s32 %v1510, 16
      %v1513 = vcvt.s32.f32 %v1511
      %v1514 = vcvt.s32.f32 %v1512
      %1515 = vmin.xlane.f32.xlu0 %v1514
      %v1516 = vpop.xlane.xlu0 %1515
      %vm1517 = vcmp.eq.f32.partialorder %v1514, %v1516
      %v1518 = vsel %vm1517, %v1513, inf
      %1519 = vmin.xlane.f32.xlu0 %v1518
      %v1520 = vpop.xlane.xlu0 %1519
      %v1521 = vcvt.f32.s32 %v1520
      %v1522 = vcvt.f32.s32 %v1516
      %v1523 = vshll.u32 %v1522, 16
      %v1524 = vadd.s32 %v1523, %v1521
      %vm1525 = vcmp.eq.s32.totalorder %v126, %v1524
      %v1526 = vsel %vm1525, 1, 0
      %v1527 = vcvt.s32.f32 %v1526
      %v1528 = vpack.c.bf16 %v1527, %v1527
      %v1545 = vunpack.c.l.b16 %v109
      %v1546 = vunpack.c.l.b16 %v110
      %v1547 = vunpack.c.l.b16 %v111
      %v1548 = vunpack.c.l.b16 %v112
      %v1549 = vunpack.c.l.b16 %v113
      %v1550 = vunpack.c.l.b16 %v114
      %v1551 = vunpack.c.l.b16 %v115
      %v1552 = vunpack.c.l.b16 %v116
      %v1553 = vunpack.c.l.b16 %v117
      %v1554 = vunpack.c.l.b16 %v118
      %v1555 = vunpack.c.l.b16 %v119
      %v1556 = vunpack.c.l.b16 %v120
      %v1557 = vunpack.c.l.b16 %v121
      %v1558 = vunpack.c.l.b16 %v122
      %v1559 = vunpack.c.l.b16 %v123
      %v1560 = vunpack.c.l.b16 %v124
      %v1561 = vpack.c.b16 %v1546, %v1545
      %v1562 = vpack.c.b16 %v1548, %v1547
      %v1563 = vpack.c.b16 %v1550, %v1549
      %v1564 = vpack.c.b16 %v1552, %v1551
      %v1565 = vpack.c.b16 %v1554, %v1553
      %v1566 = vpack.c.b16 %v1556, %v1555
      %v1567 = vpack.c.b16 %v1558, %v1557
      %v1568 = vpack.c.b16 %v1560, %v1559
      %1577 = vmatprep.subr.bf16.mxu0 0
      %1578 = vmatpush1.bf16.msra.mxu0 %v1568
      %1579 = vmatprep.subr.bf16.mxu0 0
      %1580 = vmatpush1.bf16.msra.mxu0 %v1567
      %1581 = vmatprep.subr.bf16.mxu0 0
      %1582 = vmatpush1.bf16.msra.mxu0 %v1566
      %1583 = vmatprep.subr.bf16.mxu0 0
      %1584 = vmatpush1.bf16.msra.mxu0 %v1565
      %1585 = vmatprep.subr.bf16.mxu0 0
      %1586 = vmatpush1.bf16.msra.mxu0 %v1564
      %1587 = vmatprep.subr.bf16.mxu0 0
      %1588 = vmatpush1.bf16.msra.mxu0 %v1563
      %1589 = vmatprep.subr.bf16.mxu0 0
      %1590 = vmatpush1.bf16.msra.mxu0 %v1562
      %1591 = vmatprep.subr.bf16.mxu0 0
      %1592 = vmatpush1.bf16.msra.mxu0 %v1561
      %1593 = vmatprep.subr.bf16.mxu0 0
      %1594 = vmatpush2.bf16.msra.mxu0 0
      %1595 = vmatprep.subr.bf16.mxu0 0
      %1596 = vmatpush2.bf16.msra.mxu0 0
      %1597 = vmatprep.subr.bf16.mxu0 0
      %1598 = vmatpush2.bf16.msra.mxu0 0
      %1599 = vmatprep.subr.bf16.mxu0 0
      %1600 = vmatpush2.bf16.msra.mxu0 0
      %1601 = vmatprep.subr.bf16.mxu0 0
      %1602 = vmatpush2.bf16.msra.mxu0 0
      %1603 = vmatprep.subr.bf16.mxu0 0
      %1604 = vmatpush2.bf16.msra.mxu0 0
      %1605 = vmatprep.subr.bf16.mxu0 0
      %1606 = vmatpush2.bf16.msra.mxu0 0
      %1607 = vmatprep.subr.bf16.mxu0 0
      %1608 = vmatpush2.bf16.msra.mxu0 0
      %1609 = vmatprep.mubr.bf16.mxu0 0
      %1610 = vmatmul.mubr.bf16.gmra.mxu0 %v1528
      %v1611 = vpop.f32.mrf.mxu0
      %v1612 = vadd.f32 0.0, %v1611
      %v1613 = vpop.f32.mrf.mxu0
      %v1614 = vpop.f32.mrf.mxu0
      %v1615 = vpop.f32.mrf.mxu0
      %1616 = vdwg.mxu0
      %1617 = vst.msk [vmem:[#allocation3] sm:$0xff] %vm132, %v1612
    $region73: #{_forward_impl.3} parent=1 // pred_fallthru
      _
    %v1618 = vld [vmem:[#allocation2] sm:$0xff]
    %v1619 = vld [vmem:[#allocation3] sm:$0xff]
    %v1620 = vmul.f32 %v1618, %v140
    %v1621 = vsel %vm129, %v1620, 0.0
    %1622 = vadd.xlane.f32.xlu0 %v1621
    %v1623 = vpop.xlane.xlu0 %1622
    %v1624 = vadd.f32 %v77, %v1623
    %v1625 = vadd.f32 %v78, %v1623
    %v1626 = vadd.f32 %v79, %v1623
    %v1627 = vadd.f32 %v80, %v1623
    %v1628 = vadd.f32 %v81, %v1623
    %v1629 = vadd.f32 %v82, %v1623
    %v1630 = vadd.f32 %v83, %v1623
    %v1631 = vadd.f32 %v84, %v1623
    %v1632 = vsel %vm154, %v1624, -inf
    %v1633 = vsel %vm154, %v1625, -inf
    %v1634 = vsel %vm154, %v1626, -inf
    %v1635 = vsel %vm154, %v1627, -inf
    %v1636 = vsel %vm154, %v1628, -inf
    %v1637 = vmax.f32 %v1632, %v1636
    %v1638 = vsel %vm154, %v1629, -inf
    %v1639 = vmax.f32 %v1633, %v1638
    %v1640 = vsel %vm154, %v1630, -inf
    %v1641 = vmax.f32 %v1634, %v1640
    %v1642 = vsel %vm154, %v1631, -inf
    %v1643 = vmax.f32 %v1635, %v1642
    %v1644 = vmax.f32 %v1637, %v1639
    %v1645 = vmax.f32 %v1641, %v1643
    %v1646 = vmax.f32 %v1644, %v1645
    %v1647 = vsub.f32 %v1624, %v1646
    %v1648 = vsub.f32 %v1625, %v1646
    %v1649 = vsub.f32 %v1626, %v1646
    %v1650 = vsub.f32 %v1627, %v1646
    %v1651 = vsub.f32 %v1628, %v1646
    %v1652 = vsub.f32 %v1629, %v1646
    %v1653 = vsub.f32 %v1630, %v1646
    %v1654 = vsub.f32 %v1631, %v1646
    %v1655 = vmul.f32 %v1647, 1.442695
    %v1656 = vpow.pop %v1655
    %v1657 = vmul.f32 %v1648, 1.442695
    %v1658 = vpow.pop %v1657
    %v1659 = vmul.f32 %v1649, 1.442695
    %v1660 = vpow.pop %v1659
    %v1661 = vmul.f32 %v1650, 1.442695
    %v1662 = vpow.pop %v1661
    %v1663 = vmul.f32 %v1651, 1.442695
    %v1664 = vpow.pop %v1663
    %v1665 = vmul.f32 %v1652, 1.442695
    %v1666 = vpow.pop %v1665
    %v1667 = vmul.f32 %v1653, 1.442695
    %v1668 = vpow.pop %v1667
    %v1669 = vmul.f32 %v1654, 1.442695
    %v1670 = vpow.pop %v1669
    %v1671 = vsel %vm154, %v1656, 0.0
    %v1672 = vsel %vm154, %v1658, 0.0
    %v1673 = vadd.f32 %v1671, %v1672
    %v1674 = vsel %vm154, %v1660, 0.0
    %v1675 = vadd.f32 %v1673, %v1674
    %v1676 = vsel %vm154, %v1662, 0.0
    %v1677 = vadd.f32 %v1675, %v1676
    %v1678 = vsel %vm154, %v1664, 0.0
    %v1679 = vadd.f32 %v1677, %v1678
    %v1680 = vsel %vm154, %v1666, 0.0
    %v1681 = vadd.f32 %v1679, %v1680
    %v1682 = vsel %vm154, %v1668, 0.0
    %v1683 = vadd.f32 %v1681, %v1682
    %v1684 = vsel %vm154, %v1670, 0.0
    %v1685 = vadd.f32 %v1683, %v1684
    %v1686 = vrcp.pop %v1685
    %v1687 = vmul.f32 %v1656, %v1686
    %v1688 = vmul.f32 %v1658, %v1686
    %v1689 = vmul.f32 %v1660, %v1686
    %v1690 = vmul.f32 %v1662, %v1686
    %v1691 = vmul.f32 %v1664, %v1686
    %v1692 = vmul.f32 %v1666, %v1686
    %v1693 = vmul.f32 %v1668, %v1686
    %v1694 = vmul.f32 %v1670, %v1686
    %1696 = vset.pattern.permute.xlu0 0
    %1697 = vperm.xlu0 %1696, %v1687
    %v1698 = vpop.permute.xlu0 %1697
    %1701 = vset.pattern.permute.xlu0 0
    %1702 = vperm.xlu0 %1701, %v1688
    %v1703 = vpop.permute.xlu0 %1702
    %1706 = vset.pattern.permute.xlu0 0
    %1707 = vperm.xlu0 %1706, %v1689
    %v1708 = vpop.permute.xlu0 %1707
    %1711 = vset.pattern.permute.xlu0 0
    %1712 = vperm.xlu0 %1711, %v1690
    %v1713 = vpop.permute.xlu0 %1712
    %1716 = vset.pattern.permute.xlu0 0
    %1717 = vperm.xlu0 %1716, %v1691
    %v1718 = vpop.permute.xlu0 %1717
    %1721 = vset.pattern.permute.xlu0 0
    %1722 = vperm.xlu0 %1721, %v1692
    %v1723 = vpop.permute.xlu0 %1722
    %1726 = vset.pattern.permute.xlu0 0
    %1727 = vperm.xlu0 %1726, %v1693
    %v1728 = vpop.permute.xlu0 %1727
    %1731 = vset.pattern.permute.xlu0 0
    %1732 = vperm.xlu0 %1731, %v1694
    %v1733 = vpop.permute.xlu0 %1732
    %v1735 = vmul.f32 %v61, %v1698
    %v1736 = vmul.f32 %v62, %v1703
    %v1737 = vmul.f32 %v63, %v1708
    %v1738 = vmul.f32 %v64, %v1713
    %v1739 = vmul.f32 %v65, %v1718
    %v1740 = vmul.f32 %v66, %v1723
    %v1741 = vmul.f32 %v67, %v1728
    %v1742 = vmul.f32 %v68, %v1733
    %v1743 = vsel %vm132, %v1735, 0.0
    %v1744 = vsel %vm132, %v1736, 0.0
    %v1745 = vadd.f32 %v1743, %v1744
    %v1746 = vsel %vm132, %v1737, 0.0
    %v1747 = vadd.f32 %v1745, %v1746
    %v1748 = vsel %vm132, %v1738, 0.0
    %v1749 = vadd.f32 %v1747, %v1748
    %v1750 = vsel %vm132, %v1739, 0.0
    %v1751 = vadd.f32 %v1749, %v1750
    %v1752 = vsel %vm132, %v1740, 0.0
    %v1753 = vadd.f32 %v1751, %v1752
    %v1754 = vsel %vm132, %v1741, 0.0
    %v1755 = vadd.f32 %v1753, %v1754
    %v1756 = vsel %vm132, %v1742, 0.0
    %v1757 = vadd.f32 %v1755, %v1756
    %v1758 = vmul.f32 %v69, %v1698
    %v1759 = vmul.f32 %v70, %v1703
    %v1760 = vmul.f32 %v71, %v1708
    %v1761 = vmul.f32 %v72, %v1713
    %v1762 = vmul.f32 %v73, %v1718
    %v1763 = vmul.f32 %v74, %v1723
    %v1764 = vmul.f32 %v75, %v1728
    %v1765 = vmul.f32 %v76, %v1733
    %v1766 = vsel %vm132, %v1758, 0.0
    %v1767 = vsel %vm132, %v1759, 0.0
    %v1768 = vadd.f32 %v1766, %v1767
    %v1769 = vsel %vm132, %v1760, 0.0
    %v1770 = vadd.f32 %v1768, %v1769
    %v1771 = vsel %vm132, %v1761, 0.0
    %v1772 = vadd.f32 %v1770, %v1771
    %v1773 = vsel %vm132, %v1762, 0.0
    %v1774 = vadd.f32 %v1772, %v1773
    %v1775 = vsel %vm132, %v1763, 0.0
    %v1776 = vadd.f32 %v1774, %v1775
    %v1777 = vsel %vm132, %v1764, 0.0
    %v1778 = vadd.f32 %v1776, %v1777
    %v1779 = vsel %vm132, %v1765, 0.0
    %v1780 = vadd.f32 %v1778, %v1779
    %1782 = vrot.lane.b32.xlu0 %v1757, 16
    %v1783 = vpop.permute.xlu0 %1782
    %1786 = vrot.lane.b32.xlu0 %v1780, 32
    %v1787 = vpop.permute.xlu0 %1786
    %v1789 = vsel %vm132, %v1619, %v1783
    %v1790 = vsel %vm129, %v1789, %v1787
    %v1791 = vpack.c.bf16 %v1790, %v1790
    %v1793 = vsel %vm339, %v1791, 0
    %1795 = vmatprep.subr.bf16.mxu0 0
    %1796 = vmatpush1.bf16.msra.mxu0 0
    %1797 = vmatprep.subr.bf16.mxu0 0
    %1798 = vmatpush1.bf16.msra.mxu0 0
    %1799 = vmatprep.subr.bf16.mxu0 0
    %1800 = vmatpush1.bf16.msra.mxu0 0
    %1801 = vmatprep.subr.bf16.mxu0 0
    %1802 = vmatpush1.bf16.msra.mxu0 0
    %1803 = vmatprep.subr.bf16.mxu0 0
    %1804 = vmatpush1.bf16.msra.mxu0 0
    %1805 = vmatprep.subr.bf16.mxu0 0
    %1806 = vmatpush1.bf16.msra.mxu0 %v335
    %1807 = vmatprep.subr.bf16.mxu0 0
    %1808 = vmatpush1.bf16.msra.mxu0 %v334
    %1809 = vmatprep.subr.bf16.mxu0 0
    %1810 = vmatpush1.bf16.msra.mxu0 %v333
    %1811 = vmatprep.subr.bf16.mxu0 0
    %1812 = vmatpush2.bf16.msra.mxu0 0
    %1813 = vmatprep.subr.bf16.mxu0 0
    %1814 = vmatpush2.bf16.msra.mxu0 0
    %1815 = vmatprep.subr.bf16.mxu0 0
    %1816 = vmatpush2.bf16.msra.mxu0 0
    %1817 = vmatprep.subr.bf16.mxu0 0
    %1818 = vmatpush2.bf16.msra.mxu0 0
    %1819 = vmatprep.subr.bf16.mxu0 0
    %1820 = vmatpush2.bf16.msra.mxu0 0
    %1821 = vmatprep.subr.bf16.mxu0 0
    %1822 = vmatpush2.bf16.msra.mxu0 0
    %1823 = vmatprep.subr.bf16.mxu0 0
    %1824 = vmatpush2.bf16.msra.mxu0 0
    %1825 = vmatprep.subr.bf16.mxu0 0
    %1826 = vmatpush2.bf16.msra.mxu0 0
    %1827 = vmatprep.mubr.bf16.mxu0 0
    %1828 = vmatmul.mubr.bf16.gmra.mxu0 %v1793
    %v1829 = vpop.f32.mrf.mxu0
    %v1830 = vadd.f32 %v319, %v1829
    %v1831 = vpop.f32.mrf.mxu0
    %v1832 = vpop.f32.mrf.mxu0
    %v1833 = vpop.f32.mrf.mxu0
    %1834 = vdwg.mxu0
    %v1835 = vpack.c.bf16 %v1618, %v1618
    %v1837 = vsel %vm129, %v1835, 0
    %1839 = vmatprep.subr.bf16.mxu0 0
    %1840 = vmatpush1.bf16.msra.mxu0 0
    %1841 = vmatprep.subr.bf16.mxu0 0
    %1842 = vmatpush1.bf16.msra.mxu0 0
    %1843 = vmatprep.subr.bf16.mxu0 0
    %1844 = vmatpush1.bf16.msra.mxu0 0
    %1845 = vmatprep.subr.bf16.mxu0 0
    %1846 = vmatpush1.bf16.msra.mxu0 0
    %1847 = vmatprep.subr.bf16.mxu0 0
    %1848 = vmatpush1.bf16.msra.mxu0 0
    %1849 = vmatprep.subr.bf16.mxu0 0
    %1850 = vmatpush1.bf16.msra.mxu0 0
    %1851 = vmatprep.subr.bf16.mxu0 0
    %1852 = vmatpush1.bf16.msra.mxu0 %v399
    %1853 = vmatprep.subr.bf16.mxu0 0
    %1854 = vmatpush1.bf16.msra.mxu0 %v398
    %1855 = vmatprep.subr.bf16.mxu0 0
    %1856 = vmatpush2.bf16.msra.mxu0 0
    %1857 = vmatprep.subr.bf16.mxu0 0
    %1858 = vmatpush2.bf16.msra.mxu0 0
    %1859 = vmatprep.subr.bf16.mxu0 0
    %1860 = vmatpush2.bf16.msra.mxu0 0
    %1861 = vmatprep.subr.bf16.mxu0 0
    %1862 = vmatpush2.bf16.msra.mxu0 0
    %1863 = vmatprep.subr.bf16.mxu0 0
    %1864 = vmatpush2.bf16.msra.mxu0 0
    %1865 = vmatprep.subr.bf16.mxu0 0
    %1866 = vmatpush2.bf16.msra.mxu0 0
    %1867 = vmatprep.subr.bf16.mxu0 0
    %1868 = vmatpush2.bf16.msra.mxu0 0
    %1869 = vmatprep.subr.bf16.mxu0 0
    %1870 = vmatpush2.bf16.msra.mxu0 0
    %1871 = vmatprep.mubr.bf16.mxu0 0
    %1872 = vmatmul.mubr.bf16.gmra.mxu0 %v1837
    %v1873 = vpop.f32.mrf.mxu0
    %v1874 = vadd.f32 %v388, %v1873
    %v1875 = vpop.f32.mrf.mxu0
    %v1876 = vpop.f32.mrf.mxu0
    %v1877 = vpop.f32.mrf.mxu0
    %1878 = vdwg.mxu0
    %v1879 = vadd.f32 %v1830, %v1874
    %v1880 = vxor.u32 %v1879, 2147483648
    %v1881 = vmul.f32 %v1880, 1.442695
    %v1882 = vpow.pop %v1881
    %v1883 = vadd.f32 %v1882, 1.0
    %v1884 = vrcp.pop %v1883
    %v1885 = vmul.f32 1.0, %v1884
    %1887 = vrot.lane.b32.xlu0 %v1874, 64
    %v1888 = vpop.permute.xlu0 %1887
    %v1890 = vmul.f32 %v1885, %v1888
    %1892 = vrot.lane.b32.xlu0 %v1890, 64
    %v1893 = vpop.permute.xlu0 %1892
    %v1895 = vadd.f32 %v1830, %v1893
    %v1896 = vtanh.pop %v1895
    %v1897 = vsub.f32 1.0, %v1885
    %1899 = vrot.lane.b32.xlu0 %v1896, 96
    %v1900 = vpop.permute.xlu0 %1899
    %v1902 = vmul.f32 %v1897, %v1900
    %1904 = vrot.lane.b32.xlu0 %v1618, 32
    %v1905 = vpop.permute.xlu0 %1904
    %v1907 = vmul.f32 %v1885, %v1905
    %v1908 = vadd.f32 %v1902, %v1907
    %1910 = vrot.lane.b32.xlu0 %v1908, 16
    %v1911 = vpop.permute.xlu0 %1910
    %v1913 = vsel %vm339, %v1790, %v1911
    %v1914 = vpack.c.bf16 %v1913, %v1913
    %v1916 = vsel %vm517, %v1914, 0
    %1918 = vmatprep.subr.bf16.mxu0 0
    %1919 = vmatpush1.bf16.msra.mxu0 0
    %1920 = vmatprep.subr.bf16.mxu0 0
    %1921 = vmatpush1.bf16.msra.mxu0 0
    %1922 = vmatprep.subr.bf16.mxu0 0
    %1923 = vmatpush1.bf16.msra.mxu0 0
    %1924 = vmatprep.subr.bf16.mxu0 0
    %1925 = vmatpush1.bf16.msra.mxu0 %v511
    %1926 = vmatprep.subr.bf16.mxu0 0
    %1927 = vmatpush1.bf16.msra.mxu0 %v510
    %1928 = vmatprep.subr.bf16.mxu0 0
    %1929 = vmatpush1.bf16.msra.mxu0 %v509
    %1930 = vmatprep.subr.bf16.mxu0 0
    %1931 = vmatpush1.bf16.msra.mxu0 %v508
    %1932 = vmatprep.subr.bf16.mxu0 0
    %1933 = vmatpush1.bf16.msra.mxu0 %v507
    %1934 = vmatprep.subr.bf16.mxu0 0
    %1935 = vmatpush2.bf16.msra.mxu0 0
    %1936 = vmatprep.subr.bf16.mxu0 0
    %1937 = vmatpush2.bf16.msra.mxu0 0
    %1938 = vmatprep.subr.bf16.mxu0 0
    %1939 = vmatpush2.bf16.msra.mxu0 0
    %1940 = vmatprep.subr.bf16.mxu0 0
    %1941 = vmatpush2.bf16.msra.mxu0 0
    %1942 = vmatprep.subr.bf16.mxu0 0
    %1943 = vmatpush2.bf16.msra.mxu0 0
    %1944 = vmatprep.subr.bf16.mxu0 0
    %1945 = vmatpush2.bf16.msra.mxu0 0
    %1946 = vmatprep.subr.bf16.mxu0 0
    %1947 = vmatpush2.bf16.msra.mxu0 0
    %1948 = vmatprep.subr.bf16.mxu0 0
    %1949 = vmatpush2.bf16.msra.mxu0 0
    %1950 = vmatprep.mubr.bf16.mxu0 0
    %1951 = vmatmul.mubr.bf16.gmra.mxu0 %v1916
    %v1952 = vpop.f32.mrf.mxu0
    %v1953 = vadd.f32 %v485, %v1952
    %v1954 = vpop.f32.mrf.mxu0
    %v1955 = vpop.f32.mrf.mxu0
    %v1956 = vpop.f32.mrf.mxu0
    %1957 = vdwg.mxu0
    %s1958 = scalar_lea.vmem %s14, 24
    %1959 = vst [vmem:[%s1958] sm:$0xff] %v1953
    %1960 = vrot.lane.b32.xlu0 %v1908, 96
    %v1961 = vpop.permute.xlu0 %1960
    %1963 = vst.msk [vmem:[#allocation2] sm:$0xff] %vm129, %v1961
    %s1964 = scalar_lea.vmem %s1, 32
    %v1965 = vld [vmem:[%s1964] sm:$0xff]
    %1966 = vst.msk [vmem:[#allocation3] sm:$0xff] %vm132, %v1965
    %s1967 = sld [smem:[#allocation4 + $0x4]]
    %p1968 = scmp.eq.s32.totalorder %s1967, 0
    // Predicated region
    $region74: #{_forward_impl.3} parent=1 // pred_check
      %p1969 = pneg %p1968
    $region75: #{_forward_impl.3} parent=1 // pred_check_branch
      %1971 = sbr.rel (%p1969) target = $region77
    $region76: #{_forward_impl.3} parent=1 // pred_region
      %v1972 = vsel %vm127, %v1953, -3e+38
      %1973 = vmax.xlane.f32.xlu0 %v1972
      %v1974 = vpop.xlane.xlu0 %1973
      %vm1975 = vcmp.eq.f32.partialorder %v1972, %v1974
      %v1976 = vsel %vm1975, %v126, 128
      %v1977 = vand.u32 %v1976, 65535
      %v1978 = vshra.s32 %v1976, 16
      %v1979 = vcvt.s32.f32 %v1977
      %v1980 = vcvt.s32.f32 %v1978
      %1981 = vmin.xlane.f32.xlu0 %v1980
      %v1982 = vpop.xlane.xlu0 %1981
      %vm1983 = vcmp.eq.f32.partialorder %v1980, %v1982
      %v1984 = vsel %vm1983, %v1979, inf
      %1985 = vmin.xlane.f32.xlu0 %v1984
      %v1986 = vpop.xlane.xlu0 %1985
      %v1987 = vcvt.f32.s32 %v1986
      %v1988 = vcvt.f32.s32 %v1982
      %v1989 = vshll.u32 %v1988, 16
      %v1990 = vadd.s32 %v1989, %v1987
      %vm1991 = vcmp.eq.s32.totalorder %v126, %v1990
      %v1992 = vsel %vm1991, 1, 0
      %v1993 = vcvt.s32.f32 %v1992
      %v1994 = vpack.c.bf16 %v1993, %v1993
      %v2011 = vunpack.c.l.b16 %v109
      %v2012 = vunpack.c.l.b16 %v110
      %v2013 = vunpack.c.l.b16 %v111
      %v2014 = vunpack.c.l.b16 %v112
      %v2015 = vunpack.c.l.b16 %v113
      %v2016 = vunpack.c.l.b16 %v114
      %v2017 = vunpack.c.l.b16 %v115
      %v2018 = vunpack.c.l.b16 %v116
      %v2019 = vunpack.c.l.b16 %v117
      %v2020 = vunpack.c.l.b16 %v118
      %v2021 = vunpack.c.l.b16 %v119
      %v2022 = vunpack.c.l.b16 %v120
      %v2023 = vunpack.c.l.b16 %v121
      %v2024 = vunpack.c.l.b16 %v122
      %v2025 = vunpack.c.l.b16 %v123
      %v2026 = vunpack.c.l.b16 %v124
      %v2027 = vpack.c.b16 %v2012, %v2011
      %v2028 = vpack.c.b16 %v2014, %v2013
      %v2029 = vpack.c.b16 %v2016, %v2015
      %v2030 = vpack.c.b16 %v2018, %v2017
      %v2031 = vpack.c.b16 %v2020, %v2019
      %v2032 = vpack.c.b16 %v2022, %v2021
      %v2033 = vpack.c.b16 %v2024, %v2023
      %v2034 = vpack.c.b16 %v2026, %v2025
      %2043 = vmatprep.subr.bf16.mxu0 0
      %2044 = vmatpush1.bf16.msra.mxu0 %v2034
      %2045 = vmatprep.subr.bf16.mxu0 0
      %2046 = vmatpush1.bf16.msra.mxu0 %v2033
      %2047 = vmatprep.subr.bf16.mxu0 0
      %2048 = vmatpush1.bf16.msra.mxu0 %v2032
      %2049 = vmatprep.subr.bf16.mxu0 0
      %2050 = vmatpush1.bf16.msra.mxu0 %v2031
      %2051 = vmatprep.subr.bf16.mxu0 0
      %2052 = vmatpush1.bf16.msra.mxu0 %v2030
      %2053 = vmatprep.subr.bf16.mxu0 0
      %2054 = vmatpush1.bf16.msra.mxu0 %v2029
      %2055 = vmatprep.subr.bf16.mxu0 0
      %2056 = vmatpush1.bf16.msra.mxu0 %v2028
      %2057 = vmatprep.subr.bf16.mxu0 0
      %2058 = vmatpush1.bf16.msra.mxu0 %v2027
      %2059 = vmatprep.subr.bf16.mxu0 0
      %2060 = vmatpush2.bf16.msra.mxu0 0
      %2061 = vmatprep.subr.bf16.mxu0 0
      %2062 = vmatpush2.bf16.msra.mxu0 0
      %2063 = vmatprep.subr.bf16.mxu0 0
      %2064 = vmatpush2.bf16.msra.mxu0 0
      %2065 = vmatprep.subr.bf16.mxu0 0
      %2066 = vmatpush2.bf16.msra.mxu0 0
      %2067 = vmatprep.subr.bf16.mxu0 0
      %2068 = vmatpush2.bf16.msra.mxu0 0
      %2069 = vmatprep.subr.bf16.mxu0 0
      %2070 = vmatpush2.bf16.msra.mxu0 0
      %2071 = vmatprep.subr.bf16.mxu0 0
      %2072 = vmatpush2.bf16.msra.mxu0 0
      %2073 = vmatprep.subr.bf16.mxu0 0
      %2074 = vmatpush2.bf16.msra.mxu0 0
      %2075 = vmatprep.mubr.bf16.mxu0 0
      %2076 = vmatmul.mubr.bf16.gmra.mxu0 %v1994
      %v2077 = vpop.f32.mrf.mxu0
      %v2078 = vadd.f32 0.0, %v2077
      %v2079 = vpop.f32.mrf.mxu0
      %v2080 = vpop.f32.mrf.mxu0
      %v2081 = vpop.f32.mrf.mxu0
      %2082 = vdwg.mxu0
      %2083 = vst.msk [vmem:[#allocation3] sm:$0xff] %vm132, %v2078
    $region77: #{_forward_impl.3} parent=1 // pred_fallthru
      _
    %v2084 = vld [vmem:[#allocation2] sm:$0xff]
    %v2085 = vld [vmem:[#allocation3] sm:$0xff]
    %v2086 = vmul.f32 %v2084, %v140
    %v2087 = vsel %vm129, %v2086, 0.0
    %2088 = vadd.xlane.f32.xlu0 %v2087
    %v2089 = vpop.xlane.xlu0 %2088
    %v2090 = vadd.f32 %v77, %v2089
    %v2091 = vadd.f32 %v78, %v2089
    %v2092 = vadd.f32 %v79, %v2089
    %v2093 = vadd.f32 %v80, %v2089
    %v2094 = vadd.f32 %v81, %v2089
    %v2095 = vadd.f32 %v82, %v2089
    %v2096 = vadd.f32 %v83, %v2089
    %v2097 = vadd.f32 %v84, %v2089
    %v2098 = vsel %vm154, %v2090, -inf
    %v2099 = vsel %vm154, %v2091, -inf
    %v2100 = vsel %vm154, %v2092, -inf
    %v2101 = vsel %vm154, %v2093, -inf
    %v2102 = vsel %vm154, %v2094, -inf
    %v2103 = vmax.f32 %v2098, %v2102
    %v2104 = vsel %vm154, %v2095, -inf
    %v2105 = vmax.f32 %v2099, %v2104
    %v2106 = vsel %vm154, %v2096, -inf
    %v2107 = vmax.f32 %v2100, %v2106
    %v2108 = vsel %vm154, %v2097, -inf
    %v2109 = vmax.f32 %v2101, %v2108
    %v2110 = vmax.f32 %v2103, %v2105
    %v2111 = vmax.f32 %v2107, %v2109
    %v2112 = vmax.f32 %v2110, %v2111
    %v2113 = vsub.f32 %v2090, %v2112
    %v2114 = vsub.f32 %v2091, %v2112
    %v2115 = vsub.f32 %v2092, %v2112
    %v2116 = vsub.f32 %v2093, %v2112
    %v2117 = vsub.f32 %v2094, %v2112
    %v2118 = vsub.f32 %v2095, %v2112
    %v2119 = vsub.f32 %v2096, %v2112
    %v2120 = vsub.f32 %v2097, %v2112
    %v2121 = vmul.f32 %v2113, 1.442695
    %v2122 = vpow.pop %v2121
    %v2123 = vmul.f32 %v2114, 1.442695
    %v2124 = vpow.pop %v2123
    %v2125 = vmul.f32 %v2115, 1.442695
    %v2126 = vpow.pop %v2125
    %v2127 = vmul.f32 %v2116, 1.442695
    %v2128 = vpow.pop %v2127
    %v2129 = vmul.f32 %v2117, 1.442695
    %v2130 = vpow.pop %v2129
    %v2131 = vmul.f32 %v2118, 1.442695
    %v2132 = vpow.pop %v2131
    %v2133 = vmul.f32 %v2119, 1.442695
    %v2134 = vpow.pop %v2133
    %v2135 = vmul.f32 %v2120, 1.442695
    %v2136 = vpow.pop %v2135
    %v2137 = vsel %vm154, %v2122, 0.0
    %v2138 = vsel %vm154, %v2124, 0.0
    %v2139 = vadd.f32 %v2137, %v2138
    %v2140 = vsel %vm154, %v2126, 0.0
    %v2141 = vadd.f32 %v2139, %v2140
    %v2142 = vsel %vm154, %v2128, 0.0
    %v2143 = vadd.f32 %v2141, %v2142
    %v2144 = vsel %vm154, %v2130, 0.0
    %v2145 = vadd.f32 %v2143, %v2144
    %v2146 = vsel %vm154, %v2132, 0.0
    %v2147 = vadd.f32 %v2145, %v2146
    %v2148 = vsel %vm154, %v2134, 0.0
    %v2149 = vadd.f32 %v2147, %v2148
    %v2150 = vsel %vm154, %v2136, 0.0
    %v2151 = vadd.f32 %v2149, %v2150
    %v2152 = vrcp.pop %v2151
    %v2153 = vmul.f32 %v2122, %v2152
    %v2154 = vmul.f32 %v2124, %v2152
    %v2155 = vmul.f32 %v2126, %v2152
    %v2156 = vmul.f32 %v2128, %v2152
    %v2157 = vmul.f32 %v2130, %v2152
    %v2158 = vmul.f32 %v2132, %v2152
    %v2159 = vmul.f32 %v2134, %v2152
    %v2160 = vmul.f32 %v2136, %v2152
    %2162 = vset.pattern.permute.xlu0 0
    %2163 = vperm.xlu0 %2162, %v2153
    %v2164 = vpop.permute.xlu0 %2163
    %2167 = vset.pattern.permute.xlu0 0
    %2168 = vperm.xlu0 %2167, %v2154
    %v2169 = vpop.permute.xlu0 %2168
    %2172 = vset.pattern.permute.xlu0 0
    %2173 = vperm.xlu0 %2172, %v2155
    %v2174 = vpop.permute.xlu0 %2173
    %2177 = vset.pattern.permute.xlu0 0
    %2178 = vperm.xlu0 %2177, %v2156
    %v2179 = vpop.permute.xlu0 %2178
    %2182 = vset.pattern.permute.xlu0 0
    %2183 = vperm.xlu0 %2182, %v2157
    %v2184 = vpop.permute.xlu0 %2183
    %2187 = vset.pattern.permute.xlu0 0
    %2188 = vperm.xlu0 %2187, %v2158
    %v2189 = vpop.permute.xlu0 %2188
    %2192 = vset.pattern.permute.xlu0 0
    %2193 = vperm.xlu0 %2192, %v2159
    %v2194 = vpop.permute.xlu0 %2193
    %2197 = vset.pattern.permute.xlu0 0
    %2198 = vperm.xlu0 %2197, %v2160
    %v2199 = vpop.permute.xlu0 %2198
    %v2201 = vmul.f32 %v61, %v2164
    %v2202 = vmul.f32 %v62, %v2169
    %v2203 = vmul.f32 %v63, %v2174
    %v2204 = vmul.f32 %v64, %v2179
    %v2205 = vmul.f32 %v65, %v2184
    %v2206 = vmul.f32 %v66, %v2189
    %v2207 = vmul.f32 %v67, %v2194
    %v2208 = vmul.f32 %v68, %v2199
    %v2209 = vsel %vm132, %v2201, 0.0
    %v2210 = vsel %vm132, %v2202, 0.0
    %v2211 = vadd.f32 %v2209, %v2210
    %v2212 = vsel %vm132, %v2203, 0.0
    %v2213 = vadd.f32 %v2211, %v2212
    %v2214 = vsel %vm132, %v2204, 0.0
    %v2215 = vadd.f32 %v2213, %v2214
    %v2216 = vsel %vm132, %v2205, 0.0
    %v2217 = vadd.f32 %v2215, %v2216
    %v2218 = vsel %vm132, %v2206, 0.0
    %v2219 = vadd.f32 %v2217, %v2218
    %v2220 = vsel %vm132, %v2207, 0.0
    %v2221 = vadd.f32 %v2219, %v2220
    %v2222 = vsel %vm132, %v2208, 0.0
    %v2223 = vadd.f32 %v2221, %v2222
    %v2224 = vmul.f32 %v69, %v2164
    %v2225 = vmul.f32 %v70, %v2169
    %v2226 = vmul.f32 %v71, %v2174
    %v2227 = vmul.f32 %v72, %v2179
    %v2228 = vmul.f32 %v73, %v2184
    %v2229 = vmul.f32 %v74, %v2189
    %v2230 = vmul.f32 %v75, %v2194
    %v2231 = vmul.f32 %v76, %v2199
    %v2232 = vsel %vm132, %v2224, 0.0
    %v2233 = vsel %vm132, %v2225, 0.0
    %v2234 = vadd.f32 %v2232, %v2233
    %v2235 = vsel %vm132, %v2226, 0.0
    %v2236 = vadd.f32 %v2234, %v2235
    %v2237 = vsel %vm132, %v2227, 0.0
    %v2238 = vadd.f32 %v2236, %v2237
    %v2239 = vsel %vm132, %v2228, 0.0
    %v2240 = vadd.f32 %v2238, %v2239
    %v2241 = vsel %vm132, %v2229, 0.0
    %v2242 = vadd.f32 %v2240, %v2241
    %v2243 = vsel %vm132, %v2230, 0.0
    %v2244 = vadd.f32 %v2242, %v2243
    %v2245 = vsel %vm132, %v2231, 0.0
    %v2246 = vadd.f32 %v2244, %v2245
    %2248 = vrot.lane.b32.xlu0 %v2223, 16
    %v2249 = vpop.permute.xlu0 %2248
    %2252 = vrot.lane.b32.xlu0 %v2246, 32
    %v2253 = vpop.permute.xlu0 %2252
    %v2255 = vsel %vm132, %v2085, %v2249
    %v2256 = vsel %vm129, %v2255, %v2253
    %v2257 = vpack.c.bf16 %v2256, %v2256
    %v2259 = vsel %vm339, %v2257, 0
    %2261 = vmatprep.subr.bf16.mxu0 0
    %2262 = vmatpush1.bf16.msra.mxu0 0
    %2263 = vmatprep.subr.bf16.mxu0 0
    %2264 = vmatpush1.bf16.msra.mxu0 0
    %2265 = vmatprep.subr.bf16.mxu0 0
    %2266 = vmatpush1.bf16.msra.mxu0 0
    %2267 = vmatprep.subr.bf16.mxu0 0
    %2268 = vmatpush1.bf16.msra.mxu0 0
    %2269 = vmatprep.subr.bf16.mxu0 0
    %2270 = vmatpush1.bf16.msra.mxu0 0
    %2271 = vmatprep.subr.bf16.mxu0 0
    %2272 = vmatpush1.bf16.msra.mxu0 %v335
    %2273 = vmatprep.subr.bf16.mxu0 0
    %2274 = vmatpush1.bf16.msra.mxu0 %v334
    %2275 = vmatprep.subr.bf16.mxu0 0
    %2276 = vmatpush1.bf16.msra.mxu0 %v333
    %2277 = vmatprep.subr.bf16.mxu0 0
    %2278 = vmatpush2.bf16.msra.mxu0 0
    %2279 = vmatprep.subr.bf16.mxu0 0
    %2280 = vmatpush2.bf16.msra.mxu0 0
    %2281 = vmatprep.subr.bf16.mxu0 0
    %2282 = vmatpush2.bf16.msra.mxu0 0
    %2283 = vmatprep.subr.bf16.mxu0 0
    %2284 = vmatpush2.bf16.msra.mxu0 0
    %2285 = vmatprep.subr.bf16.mxu0 0
    %2286 = vmatpush2.bf16.msra.mxu0 0
    %2287 = vmatprep.subr.bf16.mxu0 0
    %2288 = vmatpush2.bf16.msra.mxu0 0
    %2289 = vmatprep.subr.bf16.mxu0 0
    %2290 = vmatpush2.bf16.msra.mxu0 0
    %2291 = vmatprep.subr.bf16.mxu0 0
    %2292 = vmatpush2.bf16.msra.mxu0 0
    %2293 = vmatprep.mubr.bf16.mxu0 0
    %2294 = vmatmul.mubr.bf16.gmra.mxu0 %v2259
    %v2295 = vpop.f32.mrf.mxu0
    %v2296 = vadd.f32 %v319, %v2295
    %v2297 = vpop.f32.mrf.mxu0
    %v2298 = vpop.f32.mrf.mxu0
    %v2299 = vpop.f32.mrf.mxu0
    %2300 = vdwg.mxu0
    %v2301 = vpack.c.bf16 %v2084, %v2084
    %v2303 = vsel %vm129, %v2301, 0
    %2305 = vmatprep.subr.bf16.mxu0 0
    %2306 = vmatpush1.bf16.msra.mxu0 0
    %2307 = vmatprep.subr.bf16.mxu0 0
    %2308 = vmatpush1.bf16.msra.mxu0 0
    %2309 = vmatprep.subr.bf16.mxu0 0
    %2310 = vmatpush1.bf16.msra.mxu0 0
    %2311 = vmatprep.subr.bf16.mxu0 0
    %2312 = vmatpush1.bf16.msra.mxu0 0
    %2313 = vmatprep.subr.bf16.mxu0 0
    %2314 = vmatpush1.bf16.msra.mxu0 0
    %2315 = vmatprep.subr.bf16.mxu0 0
    %2316 = vmatpush1.bf16.msra.mxu0 0
    %2317 = vmatprep.subr.bf16.mxu0 0
    %2318 = vmatpush1.bf16.msra.mxu0 %v399
    %2319 = vmatprep.subr.bf16.mxu0 0
    %2320 = vmatpush1.bf16.msra.mxu0 %v398
    %2321 = vmatprep.subr.bf16.mxu0 0
    %2322 = vmatpush2.bf16.msra.mxu0 0
    %2323 = vmatprep.subr.bf16.mxu0 0
    %2324 = vmatpush2.bf16.msra.mxu0 0
    %2325 = vmatprep.subr.bf16.mxu0 0
    %2326 = vmatpush2.bf16.msra.mxu0 0
    %2327 = vmatprep.subr.bf16.mxu0 0
    %2328 = vmatpush2.bf16.msra.mxu0 0
    %2329 = vmatprep.subr.bf16.mxu0 0
    %2330 = vmatpush2.bf16.msra.mxu0 0
    %2331 = vmatprep.subr.bf16.mxu0 0
    %2332 = vmatpush2.bf16.msra.mxu0 0
    %2333 = vmatprep.subr.bf16.mxu0 0
    %2334 = vmatpush2.bf16.msra.mxu0 0
    %2335 = vmatprep.subr.bf16.mxu0 0
    %2336 = vmatpush2.bf16.msra.mxu0 0
    %2337 = vmatprep.mubr.bf16.mxu0 0
    %2338 = vmatmul.mubr.bf16.gmra.mxu0 %v2303
    %v2339 = vpop.f32.mrf.mxu0
    %v2340 = vadd.f32 %v388, %v2339
    %v2341 = vpop.f32.mrf.mxu0
    %v2342 = vpop.f32.mrf.mxu0
    %v2343 = vpop.f32.mrf.mxu0
    %2344 = vdwg.mxu0
    %v2345 = vadd.f32 %v2296, %v2340
    %v2346 = vxor.u32 %v2345, 2147483648
    %v2347 = vmul.f32 %v2346, 1.442695
    %v2348 = vpow.pop %v2347
    %v2349 = vadd.f32 %v2348, 1.0
    %v2350 = vrcp.pop %v2349
    %v2351 = vmul.f32 1.0, %v2350
    %2353 = vrot.lane.b32.xlu0 %v2340, 64
    %v2354 = vpop.permute.xlu0 %2353
    %v2356 = vmul.f32 %v2351, %v2354
    %2358 = vrot.lane.b32.xlu0 %v2356, 64
    %v2359 = vpop.permute.xlu0 %2358
    %v2361 = vadd.f32 %v2296, %v2359
    %v2362 = vtanh.pop %v2361
    %v2363 = vsub.f32 1.0, %v2351
    %2365 = vrot.lane.b32.xlu0 %v2362, 96
    %v2366 = vpop.permute.xlu0 %2365
    %v2368 = vmul.f32 %v2363, %v2366
    %2370 = vrot.lane.b32.xlu0 %v2084, 32
    %v2371 = vpop.permute.xlu0 %2370
    %v2373 = vmul.f32 %v2351, %v2371
    %v2374 = vadd.f32 %v2368, %v2373
    %2376 = vrot.lane.b32.xlu0 %v2374, 16
    %v2377 = vpop.permute.xlu0 %2376
    %v2379 = vsel %vm339, %v2256, %v2377
    %v2380 = vpack.c.bf16 %v2379, %v2379
    %v2382 = vsel %vm517, %v2380, 0
    %2384 = vmatprep.subr.bf16.mxu0 0
    %2385 = vmatpush1.bf16.msra.mxu0 0
    %2386 = vmatprep.subr.bf16.mxu0 0
    %2387 = vmatpush1.bf16.msra.mxu0 0
    %2388 = vmatprep.subr.bf16.mxu0 0
    %2389 = vmatpush1.bf16.msra.mxu0 0
    %2390 = vmatprep.subr.bf16.mxu0 0
    %2391 = vmatpush1.bf16.msra.mxu0 %v511
    %2392 = vmatprep.subr.bf16.mxu0 0
    %2393 = vmatpush1.bf16.msra.mxu0 %v510
    %2394 = vmatprep.subr.bf16.mxu0 0
    %2395 = vmatpush1.bf16.msra.mxu0 %v509
    %2396 = vmatprep.subr.bf16.mxu0 0
    %2397 = vmatpush1.bf16.msra.mxu0 %v508
    %2398 = vmatprep.subr.bf16.mxu0 0
    %2399 = vmatpush1.bf16.msra.mxu0 %v507
    %2400 = vmatprep.subr.bf16.mxu0 0
    %2401 = vmatpush2.bf16.msra.mxu0 0
    %2402 = vmatprep.subr.bf16.mxu0 0
    %2403 = vmatpush2.bf16.msra.mxu0 0
    %2404 = vmatprep.subr.bf16.mxu0 0
    %2405 = vmatpush2.bf16.msra.mxu0 0
    %2406 = vmatprep.subr.bf16.mxu0 0
    %2407 = vmatpush2.bf16.msra.mxu0 0
    %2408 = vmatprep.subr.bf16.mxu0 0
    %2409 = vmatpush2.bf16.msra.mxu0 0
    %2410 = vmatprep.subr.bf16.mxu0 0
    %2411 = vmatpush2.bf16.msra.mxu0 0
    %2412 = vmatprep.subr.bf16.mxu0 0
    %2413 = vmatpush2.bf16.msra.mxu0 0
    %2414 = vmatprep.subr.bf16.mxu0 0
    %2415 = vmatpush2.bf16.msra.mxu0 0
    %2416 = vmatprep.mubr.bf16.mxu0 0
    %2417 = vmatmul.mubr.bf16.gmra.mxu0 %v2382
    %v2418 = vpop.f32.mrf.mxu0
    %v2419 = vadd.f32 %v485, %v2418
    %v2420 = vpop.f32.mrf.mxu0
    %v2421 = vpop.f32.mrf.mxu0
    %v2422 = vpop.f32.mrf.mxu0
    %2423 = vdwg.mxu0
    %s2424 = scalar_lea.vmem %s14, 32
    %2425 = vst [vmem:[%s2424] sm:$0xff] %v2419
    %2426 = vrot.lane.b32.xlu0 %v2374, 96
    %v2427 = vpop.permute.xlu0 %2426
    %2429 = vst.msk [vmem:[#allocation2] sm:$0xff] %vm129, %v2427
    %s2430 = scalar_lea.vmem %s1, 40
    %v2431 = vld [vmem:[%s2430] sm:$0xff]
    %2432 = vst.msk [vmem:[#allocation3] sm:$0xff] %vm132, %v2431
    %s2433 = sld [smem:[#allocation4 + $0x5]]
    %p2434 = scmp.eq.s32.totalorder %s2433, 0
    // Predicated region
    $region78: #{_forward_impl.3} parent=1 // pred_check
      %p2435 = pneg %p2434
    $region79: #{_forward_impl.3} parent=1 // pred_check_branch
      %2437 = sbr.rel (%p2435) target = $region81
    $region80: #{_forward_impl.3} parent=1 // pred_region
      %v2438 = vsel %vm127, %v2419, -3e+38
      %2439 = vmax.xlane.f32.xlu0 %v2438
      %v2440 = vpop.xlane.xlu0 %2439
      %vm2441 = vcmp.eq.f32.partialorder %v2438, %v2440
      %v2442 = vsel %vm2441, %v126, 128
      %v2443 = vand.u32 %v2442, 65535
      %v2444 = vshra.s32 %v2442, 16
      %v2445 = vcvt.s32.f32 %v2443
      %v2446 = vcvt.s32.f32 %v2444
      %2447 = vmin.xlane.f32.xlu0 %v2446
      %v2448 = vpop.xlane.xlu0 %2447
      %vm2449 = vcmp.eq.f32.partialorder %v2446, %v2448
      %v2450 = vsel %vm2449, %v2445, inf
      %2451 = vmin.xlane.f32.xlu0 %v2450
      %v2452 = vpop.xlane.xlu0 %2451
      %v2453 = vcvt.f32.s32 %v2452
      %v2454 = vcvt.f32.s32 %v2448
      %v2455 = vshll.u32 %v2454, 16
      %v2456 = vadd.s32 %v2455, %v2453
      %vm2457 = vcmp.eq.s32.totalorder %v126, %v2456
      %v2458 = vsel %vm2457, 1, 0
      %v2459 = vcvt.s32.f32 %v2458
      %v2460 = vpack.c.bf16 %v2459, %v2459
      %v2477 = vunpack.c.l.b16 %v109
      %v2478 = vunpack.c.l.b16 %v110
      %v2479 = vunpack.c.l.b16 %v111
      %v2480 = vunpack.c.l.b16 %v112
      %v2481 = vunpack.c.l.b16 %v113
      %v2482 = vunpack.c.l.b16 %v114
      %v2483 = vunpack.c.l.b16 %v115
      %v2484 = vunpack.c.l.b16 %v116
      %v2485 = vunpack.c.l.b16 %v117
      %v2486 = vunpack.c.l.b16 %v118
      %v2487 = vunpack.c.l.b16 %v119
      %v2488 = vunpack.c.l.b16 %v120
      %v2489 = vunpack.c.l.b16 %v121
      %v2490 = vunpack.c.l.b16 %v122
      %v2491 = vunpack.c.l.b16 %v123
      %v2492 = vunpack.c.l.b16 %v124
      %v2493 = vpack.c.b16 %v2478, %v2477
      %v2494 = vpack.c.b16 %v2480, %v2479
      %v2495 = vpack.c.b16 %v2482, %v2481
      %v2496 = vpack.c.b16 %v2484, %v2483
      %v2497 = vpack.c.b16 %v2486, %v2485
      %v2498 = vpack.c.b16 %v2488, %v2487
      %v2499 = vpack.c.b16 %v2490, %v2489
      %v2500 = vpack.c.b16 %v2492, %v2491
      %2509 = vmatprep.subr.bf16.mxu0 0
      %2510 = vmatpush1.bf16.msra.mxu0 %v2500
      %2511 = vmatprep.subr.bf16.mxu0 0
      %2512 = vmatpush1.bf16.msra.mxu0 %v2499
      %2513 = vmatprep.subr.bf16.mxu0 0
      %2514 = vmatpush1.bf16.msra.mxu0 %v2498
      %2515 = vmatprep.subr.bf16.mxu0 0
      %2516 = vmatpush1.bf16.msra.mxu0 %v2497
      %2517 = vmatprep.subr.bf16.mxu0 0
      %2518 = vmatpush1.bf16.msra.mxu0 %v2496
      %2519 = vmatprep.subr.bf16.mxu0 0
      %2520 = vmatpush1.bf16.msra.mxu0 %v2495
      %2521 = vmatprep.subr.bf16.mxu0 0
      %2522 = vmatpush1.bf16.msra.mxu0 %v2494
      %2523 = vmatprep.subr.bf16.mxu0 0
      %2524 = vmatpush1.bf16.msra.mxu0 %v2493
      %2525 = vmatprep.subr.bf16.mxu0 0
      %2526 = vmatpush2.bf16.msra.mxu0 0
      %2527 = vmatprep.subr.bf16.mxu0 0
      %2528 = vmatpush2.bf16.msra.mxu0 0
      %2529 = vmatprep.subr.bf16.mxu0 0
      %2530 = vmatpush2.bf16.msra.mxu0 0
      %2531 = vmatprep.subr.bf16.mxu0 0
      %2532 = vmatpush2.bf16.msra.mxu0 0
      %2533 = vmatprep.subr.bf16.mxu0 0
      %2534 = vmatpush2.bf16.msra.mxu0 0
      %2535 = vmatprep.subr.bf16.mxu0 0
      %2536 = vmatpush2.bf16.msra.mxu0 0
      %2537 = vmatprep.subr.bf16.mxu0 0
      %2538 = vmatpush2.bf16.msra.mxu0 0
      %2539 = vmatprep.subr.bf16.mxu0 0
      %2540 = vmatpush2.bf16.msra.mxu0 0
      %2541 = vmatprep.mubr.bf16.mxu0 0
      %2542 = vmatmul.mubr.bf16.gmra.mxu0 %v2460
      %v2543 = vpop.f32.mrf.mxu0
      %v2544 = vadd.f32 0.0, %v2543
      %v2545 = vpop.f32.mrf.mxu0
      %v2546 = vpop.f32.mrf.mxu0
      %v2547 = vpop.f32.mrf.mxu0
      %2548 = vdwg.mxu0
      %2549 = vst.msk [vmem:[#allocation3] sm:$0xff] %vm132, %v2544
    $region81: #{_forward_impl.3} parent=1 // pred_fallthru
      _
    // Predicated region
    $region82: #{_forward_impl.3} parent=1 // pred_check
      _
    $region83: #{_forward_impl.3} parent=1 // pred_check_branch
      %2551 = sbr.rel (0) target = $region85
    $region84: #{_forward_impl.3} parent=1 // pred_region
      _
    $region85: #{_forward_impl.3} parent=1 // pred_fallthru
      _
    // Predicated region
    $region86: #{_forward_impl.3} parent=1 // pred_check
      _
    $region87: #{_forward_impl.3} parent=1 // pred_check_branch
      %2553 = sbr.rel (0) target = $region89
    $region88: #{_forward_impl.3} parent=1 // pred_region
      _
    $region89: #{_forward_impl.3} parent=1 // pred_fallthru
      _
    %2554 = vsyncpa [#allocation5], 1

</llo_original>
